<compile_context>
chip_gen: v7x
topology: tpu7x:2x2x1
jax: 0.10.0
libtpu: 0.0.40
codegen_flags: <defaults>
</compile_context>

<pallas_src>
import math
from functools import partial

import jax
import jax.numpy as jnp
from jax.experimental import pallas as pl
from jax.experimental.pallas import tpu as pltpu

_VMEM_LIMIT = 64 * 1024 * 1024


def _round_up(x, m):
    return ((x + m - 1) // m) * m


def _tile_for(dim, pref, align):
    """Pick (tile, padded_dim) with tile dividing padded_dim and
    (tile % align == 0 or tile == dim).  Avoids padding whenever possible."""
    if dim <= pref:
        return dim, dim                       # full-extent block is always legal
    t = max((pref // align) * align, align)
    tt = t
    while tt >= align:                        # prefer a divisor of dim -> no padding
        if dim % tt == 0:
            return tt, dim
        tt -= align
    return t, _round_up(dim, t)               # fallback: pad (never hit in this net)


# ---------------------------------------------------------------------------
# Fused matmul kernel: prologue(x) @ w + bias (+residual) (+relu) (+BN stats)
# ---------------------------------------------------------------------------
def _fused_matmul_kernel(*refs, has_pro, has_res, relu_out, emit_stats):
    x_ref, w_ref, b_ref = refs[0], refs[1], refs[2]
    pos = 3
    if has_pro:
        s_ref, t_ref = refs[pos], refs[pos + 1]
        pos += 2
    if has_res:
        r_ref = refs[pos]
        pos += 1
    o_ref = refs[pos]
    pos += 1
    if emit_stats:
        ss_ref, sq_ref = refs[pos], refs[pos + 1]
        pos += 2
    acc_ref = refs[pos]

    k = pl.program_id(2)

    @pl.when(k == 0)
    def _():
        acc_ref[...] = jnp.zeros_like(acc_ref)

    xt = x_ref[...]                                   # bf16
    if has_pro:
        xt = jnp.maximum(xt.astype(jnp.float32) * s_ref[...] + t_ref[...], 0.0)
        xt = xt.astype(jnp.bfloat16)
    acc_ref[...] += jnp.dot(xt, w_ref[...], preferred_element_type=jnp.float32)

    @pl.when(k == pl.num_programs(2) - 1)
    def _():
        out = acc_ref[...] + b_ref[...]
        if has_res:
            out = out + r_ref[...].astype(jnp.float32)
        if relu_out:
            out = jnp.maximum(out, 0.0)
        o_ref[...] = out.astype(o_ref.dtype)
        if emit_stats:
            ss_ref[0] = jnp.sum(out, axis=0, keepdims=True)
            sq_ref[0] = jnp.sum(out * out, axis=0, keepdims=True)


def fused_matmul(x, w, b, *, scale=None, shift=None, residual=None, relu=False,
                 out_dtype=jnp.bfloat16, want_stats=False):
    """y = epilogue(prologue(x) @ w + b).  x:(M,K)  w:(K,N)  b:(N,).

    Optionally also returns per-output-channel (sum, sum_of_squares) of y
    (the next BatchNorm's batch statistics), computed in the epilogue."""
    M, K = x.shape
    Kw, N = w.shape
    assert K == Kw
    has_pro = scale is not None
    has_res = residual is not None

    tm, Mp = _tile_for(M, 512, 16)        # bf16 packs 16 rows per sublane group
    tn, Np = _tile_for(N, 512, 128)
    tk, Kp = _tile_for(K, 1024, 128)

    emit_stats = want_stats and (Mp == M)   # padded M rows would pollute the stats

    xin = x.astype(jnp.bfloat16)
    if (Mp, Kp) != (M, K):
        xin = jnp.pad(xin, ((0, Mp - M), (0, Kp - K)))
    wp = w.astype(jnp.bfloat16)
    if (Kp, Np) != (K, N):
        wp = jnp.pad(wp, ((0, Kp - K), (0, Np - N)))
    bp = b.astype(jnp.float32).reshape(1, N)
    if Np != N:
        bp = jnp.pad(bp, ((0, 0), (0, Np - N)))

    gm, gn, gk = Mp // tm, Np // tn, Kp // tk
    # Larger parallel extent first so megacore (v7x) always sees >=2 blocks.
    if gn > gm:
        grid = (gn, gm, gk)

        def _ij(a, c):
            return c, a
    else:
        grid = (gm, gn, gk)

        def _ij(a, c):
            return a, c

    def x_map(a, c, k):
        i, _ = _ij(a, c)
        return (i, k)

    def w_map(a, c, k):
        _, j = _ij(a, c)
        return (k, j)

    def n_vec_map(a, c, k):
        _, j = _ij(a, c)
        return (0, j)

    def k_vec_map(a, c, k):
        return (0, k)

    def o_map(a, c, k):
        return _ij(a, c)

    def stat_map(a, c, k):
        i, j = _ij(a, c)
        return (i, 0, j)

    in_specs = [
        pl.BlockSpec((tm, tk), x_map),
        pl.BlockSpec((tk, tn), w_map),
        pl.BlockSpec((1, tn), n_vec_map),
    ]
    inputs = [xin, wp, bp]
    if has_pro:
        sp = scale.astype(jnp.float32).reshape(1, K)
        tp = shift.astype(jnp.float32).reshape(1, K)
        if Kp != K:
            sp = jnp.pad(sp, ((0, 0), (0, Kp - K)))
            tp = jnp.pad(tp, ((0, 0), (0, Kp - K)))
        in_specs += [pl.BlockSpec((1, tk), k_vec_map),
                     pl.BlockSpec((1, tk), k_vec_map)]
        inputs += [sp, tp]
    if has_res:
        rp = residual.astype(jnp.bfloat16)
        if (Mp, Np) != (M, N):
            rp = jnp.pad(rp, ((0, Mp - M), (0, Np - N)))
        in_specs += [pl.BlockSpec((tm, tn), o_map)]
        inputs += [rp]

    out_shapes = [jax.ShapeDtypeStruct((Mp, Np), out_dtype)]
    out_specs = [pl.BlockSpec((tm, tn), o_map)]
    if emit_stats:
        out_shapes += [jax.ShapeDtypeStruct((gm, 1, Np), jnp.float32)] * 2
        out_specs += [pl.BlockSpec((1, 1, tn), stat_map)] * 2

    outs = pl.pallas_call(
        partial(_fused_matmul_kernel, has_pro=has_pro, has_res=has_res,
                relu_out=relu, emit_stats=emit_stats),
        out_shape=tuple(out_shapes),
        grid=grid,
        in_specs=in_specs,
        out_specs=tuple(out_specs),
        scratch_shapes=[pltpu.VMEM((tm, tn), jnp.float32)],
        compiler_params=pltpu.CompilerParams(
            dimension_semantics=("parallel", "parallel", "arbitrary"),
            vmem_limit_bytes=_VMEM_LIMIT),
    )(*inputs)

    out = outs[0]
    if (Mp, Np) != (M, N):
        out = out[:M, :N]
    if not want_stats:
        return out
    if emit_stats:
        ssum = jnp.sum(outs[1][:, 0, :N], axis=0)
        ssq = jnp.sum(outs[2][:, 0, :N], axis=0)
    else:                                   # rare fallback when M got padded
        ssum, ssq = col_sums(out)
    return out, (ssum, ssq)


# ---------------------------------------------------------------------------
# Column reductions (only used for the max-pool output's BN statistics)
# ---------------------------------------------------------------------------
def _colsum_kernel(x_ref, s_ref, q_ref):
    @pl.when(pl.program_id(0) == 0)
    def _():
        s_ref[...] = jnp.zeros_like(s_ref)
        q_ref[...] = jnp.zeros_like(q_ref)

    x = x_ref[...].astype(jnp.float32)
    s_ref[...] += jnp.sum(x, axis=0, keepdims=True)
    q_ref[...] += jnp.sum(x * x, axis=0, keepdims=True)


def col_sums(x2d):
    """Per-channel (sum, sum_of_squares) over rows.  x2d:(M,C) -> two (C,)."""
    M, C = x2d.shape
    tm, Mp = _tile_for(M, 512, 8)
    xp = x2d if Mp == M else jnp.pad(x2d, ((0, Mp - M), (0, 0)))
    s, q = pl.pallas_call(
        _colsum_kernel,
        out_shape=(jax.ShapeDtypeStruct((1, C), jnp.float32),
                   jax.ShapeDtypeStruct((1, C), jnp.float32)),
        grid=(Mp // tm,),
        in_specs=[pl.BlockSpec((tm, C), lambda i: (i, 0))],
        out_specs=(pl.BlockSpec((1, C), lambda i: (0, 0)),
                   pl.BlockSpec((1, C), lambda i: (0, 0))),
        compiler_params=pltpu.CompilerParams(
            dimension_semantics=("arbitrary",),
            vmem_limit_bytes=_VMEM_LIMIT),
    )(xp)
    return s[0], q[0]


# ---------------------------------------------------------------------------
# Per-channel affine (+ReLU) -- only used before the 3 stride-2 im2col convs
# ---------------------------------------------------------------------------
def _affine_kernel(x_ref, s_ref, t_ref, o_ref, *, relu):
    y = x_ref[...].astype(jnp.float32) * s_ref[...] + t_ref[...]
    if relu:
        y = jnp.maximum(y, 0.0)
    o_ref[...] = y.astype(o_ref.dtype)


def affine_act(x2d, scale, shift, relu=True, out_dtype=jnp.bfloat16):
    M, C = x2d.shape
    tm, Mp = _tile_for(M, 512, 8)
    xp = x2d if Mp == M else jnp.pad(x2d, ((0, Mp - M), (0, 0)))
    out = pl.pallas_call(
        partial(_affine_kernel, relu=relu),
        out_shape=jax.ShapeDtypeStruct((Mp, C), out_dtype),
        grid=(Mp // tm,),
        in_specs=[pl.BlockSpec((tm, C), lambda i: (i, 0)),
                  pl.BlockSpec((1, C), lambda i: (0, 0)),
                  pl.BlockSpec((1, C), lambda i: (0, 0))],
        out_specs=pl.BlockSpec((tm, C), lambda i: (i, 0)),
        compiler_params=pltpu.CompilerParams(
            dimension_semantics=("parallel",),
            vmem_limit_bytes=_VMEM_LIMIT),
    )(xp, scale.reshape(1, C).astype(jnp.float32),
      shift.reshape(1, C).astype(jnp.float32))
    return out if Mp == M else out[:M]


# ---------------------------------------------------------------------------
# Direct 3x3 / stride-1 / pad-1 convolution (no im2col): 9 shifted-slab matmuls
# ---------------------------------------------------------------------------
def _conv3x3_kernel(*refs, has_pro, relu_out, emit_stats, Wp, Mout):
    x_ref, w_ref, b_ref = refs[0], refs[1], refs[2]
    pos = 3
    if has_pro:
        s_ref, t_ref, im_ref = refs[pos], refs[pos + 1], refs[pos + 2]
        pos += 3
    if emit_stats:
        vm_ref = refs[pos]
        pos += 1
    o_ref = refs[pos]
    pos += 1
    if emit_stats:
        ss_ref, sq_ref = refs[pos], refs[pos + 1]
        pos += 2
    acc_ref = refs[pos]
    pos += 1
    xs_ref = refs[pos] if has_pro else None

    c = pl.program_id(2)

    @pl.when(c == 0)
    def _():
        acc_ref[...] = jnp.zeros_like(acc_ref)

    if has_pro:
        # BN apply + ReLU, then re-zero the spatial zero-pad ring (and slack rows)
        xt = x_ref[0].astype(jnp.float32) * s_ref[...] + t_ref[...]
        xt = jnp.maximum(xt, 0.0) * im_ref[...]
        xs_ref[...] = xt.astype(jnp.bfloat16)
        src = xs_ref
    else:
        src = x_ref.at[0]

    for ky in range(3):
        for kx in range(3):
            off = ky * Wp + kx
            acc_ref[...] += jnp.dot(src[off:off + Mout, :],
                                    w_ref[ky * 3 + kx],
                                    preferred_element_type=jnp.float32)

    @pl.when(c == pl.num_programs(2) - 1)
    def _():
        out = acc_ref[...] + b_ref[...]
        if relu_out:
            out = jnp.maximum(out, 0.0)
        o_ref[0] = out.astype(o_ref.dtype)
        if emit_stats:
            ov = out * vm_ref[...]          # mask the Wp-layout junk columns
            ss_ref[0] = jnp.sum(ov, axis=0, keepdims=True)
            sq_ref[0] = jnp.sum(ov * ov, axis=0, keepdims=True)


def conv3x3_direct(x, w4, b, *, scale=None, shift=None, relu=False,
                   out_dtype=jnp.bfloat16, want_stats=False):
    """3x3, stride-1, pad-1 conv (NHWC) via 9 shifted contiguous-slab matmuls.

    Optional BN prologue (per-Cin scale/shift + ReLU applied in-kernel) and
    optional per-Cout (sum, sum_of_squares) of the output from the epilogue."""
    N, H, W, Cin = x.shape
    Cout = w4.shape[-1]
    Hp, Wp = H + 2, W + 2
    Mout = H * Wp
    Min = _round_up(Hp * Wp + 2, 8)
    has_pro = scale is not None

    tci, Cinp = _tile_for(Cin, 256, 128)
    tco, Coutp = _tile_for(Cout, 256, 128)

    xp = jnp.pad(x.astype(jnp.bfloat16), ((0, 0), (1, 1), (1, 1), (0, 0)))
    xf = xp.reshape(N, Hp * Wp, Cin)
    xf = jnp.pad(xf, ((0, 0), (0, Min - Hp * Wp), (0, Cinp - Cin)))

    w9 = w4.astype(jnp.bfloat16).reshape(9, Cin, Cout)
    if (Cinp, Coutp) != (Cin, Cout):
        w9 = jnp.pad(w9, ((0, 0), (0, Cinp - Cin), (0, Coutp - Cout)))
    bp = b.astype(jnp.float32).reshape(1, Cout)
    if Coutp != Cout:
        bp = jnp.pad(bp, ((0, 0), (0, Coutp - Cout)))

    gco, gci = Coutp // tco, Cinp // tci
    grid = (gco, N, gci)

    in_specs = [pl.BlockSpec((1, Min, tci), lambda j, n, c: (n, 0, c)),
                pl.BlockSpec((9, tci, tco), lambda j, n, c: (0, c, j)),
                pl.BlockSpec((1, tco), lambda j, n, c: (0, j))]
    inputs = [xf, w9, bp]
    if has_pro:
        sp = scale.astype(jnp.float32).reshape(1, Cin)
        tp = shift.astype(jnp.float32).reshape(1, Cin)
        if Cinp != Cin:
            sp = jnp.pad(sp, ((0, 0), (0, Cinp - Cin)))
            tp = jnp.pad(tp, ((0, 0), (0, Cinp - Cin)))
        rr = jnp.arange(Min, dtype=jnp.int32) // Wp
        cc = jnp.arange(Min, dtype=jnp.int32) % Wp
        interior = (rr >= 1) & (rr <= Hp - 2) & (cc >= 1) & (cc <= Wp - 2)
        im = interior.astype(jnp.float32).reshape(Min, 1)
        in_specs += [pl.BlockSpec((1, tci), lambda j, n, c: (0, c)),
                     pl.BlockSpec((1, tci), lambda j, n, c: (0, c)),
                     pl.BlockSpec((Min, 1), lambda j, n, c: (0, 0))]
        inputs += [sp, tp, im]
    if want_stats:
        vm = (jnp.arange(Mout, dtype=jnp.int32) % Wp < W)
        vm = vm.astype(jnp.float32).reshape(Mout, 1)
        in_specs += [pl.BlockSpec((Mout, 1), lambda j, n, c: (0, 0))]
        inputs += [vm]

    out_shapes = [jax.ShapeDtypeStruct((N, Mout, Coutp), out_dtype)]
    out_specs = [pl.BlockSpec((1, Mout, tco), lambda j, n, c: (n, 0, j))]
    if want_stats:
        out_shapes += [jax.ShapeDtypeStruct((N, 1, Coutp), jnp.float32)] * 2
        out_specs += [pl.BlockSpec((1, 1, tco), lambda j, n, c: (n, 0, j))] * 2

    scratch = [pltpu.VMEM((Mout, tco), jnp.float32)]
    if has_pro:
        scratch += [pltpu.VMEM((Min, tci), jnp.bfloat16)]

    outs = pl.pallas_call(
        partial(_conv3x3_kernel, has_pro=has_pro, relu_out=relu,
                emit_stats=want_stats, Wp=Wp, Mout=Mout),
        out_shape=tuple(out_shapes),
        grid=grid,
        in_specs=in_specs,
        out_specs=tuple(out_specs),
        scratch_shapes=scratch,
        compiler_params=pltpu.CompilerParams(
            dimension_semantics=("parallel", "parallel", "arbitrary"),
            vmem_limit_bytes=_VMEM_LIMIT),
    )(*inputs)

    # TODO(synk): the Wp-strided output slab is compacted with one small XLA slice;
    # carrying the slab layout into the consumer would remove this copy as well.
    y = outs[0].reshape(N, H, Wp, Coutp)[:, :, :W, :Cout]
    if not want_stats:
        return y
    ssum = jnp.sum(outs[1][:, 0, :Cout], axis=0)
    ssq = jnp.sum(outs[2][:, 0, :Cout], axis=0)
    return y, (ssum, ssq)


# ---------------------------------------------------------------------------
# MaxPool 3x3 / stride 2 / ceil_mode with fused BatchNorm-apply + ReLU prologue
# ---------------------------------------------------------------------------
def _maxpool_kernel(x_ref, s_ref, t_ref, o_ref, *, Ho, Wo, C):
    xb = x_ref[0].astype(jnp.float32)                 # (Ho+1, 2, Wo+1, 2C)
    sc = s_ref[...].reshape(1, 1, 1, 2 * C)
    sh = t_ref[...].reshape(1, 1, 1, 2 * C)
    y = jnp.maximum(xb * sc + sh, 0.0)
    y = jnp.where(xb > -jnp.inf, y, 0.0)              # -inf pad -> 0 (post-ReLU)

    def wmax(rows):                                   # rows: (Ho, Wo+1, 2C)
        a = rows[:, :Wo, :C]                          # col 2j
        b = rows[:, :Wo, C:]                          # col 2j+1
        c = rows[:, 1:Wo + 1, :C]                     # col 2j+2
        return jnp.maximum(jnp.maximum(a, b), c)

    r0 = wmax(y[0:Ho, 0, :, :])                       # rows 2i
    r1 = wmax(y[0:Ho, 1, :, :])                       # rows 2i+1
    r2 = wmax(y[1:Ho + 1, 0, :, :])                   # rows 2i+2
    o_ref[0] = jnp.maximum(jnp.maximum(r0, r1), r2).astype(o_ref.dtype)


def maxpool_3x3_s2_ceil_bn(x, scale, shift):
    """relu(BN(x)) followed by MaxPool2d(3, 2, ceil_mode=True), one Pallas pass."""
    N, H, W, C = x.shape
    Ho = -(-(H - 3) // 2) + 1
    Wo = -(-(W - 3) // 2) + 1
    Hp, Wp = 2 * Ho + 2, 2 * Wo + 2
    xp = jnp.pad(x, ((0, 0), (0, Hp - H), (0, Wp - W), (0, 0)),
                 constant_values=-jnp.inf)
    xr = xp.reshape(N, Ho + 1, 2, Wo + 1, 2 * C)
    s2 = jnp.concatenate([scale, scale]).reshape(1, 2 * C).astype(jnp.float32)
    t2 = jnp.concatenate([shift, shift]).reshape(1, 2 * C).astype(jnp.float32)
    return pl.pallas_call(
        partial(_maxpool_kernel, Ho=Ho, Wo=Wo, C=C),
        out_shape=jax.ShapeDtypeStruct((N, Ho, Wo, C), jnp.bfloat16),
        grid=(N,),
        in_specs=[pl.BlockSpec((1, Ho + 1, 2, Wo + 1, 2 * C),
                               lambda n: (n, 0, 0, 0, 0)),
                  pl.BlockSpec((1, 2 * C), lambda n: (0, 0)),
                  pl.BlockSpec((1, 2 * C), lambda n: (0, 0))],
        out_specs=pl.BlockSpec((1, Ho, Wo, C), lambda n: (n, 0, 0, 0)),
        compiler_params=pltpu.CompilerParams(
            dimension_semantics=("parallel",),
            vmem_limit_bytes=_VMEM_LIMIT),
    )(xr, s2, t2)


# ---------------------------------------------------------------------------
# im2col fallback (7x7/s2 stem conv and the three 3x3/s2 convs only)
# ---------------------------------------------------------------------------
def _im2col(x, kh, kw, stride, padding):
    N, H, W, C = x.shape
    Ho = (H + 2 * padding - kh) // stride + 1
    Wo = (W + 2 * padding - kw) // stride + 1
    xp = jnp.pad(x, ((0, 0), (padding, padding), (padding, padding), (0, 0)))
    cols = []
    for ky in range(kh):
        for kx in range(kw):
            cols.append(xp[:, ky:ky + stride * Ho:stride,
                           kx:kx + stride * Wo:stride, :])
    patches = jnp.stack(cols, axis=3)                 # (N, Ho, Wo, kh*kw, C)
    return patches.reshape(N * Ho * Wo, kh * kw * C), Ho, Wo


def conv2d_im2col(x, w4, b, stride=1, padding=0, relu=False,
                  want_stats=False, out_dtype=jnp.bfloat16):
    kh, kw, cin, cout = w4.shape
    cols, Ho, Wo = _im2col(x, kh, kw, stride, padding)
    res = fused_matmul(cols, w4.reshape(kh * kw * cin, cout), b, relu=relu,
                       want_stats=want_stats, out_dtype=out_dtype)
    if want_stats:
        y, st = res
        return y.reshape(x.shape[0], Ho, Wo, cout), st
    return res.reshape(x.shape[0], Ho, Wo, cout)


def _bn_coef(stats, count, gamma, beta, eps=1e-5):
    # Training-mode BatchNorm2d (batch statistics, biased variance); the heavy
    # reduction already happened inside the producing Pallas kernel's epilogue.
    s, q = stats
    mean = s / count
    var = jnp.maximum(q / count - mean * mean, 0.0)
    scale = gamma * jax.lax.rsqrt(var + eps)
    shift = beta - mean * scale
    return scale, shift


# ---------------------------------------------------------------------------
# Deterministic parameter init (weights stored bf16 for the MXU)
# ---------------------------------------------------------------------------
class PInit:
    def __init__(self, seed=0):
        self.key = jax.random.PRNGKey(seed)
        self.count = 0

    def take(self, shape, scale):
        self.count += 1
        k = jax.random.fold_in(self.key, self.count)
        return jax.random.normal(k, shape, jnp.float32) * jnp.float32(scale)


def conv_params(p, kh, kw, cin, cout):
    w = p.take((kh, kw, cin, cout), 1.0 / math.sqrt(kh * kw * cin))
    return {"w": w.astype(jnp.bfloat16), "b": jnp.zeros((cout,), jnp.float32)}


def bn_params(c):
    return {"g": jnp.ones((c,), jnp.float32), "b": jnp.zeros((c,), jnp.float32)}


def init_block(p, cin, cout, k):
    return {"conv": conv_params(p, k, k, cin, cout), "bn": bn_params(cout)}


def init_resblock(p, cin, cout, k):
    return {"bn": bn_params(cin), "conv": conv_params(p, k, k, cin, cout)}


def init_bottleneck(p, cin, cout):
    m = cout // 4
    return {"b1": init_resblock(p, cin, m, 1),
            "b2": init_resblock(p, m, m, 3),
            "b3": init_resblock(p, m, cout, 1)}


def init_downbottleneck(p, cin, cout):
    m = cout // 4
    return {"b1": init_resblock(p, cin, m, 1),
            "conv1": conv_params(p, 1, 1, cin, cout),
            "b2": init_resblock(p, m, m, 3),
            "b3": init_resblock(p, m, cout, 1)}


def init_resnet101(p):
    return {
        "conv1": init_block(p, 3, 64, 7),
        "conv2_1": init_downbottleneck(p, 64, 256),
        "conv2_2": init_bottleneck(p, 256, 256),
        "conv2_3": init_bottleneck(p, 256, 256),
        "layer3": [init_downbottleneck(p, 256, 512)]
                  + [init_bottleneck(p, 512, 512)],
        "layer4": [init_downbottleneck(p, 512, 1024)]
                  + [init_bottleneck(p, 1024, 1024) for _ in range(22)],
        "layer5": [init_downbottleneck(p, 1024, 2048)]
                  + [init_bottleneck(p, 2048, 2048) for _ in range(2)],
    }


def init_upblock(p, cin, cout):
    w = p.take((2, 2, cin, cout), 1.0 / math.sqrt(4 * cin))
    # pre-flatten ConvTranspose weight to (Cin, 4*Cout): the up-step is one matmul
    wf = jnp.transpose(w, (2, 0, 1, 3)).reshape(cin, 4 * cout).astype(jnp.bfloat16)
    return {"up_w": wf,
            "up_b4": jnp.zeros((4 * cout,), jnp.float32),
            "conv1": conv_params(p, 3, 3, cin, cout),
            "conv2": conv_params(p, 3, 3, cout, cout)}


def init_resnet_unet(p, n_classes=2, depth=5, wf=6):
    prev = 2 ** (wf + depth)
    ups = []
    for i in reversed(range(2, depth)):
        ups.append(init_upblock(p, prev, 2 ** (wf + i)))
        prev = 2 ** (wf + i)
    return {"encode": init_resnet101(p),
            "up_path": ups,
            "last": conv_params(p, 1, 1, prev, n_classes)}


# ---------------------------------------------------------------------------
# Forward pass (stats = per-channel (sum, sumsq) of each tensor, threaded along)
# ---------------------------------------------------------------------------
@jax.jit
def stem_fwd(prm, x):
    # Block(3,64,7,3,2): conv -> BN -> ReLU -> MaxPool(3,2,ceil); conv emits its
    # own BN statistics, BN apply + ReLU are fused into the pool prologue.
    y, ystats = conv2d_im2col(x, prm["conv"]["w"], prm["conv"]["b"],
                              stride=2, padding=3, want_stats=True)
    N, H, W, C = y.shape
    scale, shift = _bn_coef(ystats, N * H * W, prm["bn"]["g"], prm["bn"]["b"])
    pooled = maxpool_3x3_s2_ceil_bn(y, scale, shift)
    pstats = col_sums(pooled.reshape(-1, C))
    return pooled, pstats


def resblock1x1(prm, x2d, xstats, count, *, residual=None):
    # ResBlock(1x1): BN+ReLU fused into the matmul prologue, bias (+residual)
    # and the next BN's statistics fused into the epilogue.
    Cin = x2d.shape[1]
    Cout = prm["conv"]["w"].shape[-1]
    scale, shift = _bn_coef(xstats, count, prm["bn"]["g"], prm["bn"]["b"])
    return fused_matmul(x2d, prm["conv"]["w"].reshape(Cin, Cout),
                        prm["conv"]["b"], scale=scale, shift=shift,
                        residual=residual, want_stats=True)


def resblock3x3_s1(prm, x, xstats, count):
    # ResBlock(3x3, stride 1): direct conv kernel with fused BN prologue + stats.
    scale, shift = _bn_coef(xstats, count, prm["bn"]["g"], prm["bn"]["b"])
    return conv3x3_direct(x, prm["conv"]["w"], prm["conv"]["b"],
                          scale=scale, shift=shift, want_stats=True)


def resblock3x3_s2(prm, x, xstats, count):
    # ResBlock(3x3, stride 2) -- only at the 3 layer boundaries: BN+ReLU as a
    # tiled Pallas affine pass emitting bf16 into the im2col matmul path.
    N, H, W, Cin = x.shape
    scale, shift = _bn_coef(xstats, count, prm["bn"]["g"], prm["bn"]["b"])
    xa = affine_act(x.reshape(-1, Cin), scale, shift,
                    relu=True).reshape(N, H, W, Cin)
    return conv2d_im2col(xa, prm["conv"]["w"], prm["conv"]["b"],
                         stride=2, padding=1, want_stats=True)


@jax.jit
def bottleneck_fwd(prm, x, xstats):
    N, H, W, Cin = x.shape
    cnt = N * H * W
    Cm = prm["b1"]["conv"]["w"].shape[-1]
    Cout = prm["b3"]["conv"]["w"].shape[-1]
    x2 = x.reshape(-1, Cin)
    y1, s1 = resblock1x1(prm["b1"], x2, xstats, cnt)
    y2, s2 = resblock3x3_s1(prm["b2"], y1.reshape(N, H, W, Cm), s1, cnt)
    y3, s3 = resblock1x1(prm["b3"], y2.reshape(-1, Cm), s2, cnt, residual=x2)
    return y3.reshape(N, H, W, Cout), s3


@partial(jax.jit, static_argnames=("stride",))
def downbottleneck_fwd(prm, x, xstats, stride=2):
    N, H, W, Cin = x.shape
    cnt = N * H * W
    Cm = prm["b1"]["conv"]["w"].shape[-1]
    Cout = prm["conv1"]["w"].shape[-1]

    xs = x[:, ::stride, ::stride, :] if stride > 1 else x
    Hs, Ws = xs.shape[1], xs.shape[2]
    cnt_s = N * Hs * Ws
    identity = fused_matmul(xs.reshape(-1, Cin),
                            prm["conv1"]["w"].reshape(Cin, Cout),
                            prm["conv1"]["b"])

    y1, s1 = resblock1x1(prm["b1"], x.reshape(-1, Cin), xstats, cnt)
    y1 = y1.reshape(N, H, W, Cm)
    # TODO(synk): reference DownBottleneck strides only the identity conv, which makes
    # `out += identity` a shape error for stride=2; stride is applied to the 3x3 block
    # here (standard ResNet behavior) so the residual add is well-defined.
    if stride == 1:
        y2, s2 = resblock3x3_s1(prm["b2"], y1, s1, cnt)
    else:
        y2, s2 = resblock3x3_s2(prm["b2"], y1, s1, cnt)
    y3, s3 = resblock1x1(prm["b3"], y2.reshape(-1, Cm), s2, cnt_s,
                         residual=identity)
    return y3.reshape(N, Hs, Ws, Cout), s3


def run_layer(layer_prms, x, xstats):
    x, xstats = downbottleneck_fwd(layer_prms[0], x, xstats, stride=2)
    for bp in layer_prms[1:]:
        x, xstats = bottleneck_fwd(bp, x, xstats)
    return x, xstats


def resnet101_fwd(prm, x):
    pooled, pstats = stem_fwd(prm["conv1"], x)
    # TODO(synk): reference forward is conv2_3(conv2_2(conv2_3(pool1(f1)))) which feeds a
    # 64-channel tensor into a 256-channel Bottleneck (runtime error in torch); the
    # intended conv2_1 -> conv2_2 -> conv2_3 chain is used instead.
    f2, s2 = downbottleneck_fwd(prm["conv2_1"], pooled, pstats, stride=1)
    f2, s2 = bottleneck_fwd(prm["conv2_2"], f2, s2)
    f2, s2 = bottleneck_fwd(prm["conv2_3"], f2, s2)
    f3, s3 = run_layer(prm["layer3"], f2, s2)
    f4, s4 = run_layer(prm["layer4"], f3, s3)
    f5, _ = run_layer(prm["layer5"], f4, s4)
    return [f2, f3, f4, f5]


def center_crop(layer, th, tw):
    _, H, W, _ = layer.shape
    dy, dx = (H - th) // 2, (W - tw) // 2
    return layer[:, dy:dy + th, dx:dx + tw, :]


@jax.jit
def upblock_fwd(prm, x, bridge):
    N, H, W, cin = x.shape
    cout = prm["up_w"].shape[1] // 4
    # ConvTranspose2d(2,2,stride=2) as a single (Cin -> 4*Cout) matmul + interleave.
    up = fused_matmul(x.reshape(-1, cin), prm["up_w"], prm["up_b4"])
    # TODO(synk): the 2x2 interleave and the channel concat below are still bf16 XLA
    # copies; folding them into the following conv's tap indexing would remove two
    # decoder HBM round-trips.
    up = up.reshape(N, H, W, 2, 2, cout).transpose(0, 1, 3, 2, 4, 5)
    up = up.reshape(N, 2 * H, 2 * W, cout)
    crop = center_crop(bridge, 2 * H, 2 * W)
    out = jnp.concatenate([up, crop.astype(jnp.bfloat16)], axis=-1)
    out = conv3x3_direct(out, prm["conv1"]["w"], prm["conv1"]["b"], relu=True)
    out = conv3x3_direct(out, prm["conv2"]["w"], prm["conv2"]["b"], relu=True)
    return out


@jax.jit
def last_conv_fwd(prm, x):
    N, H, W, Cin = x.shape
    Cout = prm["w"].shape[-1]
    y = fused_matmul(x.reshape(-1, Cin), prm["w"].reshape(Cin, Cout),
                     prm["b"], out_dtype=jnp.float32)
    return y.reshape(N, H, W, Cout)


def resnet_unet_fwd(prm, x_nchw):
    x = jnp.transpose(x_nchw.astype(jnp.float32), (0, 2, 3, 1))   # NCHW -> NHWC
    blocks = resnet101_fwd(prm["encode"], x)
    out = blocks[-1]
    for i, up_prm in enumerate(prm["up_path"]):
        out = upblock_fwd(up_prm, out, blocks[-i - 2])
    out = last_conv_fwd(prm["last"], out)
    return jnp.transpose(out, (0, 3, 1, 2))                       # NHWC -> NCHW


if __name__ == "__main__":
    key = jax.random.PRNGKey(0)
    x = jax.random.normal(key, (1, 3, 64, 64), jnp.float32)   # small NCHW input
    params = init_resnet_unet(PInit(0))
    y = resnet_unet_fwd(params, x)
    y = jax.block_until_ready(y)
    assert y.shape == (1, 2, 16, 16), y.shape      # n_classes=2 at 1/4 resolution
    assert y.dtype == jnp.float32
    assert bool(jnp.all(jnp.isfinite(y)))
    print("KERNEL_OK")
</pallas_src>

<mosaic_0001>
module attributes {stable_mosaic.version = 11 : i64} {
  func.func @_fused_matmul_kernel(%arg0: i32, %arg1: i32, %arg2: i32, %arg3: memref<512x147xbf16, #tpu.memory_space<vmem>>, %arg4: memref<147x64xbf16, #tpu.memory_space<vmem>>, %arg5: memref<1x64xf32, #tpu.memory_space<vmem>>, %arg6: memref<512x64xbf16, #tpu.memory_space<vmem>>, %arg7: memref<1x1x64xf32, #tpu.memory_space<vmem>>, %arg8: memref<1x1x64xf32, #tpu.memory_space<vmem>>, %arg9: memref<512x64xf32, #tpu.memory_space<vmem>>) attributes {dimension_semantics = [#tpu.dimension_semantics<parallel>, #tpu.dimension_semantics<parallel>, #tpu.dimension_semantics<arbitrary>], iteration_bounds = array<i64: 2, 1, 1>, scalar_prefetch = 0 : i64, scratch_operands = 1 : i64, tpu.core_type = #tpu.core_type<tc>, window_params = [{transform_indices = @transform_0, window_bounds = array<i64: 512, 147>}, {transform_indices = @transform_1, window_bounds = array<i64: 147, 64>}, {transform_indices = @transform_2, window_bounds = array<i64: 1, 64>}, {transform_indices = @transform_3, window_bounds = array<i64: 512, 64>}, {transform_indices = @transform_4, window_bounds = array<i64: 1, 1, 64>}, {transform_indices = @transform_5, window_bounds = array<i64: 1, 1, 64>}]} {
    %c0_i32 = arith.constant 0 : i32
    %0 = arith.cmpi eq, %arg2, %c0_i32 : i32
    %1 = arith.extui %0 : i1 to i32
    %c0_i32_0 = arith.constant 0 : i32
    %2 = arith.cmpi ne, %1, %c0_i32_0 : i32
    scf.if %2 {
      %cst_10 = arith.constant 0.000000e+00 : f32
      %12 = vector.broadcast %cst_10 : f32 to vector<512x64xf32>
      %c0_11 = arith.constant 0 : index
      %c0_12 = arith.constant 0 : index
      %13 = vector.load %arg9[%c0_11, %c0_12] : memref<512x64xf32, #tpu.memory_space<vmem>>, vector<512x64xf32>
      tpu.vector_store %arg9[%c0_11, %c0_12], %12 {strides = array<i32>} : memref<512x64xf32, #tpu.memory_space<vmem>>, vector<512x64xf32>,
    } else {
    }
    %c0 = arith.constant 0 : index
    %c0_1 = arith.constant 0 : index
    %3 = vector.load %arg3[%c0, %c0_1] : memref<512x147xbf16, #tpu.memory_space<vmem>>, vector<512x147xbf16>
    %c0_2 = arith.constant 0 : index
    %c0_3 = arith.constant 0 : index
    %4 = vector.load %arg9[%c0_2, %c0_3] : memref<512x64xf32, #tpu.memory_space<vmem>>, vector<512x64xf32>
    %c0_4 = arith.constant 0 : index
    %c0_5 = arith.constant 0 : index
    %5 = vector.load %arg4[%c0_4, %c0_5] : memref<147x64xbf16, #tpu.memory_space<vmem>>, vector<147x64xbf16>
    %cst = arith.constant dense<0.000000e+00> : vector<512x64xf32>
    %6 = tpu.matmul %3, %5, %cst {dimension_numbers = #tpu.dot_dimension_numbers<[1], [0], [0], [1], [0, 0, 1, 1], [], []>} : vector<512x147xbf16>, vector<147x64xbf16>, vector<512x64xf32> -> vector<512x64xf32>
    %7 = arith.addf %4, %6 : vector<512x64xf32>
    %c0_6 = arith.constant 0 : index
    %c0_7 = arith.constant 0 : index
    %8 = vector.load %arg9[%c0_6, %c0_7] : memref<512x64xf32, #tpu.memory_space<vmem>>, vector<512x64xf32>
    tpu.vector_store %arg9[%c0_6, %c0_7], %7 {strides = array<i32>} : memref<512x64xf32, #tpu.memory_space<vmem>>, vector<512x64xf32>,
    %c0_i32_8 = arith.constant 0 : i32
    %9 = arith.cmpi eq, %arg2, %c0_i32_8 : i32
    %10 = arith.extui %9 : i1 to i32
    %c0_i32_9 = arith.constant 0 : i32
    %11 = arith.cmpi ne, %10, %c0_i32_9 : i32
    scf.if %11 {
      %c0_10 = arith.constant 0 : index
      %c0_11 = arith.constant 0 : index
      %12 = vector.load %arg9[%c0_10, %c0_11] : memref<512x64xf32, #tpu.memory_space<vmem>>, vector<512x64xf32>
      %c0_12 = arith.constant 0 : index
      %c0_13 = arith.constant 0 : index
      %13 = vector.load %arg5[%c0_12, %c0_13] : memref<1x64xf32, #tpu.memory_space<vmem>>, vector<1x64xf32>
      %14 = vector.broadcast %13 : vector<1x64xf32> to vector<512x64xf32>
      %15 = arith.addf %12, %14 : vector<512x64xf32>
      %16 = arith.truncf %15 : vector<512x64xf32> to vector<512x64xbf16>
      %c0_14 = arith.constant 0 : index
      %c0_15 = arith.constant 0 : index
      %17 = vector.load %arg6[%c0_14, %c0_15] : memref<512x64xbf16, #tpu.memory_space<vmem>>, vector<512x64xbf16>
      tpu.vector_store %arg6[%c0_14, %c0_15], %16 {strides = array<i32>} : memref<512x64xbf16, #tpu.memory_space<vmem>>, vector<512x64xbf16>,
      %cst_16 = arith.constant dense<0.000000e+00> : vector<64xf32>
      %18 = vector.multi_reduction <add>, %15, %cst_16 [0] : vector<512x64xf32> to vector<64xf32>
      %19 = vector.shape_cast %18 : vector<64xf32> to vector<1x64xf32>
      %c0_17 = arith.constant 0 : index
      %c0_18 = arith.constant 0 : index
      %c0_19 = arith.constant 0 : index
      %20 = vector.load %arg7[%c0_17, %c0_18, %c0_19] : memref<1x1x64xf32, #tpu.memory_space<vmem>>, vector<1x1x64xf32>
      %21 = vector.shape_cast %20 : vector<1x1x64xf32> to vector<1x64xf32>
      %22 = vector.shape_cast %19 : vector<1x64xf32> to vector<1x1x64xf32>
      tpu.vector_store %arg7[%c0_17, %c0_18, %c0_19], %22 {strides = array<i32>} : memref<1x1x64xf32, #tpu.memory_space<vmem>>, vector<1x1x64xf32>,
      %23 = arith.mulf %15, %15 : vector<512x64xf32>
      %cst_20 = arith.constant dense<0.000000e+00> : vector<64xf32>
      %24 = vector.multi_reduction <add>, %23, %cst_20 [0] : vector<512x64xf32> to vector<64xf32>
      %25 = vector.shape_cast %24 : vector<64xf32> to vector<1x64xf32>
      %c0_21 = arith.constant 0 : index
      %c0_22 = arith.constant 0 : index
      %c0_23 = arith.constant 0 : index
      %26 = vector.load %arg8[%c0_21, %c0_22, %c0_23] : memref<1x1x64xf32, #tpu.memory_space<vmem>>, vector<1x1x64xf32>
      %27 = vector.shape_cast %26 : vector<1x1x64xf32> to vector<1x64xf32>
      %28 = vector.shape_cast %25 : vector<1x64xf32> to vector<1x1x64xf32>
      tpu.vector_store %arg8[%c0_21, %c0_22, %c0_23], %28 {strides = array<i32>} : memref<1x1x64xf32, #tpu.memory_space<vmem>>, vector<1x1x64xf32>,
    } else {
    }
    return
  }
  func.func @transform_0(%arg0: i32, %arg1: i32, %arg2: i32) -> (i32, i32) {
    %c0_i32 = arith.constant 0 : i32
    return %arg0, %arg2 : i32, i32
  }
  func.func @transform_1(%arg0: i32, %arg1: i32, %arg2: i32) -> (i32, i32) {
    %c0_i32 = arith.constant 0 : i32
    return %arg2, %arg1 : i32, i32
  }
  func.func @transform_2(%arg0: i32, %arg1: i32, %arg2: i32) -> (i32, i32) {
    %c0_i32 = arith.constant 0 : i32
    %c0_i32_0 = arith.constant 0 : i32
    return %c0_i32, %arg1 : i32, i32
  }
  func.func @transform_3(%arg0: i32, %arg1: i32, %arg2: i32) -> (i32, i32) {
    %c0_i32 = arith.constant 0 : i32
    return %arg0, %arg1 : i32, i32
  }
  func.func @transform_4(%arg0: i32, %arg1: i32, %arg2: i32) -> (i32, i32, i32) {
    %c0_i32 = arith.constant 0 : i32
    %c0_i32_0 = arith.constant 0 : i32
    return %arg0, %c0_i32, %arg1 : i32, i32, i32
  }
  func.func @transform_5(%arg0: i32, %arg1: i32, %arg2: i32) -> (i32, i32, i32) {
    %c0_i32 = arith.constant 0 : i32
    %c0_i32_0 = arith.constant 0 : i32
    return %arg0, %c0_i32, %arg1 : i32, i32, i32
  }
}

module attributes {stable_mosaic.version = 11 : i64} {
  func.func @_maxpool_kernel(%arg0: i32, %arg1: memref<1x17x2x17x128xbf16, #tpu.memory_space<vmem>>, %arg2: memref<1x128xf32, #tpu.memory_space<vmem>>, %arg3: memref<1x128xf32, #tpu.memory_space<vmem>>, %arg4: memref<1x16x16x64xbf16, #tpu.memory_space<vmem>>) attributes {dimension_semantics = [#tpu.dimension_semantics<parallel>], iteration_bounds = array<i64: 1>, scalar_prefetch = 0 : i64, scratch_operands = 0 : i64, tpu.core_type = #tpu.core_type<tc>, window_params = [{transform_indices = @transform_0, window_bounds = array<i64: 1, 17, 2, 17, 128>}, {pipeline_mode = #tpu.pipeline_mode<synchronous>, transform_indices = @transform_1, window_bounds = array<i64: 1, 128>}, {pipeline_mode = #tpu.pipeline_mode<synchronous>, transform_indices = @transform_2, window_bounds = array<i64: 1, 128>}, {transform_indices = @transform_3, window_bounds = array<i64: 1, 16, 16, 64>}]} {
    %c0 = arith.constant 0 : index
    %c0_0 = arith.constant 0 : index
    %c0_1 = arith.constant 0 : index
    %c0_2 = arith.constant 0 : index
    %c0_3 = arith.constant 0 : index
    %0 = vector.load %arg1[%c0, %c0_0, %c0_1, %c0_2, %c0_3] : memref<1x17x2x17x128xbf16, #tpu.memory_space<vmem>>, vector<1x17x2x17x128xbf16>
    %1 = vector.shape_cast %0 : vector<1x17x2x17x128xbf16> to vector<17x2x17x128xbf16>
    %2 = arith.extf %1 : vector<17x2x17x128xbf16> to vector<17x2x17x128xf32>
    %c0_4 = arith.constant 0 : index
    %c0_5 = arith.constant 0 : index
    %3 = vector.load %arg2[%c0_4, %c0_5] : memref<1x128xf32, #tpu.memory_space<vmem>>, vector<1x128xf32>
    %4 = vector.shape_cast %3 : vector<1x128xf32> to vector<1x1x1x128xf32>
    %c0_6 = arith.constant 0 : index
    %c0_7 = arith.constant 0 : index
    %5 = vector.load %arg3[%c0_6, %c0_7] : memref<1x128xf32, #tpu.memory_space<vmem>>, vector<1x128xf32>
    %6 = vector.shape_cast %5 : vector<1x128xf32> to vector<1x1x1x128xf32>
    %7 = vector.broadcast %4 : vector<1x1x1x128xf32> to vector<17x2x17x128xf32>
    %8 = arith.mulf %2, %7 : vector<17x2x17x128xf32>
    %9 = vector.broadcast %6 : vector<1x1x1x128xf32> to vector<17x2x17x128xf32>
    %10 = arith.addf %8, %9 : vector<17x2x17x128xf32>
    %cst = arith.constant 0.000000e+00 : f32
    %11 = vector.broadcast %cst : f32 to vector<17x2x17x128xf32>
    %12 = arith.maximumf %10, %11 : vector<17x2x17x128xf32>
    %cst_8 = arith.constant 0xFF800000 : f32
    %13 = vector.broadcast %cst_8 : f32 to vector<17x2x17x128xf32>
    %14 = arith.cmpf ogt, %2, %13 : vector<17x2x17x128xf32>
    %cst_9 = arith.constant 0.000000e+00 : f32
    %15 = vector.broadcast %cst_9 : f32 to vector<17x2x17x128xf32>
    %16 = arith.select %14, %12, %15 : vector<17x2x17x128xi1>, vector<17x2x17x128xf32>
    %17 = vector.extract_strided_slice %16 {offsets = [0, 0, 0, 0], sizes = [16, 1, 17, 128], strides = [1, 1, 1, 1]} : vector<17x2x17x128xf32> to vector<16x1x17x128xf32>
    %18 = vector.shape_cast %17 : vector<16x1x17x128xf32> to vector<16x17x128xf32>
    %19 = vector.extract_strided_slice %18 {offsets = [0, 0, 0], sizes = [16, 16, 64], strides = [1, 1, 1]} : vector<16x17x128xf32> to vector<16x16x64xf32>
    %20 = vector.extract_strided_slice %18 {offsets = [0, 0, 64], sizes = [16, 16, 64], strides = [1, 1, 1]} : vector<16x17x128xf32> to vector<16x16x64xf32>
    %21 = vector.extract_strided_slice %18 {offsets = [0, 1, 0], sizes = [16, 16, 64], strides = [1, 1, 1]} : vector<16x17x128xf32> to vector<16x16x64xf32>
    %22 = arith.maximumf %19, %20 : vector<16x16x64xf32>
    %23 = arith.maximumf %22, %21 : vector<16x16x64xf32>
    %24 = vector.extract_strided_slice %16 {offsets = [0, 1, 0, 0], sizes = [16, 1, 17, 128], strides = [1, 1, 1, 1]} : vector<17x2x17x128xf32> to vector<16x1x17x128xf32>
    %25 = vector.shape_cast %24 : vector<16x1x17x128xf32> to vector<16x17x128xf32>
    %26 = vector.extract_strided_slice %25 {offsets = [0, 0, 0], sizes = [16, 16, 64], strides = [1, 1, 1]} : vector<16x17x128xf32> to vector<16x16x64xf32>
    %27 = vector.extract_strided_slice %25 {offsets = [0, 0, 64], sizes = [16, 16, 64], strides = [1, 1, 1]} : vector<16x17x128xf32> to vector<16x16x64xf32>
    %28 = vector.extract_strided_slice %25 {offsets = [0, 1, 0], sizes = [16, 16, 64], strides = [1, 1, 1]} : vector<16x17x128xf32> to vector<16x16x64xf32>
    %29 = arith.maximumf %26, %27 : vector<16x16x64xf32>
    %30 = arith.maximumf %29, %28 : vector<16x16x64xf32>
    %31 = vector.extract_strided_slice %16 {offsets = [1, 0, 0, 0], sizes = [16, 1, 17, 128], strides = [1, 1, 1, 1]} : vector<17x2x17x128xf32> to vector<16x1x17x128xf32>
    %32 = vector.shape_cast %31 : vector<16x1x17x128xf32> to vector<16x17x128xf32>
    %33 = vector.extract_strided_slice %32 {offsets = [0, 0, 0], sizes = [16, 16, 64], strides = [1, 1, 1]} : vector<16x17x128xf32> to vector<16x16x64xf32>
    %34 = vector.extract_strided_slice %32 {offsets = [0, 0, 64], sizes = [16, 16, 64], strides = [1, 1, 1]} : vector<16x17x128xf32> to vector<16x16x64xf32>
    %35 = vector.extract_strided_slice %32 {offsets = [0, 1, 0], sizes = [16, 16, 64], strides = [1, 1, 1]} : vector<16x17x128xf32> to vector<16x16x64xf32>
    %36 = arith.maximumf %33, %34 : vector<16x16x64xf32>
    %37 = arith.maximumf %36, %35 : vector<16x16x64xf32>
    %38 = arith.maximumf %23, %30 : vector<16x16x64xf32>
    %39 = arith.maximumf %38, %37 : vector<16x16x64xf32>
    %40 = arith.truncf %39 : vector<16x16x64xf32> to vector<16x16x64xbf16>
    %c0_10 = arith.constant 0 : index
    %c0_11 = arith.constant 0 : index
    %c0_12 = arith.constant 0 : index
    %c0_13 = arith.constant 0 : index
    %41 = vector.load %arg4[%c0_10, %c0_11, %c0_12, %c0_13] : memref<1x16x16x64xbf16, #tpu.memory_space<vmem>>, vector<1x16x16x64xbf16>
    %42 = vector.shape_cast %41 : vector<1x16x16x64xbf16> to vector<16x16x64xbf16>
    %43 = vector.shape_cast %40 : vector<16x16x64xbf16> to vector<1x16x16x64xbf16>
    tpu.vector_store %arg4[%c0_10, %c0_11, %c0_12, %c0_13], %43 {strides = array<i32>} : memref<1x16x16x64xbf16, #tpu.memory_space<vmem>>, vector<1x16x16x64xbf16>,
    return
  }
  func.func @transform_0(%arg0: i32) -> (i32, i32, i32, i32, i32) {
    %c0_i32 = arith.constant 0 : i32
    %c0_i32_0 = arith.constant 0 : i32
    %c0_i32_1 = arith.constant 0 : i32
    %c0_i32_2 = arith.constant 0 : i32
    %c0_i32_3 = arith.constant 0 : i32
    return %arg0, %c0_i32, %c0_i32_0, %c0_i32_1, %c0_i32_2 : i32, i32, i32, i32, i32
  }
  func.func @transform_1(%arg0: i32) -> (i32, i32) {
    %c0_i32 = arith.constant 0 : i32
    %c0_i32_0 = arith.constant 0 : i32
    %c0_i32_1 = arith.constant 0 : i32
    return %c0_i32, %c0_i32_0 : i32, i32
  }
  func.func @transform_2(%arg0: i32) -> (i32, i32) {
    %c0_i32 = arith.constant 0 : i32
    %c0_i32_0 = arith.constant 0 : i32
    %c0_i32_1 = arith.constant 0 : i32
    return %c0_i32, %c0_i32_0 : i32, i32
  }
  func.func @transform_3(%arg0: i32) -> (i32, i32, i32, i32) {
    %c0_i32 = arith.constant 0 : i32
    %c0_i32_0 = arith.constant 0 : i32
    %c0_i32_1 = arith.constant 0 : i32
    %c0_i32_2 = arith.constant 0 : i32
    return %arg0, %c0_i32, %c0_i32_0, %c0_i32_1 : i32, i32, i32, i32
  }
}

module attributes {stable_mosaic.version = 11 : i64} {
  func.func @_colsum_kernel(%arg0: i32, %arg1: memref<256x64xbf16, #tpu.memory_space<vmem>>, %arg2: memref<1x64xf32, #tpu.memory_space<vmem>>, %arg3: memref<1x64xf32, #tpu.memory_space<vmem>>) attributes {dimension_semantics = [#tpu.dimension_semantics<arbitrary>], iteration_bounds = array<i64: 1>, scalar_prefetch = 0 : i64, scratch_operands = 0 : i64, tpu.core_type = #tpu.core_type<tc>, window_params = [{transform_indices = @transform_0, window_bounds = array<i64: 256, 64>}, {pipeline_mode = #tpu.pipeline_mode<synchronous>, transform_indices = @transform_1, window_bounds = array<i64: 1, 64>}, {pipeline_mode = #tpu.pipeline_mode<synchronous>, transform_indices = @transform_2, window_bounds = array<i64: 1, 64>}]} {
    %c0_i32 = arith.constant 0 : i32
    %0 = arith.cmpi eq, %arg0, %c0_i32 : i32
    %1 = arith.extui %0 : i1 to i32
    %c0_i32_0 = arith.constant 0 : i32
    %2 = arith.cmpi ne, %1, %c0_i32_0 : i32
    scf.if %2 {
      %cst_11 = arith.constant 0.000000e+00 : f32
      %16 = vector.broadcast %cst_11 : f32 to vector<1x64xf32>
      %c0_12 = arith.constant 0 : index
      %c0_13 = arith.constant 0 : index
      %17 = vector.load %arg2[%c0_12, %c0_13] : memref<1x64xf32, #tpu.memory_space<vmem>>, vector<1x64xf32>
      tpu.vector_store %arg2[%c0_12, %c0_13], %16 {strides = array<i32>} : memref<1x64xf32, #tpu.memory_space<vmem>>, vector<1x64xf32>,
      %cst_14 = arith.constant 0.000000e+00 : f32
      %18 = vector.broadcast %cst_14 : f32 to vector<1x64xf32>
      %c0_15 = arith.constant 0 : index
      %c0_16 = arith.constant 0 : index
      %19 = vector.load %arg3[%c0_15, %c0_16] : memref<1x64xf32, #tpu.memory_space<vmem>>, vector<1x64xf32>
      tpu.vector_store %arg3[%c0_15, %c0_16], %18 {strides = array<i32>} : memref<1x64xf32, #tpu.memory_space<vmem>>, vector<1x64xf32>,
    } else {
    }
    %c0 = arith.constant 0 : index
    %c0_1 = arith.constant 0 : index
    %3 = vector.load %arg1[%c0, %c0_1] : memref<256x64xbf16, #tpu.memory_space<vmem>>, vector<256x64xbf16>
    %4 = arith.extf %3 : vector<256x64xbf16> to vector<256x64xf32>
    %c0_2 = arith.constant 0 : index
    %c0_3 = arith.constant 0 : index
    %5 = vector.load %arg2[%c0_2, %c0_3] : memref<1x64xf32, #tpu.memory_space<vmem>>, vector<1x64xf32>
    %cst = arith.constant dense<0.000000e+00> : vector<64xf32>
    %6 = vector.multi_reduction <add>, %4, %cst [0] : vector<256x64xf32> to vector<64xf32>
    %7 = vector.shape_cast %6 : vector<64xf32> to vector<1x64xf32>
    %8 = arith.addf %5, %7 : vector<1x64xf32>
    %c0_4 = arith.constant 0 : index
    %c0_5 = arith.constant 0 : index
    %9 = vector.load %arg2[%c0_4, %c0_5] : memref<1x64xf32, #tpu.memory_space<vmem>>, vector<1x64xf32>
    tpu.vector_store %arg2[%c0_4, %c0_5], %8 {strides = array<i32>} : memref<1x64xf32, #tpu.memory_space<vmem>>, vector<1x64xf32>,
    %c0_6 = arith.constant 0 : index
    %c0_7 = arith.constant 0 : index
    %10 = vector.load %arg3[%c0_6, %c0_7] : memref<1x64xf32, #tpu.memory_space<vmem>>, vector<1x64xf32>
    %11 = arith.mulf %4, %4 : vector<256x64xf32>
    %cst_8 = arith.constant dense<0.000000e+00> : vector<64xf32>
    %12 = vector.multi_reduction <add>, %11, %cst_8 [0] : vector<256x64xf32> to vector<64xf32>
    %13 = vector.shape_cast %12 : vector<64xf32> to vector<1x64xf32>
    %14 = arith.addf %10, %13 : vector<1x64xf32>
    %c0_9 = arith.constant 0 : index
    %c0_10 = arith.constant 0 : index
    %15 = vector.load %arg3[%c0_9, %c0_10] : memref<1x64xf32, #tpu.memory_space<vmem>>, vector<1x64xf32>
    tpu.vector_store %arg3[%c0_9, %c0_10], %14 {strides = array<i32>} : memref<1x64xf32, #tpu.memory_space<vmem>>, vector<1x64xf32>,
    return
  }
  func.func @transform_0(%arg0: i32) -> (i32, i32) {
    %c0_i32 = arith.constant 0 : i32
    %c0_i32_0 = arith.constant 0 : i32
    return %arg0, %c0_i32 : i32, i32
  }
  func.func @transform_1(%arg0: i32) -> (i32, i32) {
    %c0_i32 = arith.constant 0 : i32
    %c0_i32_0 = arith.constant 0 : i32
    %c0_i32_1 = arith.constant 0 : i32
    return %c0_i32, %c0_i32_0 : i32, i32
  }
  func.func @transform_2(%arg0: i32) -> (i32, i32) {
    %c0_i32 = arith.constant 0 : i32
    %c0_i32_0 = arith.constant 0 : i32
    %c0_i32_1 = arith.constant 0 : i32
    return %c0_i32, %c0_i32_0 : i32, i32
  }
}

</mosaic_0001>

<llo_original>
// kernel: stem_fwd.3
$region0: #{stem_fwd.3}
  #allocation0 [shape = 'u32[]', space=smem, size = 0x4, offset = 0x4, fixed_abs, tag = 'smem constant byte address 0x4 - core index']
  #allocation1 [shape = 'u32[144,128]{1,0:T(1,128)}', space=vmem, size = 0x12000, scoped, tag = 'internal scratch']
  #allocation2 [shape = 'f32[512,64]{1,0:T(8,128)}', space=vmem, size = 0x40000, scoped, tag = 'scratch operand']
  %s0 = inlined_call_operand.hbm [shape: bf16[1024,147], index: 0, kind: input, shape index: {}]
  %s1 = inlined_call_operand.hbm [shape: bf16[147,64], index: 1, kind: input, shape index: {}]
  %s2 = inlined_call_operand.hbm [shape: f32[1,64], index: 2, kind: input, shape index: {}]
  %s3 = inlined_call_operand.hbm [shape: bf16[1024,64], index: 3, kind: output, shape index: {0}]
  %s4 = inlined_call_operand.hbm [shape: f32[2,1,64], index: 4, kind: output, shape index: {1}]
  %s5 = inlined_call_operand.hbm [shape: f32[2,1,64], index: 5, kind: output, shape index: {2}]
  %6 = xla_tuple %s3, %s4, %s5
  %s7 = sld [smem:[#allocation0]]
  $region81: #{stem_fwd.3} parent=0
    _
  %s9 = ssub.s32 1, %s7
  %s10 = scalar_select 0, %s9, %s7
  $region1: #{stem_fwd.3} parent=0
    #allocation3 [shape = 'u8[524288]{0}', space=vmem, size = 0x80000, scoped, tag = 'input window, operand 0']
    #allocation4 [shape = 's32[2]{0}', space=sflag, size = 0x8, scoped, tag = 'scoped memory for stem_fwd.3']
    #allocation5 [shape = 's32[2]{0}', space=sflag, size = 0x8, scoped, tag = 'scoped memory for stem_fwd.3']
    #allocation6 [shape = 'u8[38912]{0}', space=vmem, size = 0x9800, scoped, tag = 'input window, operand 1, single buffered']
    #allocation7 [shape = 's32[1]{0}', space=sflag, size = 0x4, scoped, tag = 'scoped memory for stem_fwd.3']
    #allocation8 [shape = 'u8[512]{0}', space=vmem, size = 0x400, scoped, tag = 'input window, operand 2, single buffered']
    #allocation9 [shape = 'u8[262144]{0}', space=vmem, size = 0x40000, scoped, tag = 'output window, operand 0']
    #allocation10 [shape = 'u8[1024]{0}', space=vmem, size = 0x400, scoped, tag = 'output window, operand 1']
    #allocation11 [shape = 's32[2]{0}', space=sflag, size = 0x8, scoped, tag = 'scoped memory for stem_fwd.3']
    #allocation12 [shape = 'u8[1024]{0}', space=vmem, size = 0x400, scoped, tag = 'output window, operand 2']
    %11 = vsyncpa [#allocation4], 0
    %s12 = scalar_lea.sflag [#allocation4], 1
    %13 = vsyncpa %s12, 0
    %14 = vsyncpa [#allocation7], 0
    %15 = vsyncpa [#allocation5], 0
    %s16 = scalar_lea.sflag [#allocation5], 1
    %17 = vsyncpa %s16, 0
    %18 = vsyncpa [#allocation11], 0
    %s19 = scalar_lea.sflag [#allocation11], 1
    %20 = vsyncpa %s19, 0
    loop: start=0, step=1, limit=4
    $region2: #{stem_fwd.3} parent=1 // loop_pre_header
      _
    $region3: #{stem_fwd.3} parent=1 // loop_header
      %s22 = sphi 0, %s26
      %p23 = scmp.ge.s32.totalorder %s22, 4
      %s29 = sphi 0, %s48
      %s30 = sphi 0, %s44
      %s31 = sphi 0, %s40
      %s32 = sphi 0, %s29
      %s33 = sphi 0, %s30
      %s34 = sphi 0, %s31
      %s35 = sphi 0, %s32
      %s36 = sphi 0, %s33
      %s37 = sphi 0, %s34
      %s53 = sphi 0, %s55
      %s56 = sphi 0, %s53
      %s57 = sphi 0, %s56
      %s73 = sphi 0, %s57
      %s81 = sphi 0, %s83
      %s84 = sphi 0, %s81
      %s85 = sphi 0, %s84
      %s101 = sphi 0, %s85
      %s107 = sphi 0, %s109
      %s110 = sphi 0, %s107
      %s111 = sphi 0, %s110
      %s127 = sphi 0, %s111
      %s135 = sphi 0, %s137
      %s138 = sphi 0, %s135
      %s139 = sphi 0, %s138
      %s155 = sphi 0, %s139
      %s163 = sphi 0, %s165
      %s166 = sphi 0, %s163
      %s167 = sphi 0, %s166
      %s183 = sphi 0, %s167
      %s191 = sphi 0, %s193
      %s194 = sphi 0, %s191
      %s195 = sphi 0, %s194
      %s211 = sphi 0, %s195
    $region4: #{stem_fwd.3} parent=1 // loop_header_branch
      %25 = sbr.rel (%p23) target = $region8
    $region5: #{stem_fwd.3} parent=1 // loop_body
      %s27 = ssub.s32 %s22, 1
      %s28 = ssub.s32 %s22, 2
      %s38 = sadd.s32 1, %s31
      %p39 = scmp.ge.s32.totalorder %s38, 1
      %s40 = scalar_select %p39, 0, %s38
      %s41 = sadd.s32 1, %s30
      %s42 = scalar_select %p39, %s41, %s30
      %p43 = scmp.ge.s32.totalorder %s42, 1
      %s44 = scalar_select %p43, 0, %s42
      %s45 = sadd.s32 1, %s29
      %s46 = scalar_select %p43, %s45, %s29
      %p47 = scmp.ge.s32.totalorder %s46, 2
      %s48 = scalar_select %p47, 0, %s46
      %s49 = ssub.s32 %s29, %s48
      %s50 = ssub.s32 %s31, %s40
      %s51 = sor.u32 %s49, %s50
      %p52 = scmp.eq.s32.totalorder %s51, 0
      %s54 = sadd.s32 %s53, 1
      %s55 = scalar_select %p52, %s53, %s54
      %p58 = pneg %p52
      %p59 = scmp.eq.s32.totalorder %s22, 1
      %p60 = por %p58, %p59
      %p61 = scmp.ne.s32.totalorder %s53, %s56
      %p62 = scmp.eq.s32.totalorder %s22, 0
      %p63 = por %p61, %p62
      %p64 = scmp.ne.s32.totalorder %s53, %s56
      %p65 = scmp.eq.s32.totalorder %s27, 1
      %p66 = por %p64, %p65
      %p67 = scmp.ne.s32.totalorder %s56, %s57
      %p68 = scmp.eq.s32.totalorder %s27, 0
      %p69 = por %p67, %p68
      %p70 = scmp.ne.s32.totalorder %s56, %s57
      %p71 = scmp.eq.s32.totalorder %s28, 1
      %p72 = por %p70, %p71
      %p74 = scmp.ne.s32.totalorder %s57, %s73
      %p75 = scmp.eq.s32.totalorder %s28, 0
      %p76 = por %p74, %p75
      %s77 = ssub.s32 %s31, %s40
      %s78 = ssub.s32 %s30, %s44
      %s79 = sor.u32 %s77, %s78
      %p80 = scmp.eq.s32.totalorder %s79, 0
      %s82 = sadd.s32 %s81, 1
      %s83 = scalar_select %p80, %s81, %s82
      %p86 = pneg %p80
      %p87 = scmp.eq.s32.totalorder %s22, 1
      %p88 = por %p86, %p87
      %p89 = scmp.ne.s32.totalorder %s81, %s84
      %p90 = scmp.eq.s32.totalorder %s22, 0
      %p91 = por %p89, %p90
      %p92 = scmp.ne.s32.totalorder %s81, %s84
      %p93 = scmp.eq.s32.totalorder %s27, 1
      %p94 = por %p92, %p93
      %p95 = scmp.ne.s32.totalorder %s84, %s85
      %p96 = scmp.eq.s32.totalorder %s27, 0
      %p97 = por %p95, %p96
      %p98 = scmp.ne.s32.totalorder %s84, %s85
      %p99 = scmp.eq.s32.totalorder %s28, 1
      %p100 = por %p98, %p99
      %p102 = scmp.ne.s32.totalorder %s85, %s101
      %p103 = scmp.eq.s32.totalorder %s28, 0
      %p104 = por %p102, %p103
      %s105 = ssub.s32 %s30, %s44
      %p106 = scmp.eq.s32.totalorder %s105, 0
      %s108 = sadd.s32 %s107, 1
      %s109 = scalar_select %p106, %s107, %s108
      %p112 = pneg %p106
      %p113 = scmp.eq.s32.totalorder %s22, 1
      %p114 = por %p112, %p113
      %p115 = scmp.ne.s32.totalorder %s107, %s110
      %p116 = scmp.eq.s32.totalorder %s22, 0
      %p117 = por %p115, %p116
      %p118 = scmp.ne.s32.totalorder %s107, %s110
      %p119 = scmp.eq.s32.totalorder %s27, 1
      %p120 = por %p118, %p119
      %p121 = scmp.ne.s32.totalorder %s110, %s111
      %p122 = scmp.eq.s32.totalorder %s27, 0
      %p123 = por %p121, %p122
      %p124 = scmp.ne.s32.totalorder %s110, %s111
      %p125 = scmp.eq.s32.totalorder %s28, 1
      %p126 = por %p124, %p125
      %p128 = scmp.ne.s32.totalorder %s111, %s127
      %p129 = scmp.eq.s32.totalorder %s28, 0
      %p130 = por %p128, %p129
      %s131 = ssub.s32 %s29, %s48
      %s132 = ssub.s32 %s30, %s44
      %s133 = sor.u32 %s131, %s132
      %p134 = scmp.eq.s32.totalorder %s133, 0
      %s136 = sadd.s32 %s135, 1
      %s137 = scalar_select %p134, %s135, %s136
      %p140 = pneg %p134
      %p141 = scmp.eq.s32.totalorder %s22, 1
      %p142 = por %p140, %p141
      %p143 = scmp.ne.s32.totalorder %s135, %s138
      %p144 = scmp.eq.s32.totalorder %s22, 0
      %p145 = por %p143, %p144
      %p146 = scmp.ne.s32.totalorder %s135, %s138
      %p147 = scmp.eq.s32.totalorder %s27, 1
      %p148 = por %p146, %p147
      %p149 = scmp.ne.s32.totalorder %s138, %s139
      %p150 = scmp.eq.s32.totalorder %s27, 0
      %p151 = por %p149, %p150
      %p152 = scmp.ne.s32.totalorder %s138, %s139
      %p153 = scmp.eq.s32.totalorder %s28, 1
      %p154 = por %p152, %p153
      %p156 = scmp.ne.s32.totalorder %s139, %s155
      %p157 = scmp.eq.s32.totalorder %s28, 0
      %p158 = por %p156, %p157
      %s159 = ssub.s32 %s29, %s48
      %s160 = ssub.s32 %s30, %s44
      %s161 = sor.u32 %s159, %s160
      %p162 = scmp.eq.s32.totalorder %s161, 0
      %s164 = sadd.s32 %s163, 1
      %s165 = scalar_select %p162, %s163, %s164
      %p168 = pneg %p162
      %p169 = scmp.eq.s32.totalorder %s22, 1
      %p170 = por %p168, %p169
      %p171 = scmp.ne.s32.totalorder %s163, %s166
      %p172 = scmp.eq.s32.totalorder %s22, 0
      %p173 = por %p171, %p172
      %p174 = scmp.ne.s32.totalorder %s163, %s166
      %p175 = scmp.eq.s32.totalorder %s27, 1
      %p176 = por %p174, %p175
      %p177 = scmp.ne.s32.totalorder %s166, %s167
      %p178 = scmp.eq.s32.totalorder %s27, 0
      %p179 = por %p177, %p178
      %p180 = scmp.ne.s32.totalorder %s166, %s167
      %p181 = scmp.eq.s32.totalorder %s28, 1
      %p182 = por %p180, %p181
      %p184 = scmp.ne.s32.totalorder %s167, %s183
      %p185 = scmp.eq.s32.totalorder %s28, 0
      %p186 = por %p184, %p185
      %s187 = ssub.s32 %s29, %s48
      %s188 = ssub.s32 %s30, %s44
      %s189 = sor.u32 %s187, %s188
      %p190 = scmp.eq.s32.totalorder %s189, 0
      %s192 = sadd.s32 %s191, 1
      %s193 = scalar_select %p190, %s191, %s192
      %p196 = pneg %p190
      %p197 = scmp.eq.s32.totalorder %s22, 1
      %p198 = por %p196, %p197
      %p199 = scmp.ne.s32.totalorder %s191, %s194
      %p200 = scmp.eq.s32.totalorder %s22, 0
      %p201 = por %p199, %p200
      %p202 = scmp.ne.s32.totalorder %s191, %s194
      %p203 = scmp.eq.s32.totalorder %s27, 1
      %p204 = por %p202, %p203
      %p205 = scmp.ne.s32.totalorder %s194, %s195
      %p206 = scmp.eq.s32.totalorder %s27, 0
      %p207 = por %p205, %p206
      %p208 = scmp.ne.s32.totalorder %s194, %s195
      %p209 = scmp.eq.s32.totalorder %s28, 1
      %p210 = por %p208, %p209
      %p212 = scmp.ne.s32.totalorder %s195, %s211
      %p213 = scmp.eq.s32.totalorder %s28, 0
      %p214 = por %p212, %p213
      %p215 = scmp.le.s32.totalorder 1, %s22
      %p216 = scmp.lt.s32.totalorder %s22, 3
      %p217 = pnand %p215, %p216
      %p218 = pneg %p217
      // Predicated region
      $region9: #{stem_fwd.3} parent=5 // pred_check
        _
      $region10: #{stem_fwd.3} parent=5 // pred_check_branch
        %220 = sbr.rel (%p217) target = $region12
      $region11: #{stem_fwd.3} parent=5 // pred_region
        %s221 = ssub.s32 %s22, 1
        // Predicated region
        $region13: #{stem_fwd.3} parent=11 // pred_check
          %p222 = pneg %p97
        $region14: #{stem_fwd.3} parent=11 // pred_check_branch
          %224 = sbr.rel (%p222) target = $region16
        $region15: #{stem_fwd.3} parent=11 // pred_region
          %s225 = smul.u32 19, %s34
          %s227 = ssub.s32 1216, 1216
          %228 = vsyncadd [#allocation7], %s227
          %s229 = sadd.s32 %s33, %s225
          %s230 = smul.addr %s229, 64
          %s231 = scalar_lea.hbm %s1, %s230
          %s232 = sshll.u32 [#allocation6], 4
          %s233 = int_to_ptr.vmem [resolvable:$true] %s232
          %238 = dma.hbm_to_vmem [thread:$0]  %s231, 1216, %s233, [#allocation7], 64, 64, 4
        $region16: #{stem_fwd.3} parent=11 // pred_fallthru
          _
        // Predicated region
        $region17: #{stem_fwd.3} parent=11 // pred_check
          %p239 = pneg %p123
        $region18: #{stem_fwd.3} parent=11 // pred_check_branch
          %241 = sbr.rel (%p239) target = $region20
        $region19: #{stem_fwd.3} parent=11 // pred_region
          %s243 = ssub.s32 16, 16
          %244 = vsyncadd [#allocation7], %s243
          %s245 = smul.addr %s33, 16
          %s246 = scalar_lea.hbm %s2, %s245
          %s248 = sshll.u32 [#allocation8], 4
          %s249 = int_to_ptr.vmem [resolvable:$true] %s248
          %251 = dma.hbm_to_vmem [thread:$0]  %s246, 16, %s249, [#allocation7]
        $region20: #{stem_fwd.3} parent=11 // pred_fallthru
          _
      $region12: #{stem_fwd.3} parent=5 // pred_fallthru
        _
      %p252 = scmp.lt.s32.totalorder %s22, 2
      // Predicated region
      $region21: #{stem_fwd.3} parent=5 // pred_check
        %p253 = pneg %p252
      $region22: #{stem_fwd.3} parent=5 // pred_check_branch
        %255 = sbr.rel (%p253) target = $region24
      $region23: #{stem_fwd.3} parent=5 // pred_region
        // Predicated region
        $region25: #{stem_fwd.3} parent=23 // pred_check
          %p256 = pneg %p63
        $region26: #{stem_fwd.3} parent=23 // pred_check_branch
          %258 = sbr.rel (%p256) target = $region28
        $region27: #{stem_fwd.3} parent=23 // pred_region
          %s259 = sand.u32 %s53, 1
          %s260 = scalar_lea.sflag [#allocation4], %s259
          %s261 = sand.u32 %s53, 1
          %s262 = smul.addr %s261, 512
          %s263 = scalar_lea.vmem [#allocation3], %s262
          %s264 = smul.u32 64, %s29
          %s265 = smul.u32 2, %s31
          %s267 = ssub.s32 8192, 8192
          %268 = vsyncadd %s260, %s267
          %s269 = smul.addr %s264, 2
          %s270 = sadd.s32 %s265, %s269
          %s271 = smul.addr %s270, 64
          %s272 = scalar_lea.hbm %s0, %s271
          %s273 = sshll.u32 %s263, 4
          %s274 = int_to_ptr.vmem [resolvable:$true] %s273
          %279 = dma.hbm_to_vmem [thread:$0]  %s272, 8192, %s274, %s260, 128, 128, 8
        $region28: #{stem_fwd.3} parent=23 // pred_fallthru
          _
      $region24: #{stem_fwd.3} parent=5 // pred_fallthru
        _
      %p280 = scmp.le.s32.totalorder 1, %s22
      %p281 = scmp.lt.s32.totalorder %s22, 3
      %p282 = pnand %p280, %p281
      %p283 = pneg %p282
      // Predicated region
      $region29: #{stem_fwd.3} parent=5 // pred_check
        _
      $region30: #{stem_fwd.3} parent=5 // pred_check_branch
        %285 = sbr.rel (%p282) target = $region32
      $region31: #{stem_fwd.3} parent=5 // pred_region
        %s286 = ssub.s32 %s22, 1
        %s287 = sand.u32 %s56, 1
        %s288 = scalar_lea.sflag [#allocation4], %s287
        %s289 = sand.u32 %s56, 1
        %s290 = smul.addr %s289, 512
        %s291 = scalar_lea.vmem [#allocation3], %s290
        // Predicated region
        $region33: #{stem_fwd.3} parent=31 // pred_check
          %p292 = pneg %p69
        $region34: #{stem_fwd.3} parent=31 // pred_check_branch
          %294 = sbr.rel (%p292) target = $region36
        $region35: #{stem_fwd.3} parent=31 // pred_region
          %295 = dma.done %s288, 8192
        $region36: #{stem_fwd.3} parent=31 // pred_fallthru
          _
        // Predicated region
        $region37: #{stem_fwd.3} parent=31 // pred_check
          %p296 = pneg %p97
        $region38: #{stem_fwd.3} parent=31 // pred_check_branch
          %298 = sbr.rel (%p296) target = $region40
        $region39: #{stem_fwd.3} parent=31 // pred_region
          %299 = dma.done [#allocation7], 1216
        $region40: #{stem_fwd.3} parent=31 // pred_fallthru
          _
        // Predicated region
        $region41: #{stem_fwd.3} parent=31 // pred_check
          %p300 = pneg %p123
        $region42: #{stem_fwd.3} parent=31 // pred_check_branch
          %302 = sbr.rel (%p300) target = $region44
        $region43: #{stem_fwd.3} parent=31 // pred_region
          %303 = dma.done [#allocation7], 16
        $region44: #{stem_fwd.3} parent=31 // pred_fallthru
          _
        %s304 = sand.u32 %s56, 1
        %s305 = scalar_lea.sflag [#allocation4], %s304
        %s306 = sand.u32 %s56, 1
        %s307 = smul.addr %s306, 512
        %s308 = scalar_lea.vmem [#allocation3], %s307
        %p309 = pneg %p69
        %p310 = pneg %p66
        %p311 = pneg %p97
        %p312 = pneg %p94
        %p313 = pneg %p123
        %p314 = pneg %p120
        %p315 = pneg %p151
        %p316 = pneg %p148
        %s317 = sand.u32 %s138, 1
        %s318 = scalar_lea.sflag [#allocation5], %s317
        %s319 = sand.u32 %s138, 1
        %s320 = smul.addr %s319, 256
        %s321 = scalar_lea.vmem [#allocation9], %s320
        %p322 = pneg %p179
        %p323 = pneg %p176
        %s324 = sand.u32 %s27, 1
        %s325 = scalar_lea.sflag [#allocation11], %s324
        %s326 = sand.u32 %s166, 1
        %s327 = scalar_lea.vmem [#allocation10], %s326
        %p328 = pneg %p207
        %p329 = pneg %p204
        %s330 = sand.u32 %s27, 1
        %s331 = scalar_lea.sflag [#allocation11], %s330
        %s332 = sand.u32 %s194, 1
        %s333 = scalar_lea.vmem [#allocation12], %s332
        %s334 = smul.u32 64, %s32
        %s335 = smul.u32 2, %s34
        %s336 = smul.u32 19, %s34
        %s337 = smul.u32 64, %s32
        %p339 = scmp.eq.s32.totalorder %s34, 0
        // Predicated region
        $region45: #{stem_fwd.3} parent=31 // pred_check
          %p340 = pneg %p339
        $region46: #{stem_fwd.3} parent=31 // pred_check_branch
          %342 = sbr.rel (%p340) target = $region48
        $region47: #{stem_fwd.3} parent=31 // pred_region
          %vm343 = vcmask 523264
          %344 = vst.msk [vmem:[#allocation2] sm:$0xff] %vm343, 0.0
          %345 = vst.msk [vmem:[#allocation2 + $0x8] sm:$0xff] %vm343, 0.0
          %346 = vst.msk [vmem:[#allocation2 + $0x10] sm:$0xff] %vm343, 0.0
          %347 = vst.msk [vmem:[#allocation2 + $0x18] sm:$0xff] %vm343, 0.0
          %348 = vst.msk [vmem:[#allocation2 + $0x20] sm:$0xff] %vm343, 0.0
          %349 = vst.msk [vmem:[#allocation2 + $0x28] sm:$0xff] %vm343, 0.0
          %350 = vst.msk [vmem:[#allocation2 + $0x30] sm:$0xff] %vm343, 0.0
          %351 = vst.msk [vmem:[#allocation2 + $0x38] sm:$0xff] %vm343, 0.0
          %352 = vst.msk [vmem:[#allocation2 + $0x40] sm:$0xff] %vm343, 0.0
          %353 = vst.msk [vmem:[#allocation2 + $0x48] sm:$0xff] %vm343, 0.0
          %354 = vst.msk [vmem:[#allocation2 + $0x50] sm:$0xff] %vm343, 0.0
          %355 = vst.msk [vmem:[#allocation2 + $0x58] sm:$0xff] %vm343, 0.0
          %356 = vst.msk [vmem:[#allocation2 + $0x60] sm:$0xff] %vm343, 0.0
          %357 = vst.msk [vmem:[#allocation2 + $0x68] sm:$0xff] %vm343, 0.0
          %358 = vst.msk [vmem:[#allocation2 + $0x70] sm:$0xff] %vm343, 0.0
          %359 = vst.msk [vmem:[#allocation2 + $0x78] sm:$0xff] %vm343, 0.0
          %360 = vst.msk [vmem:[#allocation2 + $0x80] sm:$0xff] %vm343, 0.0
          %361 = vst.msk [vmem:[#allocation2 + $0x88] sm:$0xff] %vm343, 0.0
          %362 = vst.msk [vmem:[#allocation2 + $0x90] sm:$0xff] %vm343, 0.0
          %363 = vst.msk [vmem:[#allocation2 + $0x98] sm:$0xff] %vm343, 0.0
          %364 = vst.msk [vmem:[#allocation2 + $0xa0] sm:$0xff] %vm343, 0.0
          %365 = vst.msk [vmem:[#allocation2 + $0xa8] sm:$0xff] %vm343, 0.0
          %366 = vst.msk [vmem:[#allocation2 + $0xb0] sm:$0xff] %vm343, 0.0
          %367 = vst.msk [vmem:[#allocation2 + $0xb8] sm:$0xff] %vm343, 0.0
          %368 = vst.msk [vmem:[#allocation2 + $0xc0] sm:$0xff] %vm343, 0.0
          %369 = vst.msk [vmem:[#allocation2 + $0xc8] sm:$0xff] %vm343, 0.0
          %370 = vst.msk [vmem:[#allocation2 + $0xd0] sm:$0xff] %vm343, 0.0
          %371 = vst.msk [vmem:[#allocation2 + $0xd8] sm:$0xff] %vm343, 0.0
          %372 = vst.msk [vmem:[#allocation2 + $0xe0] sm:$0xff] %vm343, 0.0
          %373 = vst.msk [vmem:[#allocation2 + $0xe8] sm:$0xff] %vm343, 0.0
          %374 = vst.msk [vmem:[#allocation2 + $0xf0] sm:$0xff] %vm343, 0.0
          %375 = vst.msk [vmem:[#allocation2 + $0xf8] sm:$0xff] %vm343, 0.0
          %376 = vst.msk [vmem:[#allocation2 + $0x100] sm:$0xff] %vm343, 0.0
          %377 = vst.msk [vmem:[#allocation2 + $0x108] sm:$0xff] %vm343, 0.0
          %378 = vst.msk [vmem:[#allocation2 + $0x110] sm:$0xff] %vm343, 0.0
          %379 = vst.msk [vmem:[#allocation2 + $0x118] sm:$0xff] %vm343, 0.0
          %380 = vst.msk [vmem:[#allocation2 + $0x120] sm:$0xff] %vm343, 0.0
          %381 = vst.msk [vmem:[#allocation2 + $0x128] sm:$0xff] %vm343, 0.0
          %382 = vst.msk [vmem:[#allocation2 + $0x130] sm:$0xff] %vm343, 0.0
          %383 = vst.msk [vmem:[#allocation2 + $0x138] sm:$0xff] %vm343, 0.0
          %384 = vst.msk [vmem:[#allocation2 + $0x140] sm:$0xff] %vm343, 0.0
          %385 = vst.msk [vmem:[#allocation2 + $0x148] sm:$0xff] %vm343, 0.0
          %386 = vst.msk [vmem:[#allocation2 + $0x150] sm:$0xff] %vm343, 0.0
          %387 = vst.msk [vmem:[#allocation2 + $0x158] sm:$0xff] %vm343, 0.0
          %388 = vst.msk [vmem:[#allocation2 + $0x160] sm:$0xff] %vm343, 0.0
          %389 = vst.msk [vmem:[#allocation2 + $0x168] sm:$0xff] %vm343, 0.0
          %390 = vst.msk [vmem:[#allocation2 + $0x170] sm:$0xff] %vm343, 0.0
          %391 = vst.msk [vmem:[#allocation2 + $0x178] sm:$0xff] %vm343, 0.0
          %392 = vst.msk [vmem:[#allocation2 + $0x180] sm:$0xff] %vm343, 0.0
          %393 = vst.msk [vmem:[#allocation2 + $0x188] sm:$0xff] %vm343, 0.0
          %394 = vst.msk [vmem:[#allocation2 + $0x190] sm:$0xff] %vm343, 0.0
          %395 = vst.msk [vmem:[#allocation2 + $0x198] sm:$0xff] %vm343, 0.0
          %396 = vst.msk [vmem:[#allocation2 + $0x1a0] sm:$0xff] %vm343, 0.0
          %397 = vst.msk [vmem:[#allocation2 + $0x1a8] sm:$0xff] %vm343, 0.0
          %398 = vst.msk [vmem:[#allocation2 + $0x1b0] sm:$0xff] %vm343, 0.0
          %399 = vst.msk [vmem:[#allocation2 + $0x1b8] sm:$0xff] %vm343, 0.0
          %400 = vst.msk [vmem:[#allocation2 + $0x1c0] sm:$0xff] %vm343, 0.0
          %401 = vst.msk [vmem:[#allocation2 + $0x1c8] sm:$0xff] %vm343, 0.0
          %402 = vst.msk [vmem:[#allocation2 + $0x1d0] sm:$0xff] %vm343, 0.0
          %403 = vst.msk [vmem:[#allocation2 + $0x1d8] sm:$0xff] %vm343, 0.0
          %404 = vst.msk [vmem:[#allocation2 + $0x1e0] sm:$0xff] %vm343, 0.0
          %405 = vst.msk [vmem:[#allocation2 + $0x1e8] sm:$0xff] %vm343, 0.0
          %406 = vst.msk [vmem:[#allocation2 + $0x1f0] sm:$0xff] %vm343, 0.0
          %407 = vst.msk [vmem:[#allocation2 + $0x1f8] sm:$0xff] %vm343, 0.0
        $region48: #{stem_fwd.3} parent=31 // pred_fallthru
          _
        %v408 = vld [vmem:[%s291] sm:$0xff]
        %v409 = vld [vmem:[%s291 + $0x8] sm:$0xff]
        %v410 = vld [vmem:[%s291 + $0x10] sm:$0xff]
        %v411 = vld [vmem:[%s291 + $0x18] sm:$0xff]
        %v412 = vld [vmem:[%s291 + $0x20] sm:$0xff]
        %v413 = vld [vmem:[%s291 + $0x28] sm:$0xff]
        %v414 = vld [vmem:[%s291 + $0x30] sm:$0xff]
        %v415 = vld [vmem:[%s291 + $0x38] sm:$0xff]
        %v416 = vld [vmem:[%s291 + $0x40] sm:$0xff]
        %v417 = vld [vmem:[%s291 + $0x48] sm:$0xff]
        %v418 = vld [vmem:[%s291 + $0x50] sm:$0xff]
        %v419 = vld [vmem:[%s291 + $0x58] sm:$0xff]
        %v420 = vld [vmem:[%s291 + $0x60] sm:$0xff]
        %v421 = vld [vmem:[%s291 + $0x68] sm:$0xff]
        %v422 = vld [vmem:[%s291 + $0x70] sm:$0xff]
        %v423 = vld [vmem:[%s291 + $0x78] sm:$0xff]
        %v424 = vld [vmem:[%s291 + $0x80] sm:$0xff]
        %v425 = vld [vmem:[%s291 + $0x88] sm:$0xff]
        %v426 = vld [vmem:[%s291 + $0x90] sm:$0xff]
        %v427 = vld [vmem:[%s291 + $0x98] sm:$0xff]
        %v428 = vld [vmem:[%s291 + $0xa0] sm:$0xff]
        %v429 = vld [vmem:[%s291 + $0xa8] sm:$0xff]
        %v430 = vld [vmem:[%s291 + $0xb0] sm:$0xff]
        %v431 = vld [vmem:[%s291 + $0xb8] sm:$0xff]
        %v432 = vld [vmem:[%s291 + $0xc0] sm:$0xff]
        %v433 = vld [vmem:[%s291 + $0xc8] sm:$0xff]
        %v434 = vld [vmem:[%s291 + $0xd0] sm:$0xff]
        %v435 = vld [vmem:[%s291 + $0xd8] sm:$0xff]
        %v436 = vld [vmem:[%s291 + $0xe0] sm:$0xff]
        %v437 = vld [vmem:[%s291 + $0xe8] sm:$0xff]
        %v438 = vld [vmem:[%s291 + $0xf0] sm:$0xff]
        %v439 = vld [vmem:[%s291 + $0xf8] sm:$0xff]
        %v440 = vld [vmem:[%s291 + $0x100] sm:$0xff]
        %v441 = vld [vmem:[%s291 + $0x108] sm:$0xff]
        %v442 = vld [vmem:[%s291 + $0x110] sm:$0xff]
        %v443 = vld [vmem:[%s291 + $0x118] sm:$0xff]
        %v444 = vld [vmem:[%s291 + $0x120] sm:$0xff]
        %v445 = vld [vmem:[%s291 + $0x128] sm:$0xff]
        %v446 = vld [vmem:[%s291 + $0x130] sm:$0xff]
        %v447 = vld [vmem:[%s291 + $0x138] sm:$0xff]
        %v448 = vld [vmem:[%s291 + $0x140] sm:$0xff]
        %v449 = vld [vmem:[%s291 + $0x148] sm:$0xff]
        %v450 = vld [vmem:[%s291 + $0x150] sm:$0xff]
        %v451 = vld [vmem:[%s291 + $0x158] sm:$0xff]
        %v452 = vld [vmem:[%s291 + $0x160] sm:$0xff]
        %v453 = vld [vmem:[%s291 + $0x168] sm:$0xff]
        %v454 = vld [vmem:[%s291 + $0x170] sm:$0xff]
        %v455 = vld [vmem:[%s291 + $0x178] sm:$0xff]
        %v456 = vld [vmem:[%s291 + $0x180] sm:$0xff]
        %v457 = vld [vmem:[%s291 + $0x188] sm:$0xff]
        %v458 = vld [vmem:[%s291 + $0x190] sm:$0xff]
        %v459 = vld [vmem:[%s291 + $0x198] sm:$0xff]
        %v460 = vld [vmem:[%s291 + $0x1a0] sm:$0xff]
        %v461 = vld [vmem:[%s291 + $0x1a8] sm:$0xff]
        %v462 = vld [vmem:[%s291 + $0x1b0] sm:$0xff]
        %v463 = vld [vmem:[%s291 + $0x1b8] sm:$0xff]
        %v464 = vld [vmem:[%s291 + $0x1c0] sm:$0xff]
        %v465 = vld [vmem:[%s291 + $0x1c8] sm:$0xff]
        %v466 = vld [vmem:[%s291 + $0x1d0] sm:$0xff]
        %v467 = vld [vmem:[%s291 + $0x1d8] sm:$0xff]
        %v468 = vld [vmem:[%s291 + $0x1e0] sm:$0xff]
        %v469 = vld [vmem:[%s291 + $0x1e8] sm:$0xff]
        %v470 = vld [vmem:[%s291 + $0x1f0] sm:$0xff]
        %v471 = vld [vmem:[%s291 + $0x1f8] sm:$0xff]
        %v472 = vld [vmem:[#allocation2] sm:$0xff]
        %v473 = vld [vmem:[#allocation2 + $0x8] sm:$0xff]
        %v474 = vld [vmem:[#allocation2 + $0x10] sm:$0xff]
        %v475 = vld [vmem:[#allocation2 + $0x18] sm:$0xff]
        %v476 = vld [vmem:[#allocation2 + $0x20] sm:$0xff]
        %v477 = vld [vmem:[#allocation2 + $0x28] sm:$0xff]
        %v478 = vld [vmem:[#allocation2 + $0x30] sm:$0xff]
        %v479 = vld [vmem:[#allocation2 + $0x38] sm:$0xff]
        %v480 = vld [vmem:[#allocation2 + $0x40] sm:$0xff]
        %v481 = vld [vmem:[#allocation2 + $0x48] sm:$0xff]
        %v482 = vld [vmem:[#allocation2 + $0x50] sm:$0xff]
        %v483 = vld [vmem:[#allocation2 + $0x58] sm:$0xff]
        %v484 = vld [vmem:[#allocation2 + $0x60] sm:$0xff]
        %v485 = vld [vmem:[#allocation2 + $0x68] sm:$0xff]
        %v486 = vld [vmem:[#allocation2 + $0x70] sm:$0xff]
        %v487 = vld [vmem:[#allocation2 + $0x78] sm:$0xff]
        %v488 = vld [vmem:[#allocation2 + $0x80] sm:$0xff]
        %v489 = vld [vmem:[#allocation2 + $0x88] sm:$0xff]
        %v490 = vld [vmem:[#allocation2 + $0x90] sm:$0xff]
        %v491 = vld [vmem:[#allocation2 + $0x98] sm:$0xff]
        %v492 = vld [vmem:[#allocation2 + $0xa0] sm:$0xff]
        %v493 = vld [vmem:[#allocation2 + $0xa8] sm:$0xff]
        %v494 = vld [vmem:[#allocation2 + $0xb0] sm:$0xff]
        %v495 = vld [vmem:[#allocation2 + $0xb8] sm:$0xff]
        %v496 = vld [vmem:[#allocation2 + $0xc0] sm:$0xff]
        %v497 = vld [vmem:[#allocation2 + $0xc8] sm:$0xff]
        %v498 = vld [vmem:[#allocation2 + $0xd0] sm:$0xff]
        %v499 = vld [vmem:[#allocation2 + $0xd8] sm:$0xff]
        %v500 = vld [vmem:[#allocation2 + $0xe0] sm:$0xff]
        %v501 = vld [vmem:[#allocation2 + $0xe8] sm:$0xff]
        %v502 = vld [vmem:[#allocation2 + $0xf0] sm:$0xff]
        %v503 = vld [vmem:[#allocation2 + $0xf8] sm:$0xff]
        %v504 = vld [vmem:[#allocation2 + $0x100] sm:$0xff]
        %v505 = vld [vmem:[#allocation2 + $0x108] sm:$0xff]
        %v506 = vld [vmem:[#allocation2 + $0x110] sm:$0xff]
        %v507 = vld [vmem:[#allocation2 + $0x118] sm:$0xff]
        %v508 = vld [vmem:[#allocation2 + $0x120] sm:$0xff]
        %v509 = vld [vmem:[#allocation2 + $0x128] sm:$0xff]
        %v510 = vld [vmem:[#allocation2 + $0x130] sm:$0xff]
        %v511 = vld [vmem:[#allocation2 + $0x138] sm:$0xff]
        %v512 = vld [vmem:[#allocation2 + $0x140] sm:$0xff]
        %v513 = vld [vmem:[#allocation2 + $0x148] sm:$0xff]
        %v514 = vld [vmem:[#allocation2 + $0x150] sm:$0xff]
        %v515 = vld [vmem:[#allocation2 + $0x158] sm:$0xff]
        %v516 = vld [vmem:[#allocation2 + $0x160] sm:$0xff]
        %v517 = vld [vmem:[#allocation2 + $0x168] sm:$0xff]
        %v518 = vld [vmem:[#allocation2 + $0x170] sm:$0xff]
        %v519 = vld [vmem:[#allocation2 + $0x178] sm:$0xff]
        %v520 = vld [vmem:[#allocation2 + $0x180] sm:$0xff]
        %v521 = vld [vmem:[#allocation2 + $0x188] sm:$0xff]
        %v522 = vld [vmem:[#allocation2 + $0x190] sm:$0xff]
        %v523 = vld [vmem:[#allocation2 + $0x198] sm:$0xff]
        %v524 = vld [vmem:[#allocation2 + $0x1a0] sm:$0xff]
        %v525 = vld [vmem:[#allocation2 + $0x1a8] sm:$0xff]
        %v526 = vld [vmem:[#allocation2 + $0x1b0] sm:$0xff]
        %v527 = vld [vmem:[#allocation2 + $0x1b8] sm:$0xff]
        %v528 = vld [vmem:[#allocation2 + $0x1c0] sm:$0xff]
        %v529 = vld [vmem:[#allocation2 + $0x1c8] sm:$0xff]
        %v530 = vld [vmem:[#allocation2 + $0x1d0] sm:$0xff]
        %v531 = vld [vmem:[#allocation2 + $0x1d8] sm:$0xff]
        %v532 = vld [vmem:[#allocation2 + $0x1e0] sm:$0xff]
        %v533 = vld [vmem:[#allocation2 + $0x1e8] sm:$0xff]
        %v534 = vld [vmem:[#allocation2 + $0x1f0] sm:$0xff]
        %v535 = vld [vmem:[#allocation2 + $0x1f8] sm:$0xff]
        %v536 = vld [vmem:[#allocation6] sm:$0xf]
        %v537 = vld [vmem:[#allocation6 + $0x4] sm:$0xf]
        %v538 = vld [vmem:[#allocation6 + $0x8] sm:$0xf]
        %v539 = vld [vmem:[#allocation6 + $0xc] sm:$0xf]
        %v540 = vld [vmem:[#allocation6 + $0x10] sm:$0xf]
        %v541 = vld [vmem:[#allocation6 + $0x14] sm:$0xf]
        %v542 = vld [vmem:[#allocation6 + $0x18] sm:$0xf]
        %v543 = vld [vmem:[#allocation6 + $0x1c] sm:$0xf]
        %v544 = vld [vmem:[#allocation6 + $0x20] sm:$0xf]
        %v545 = vld [vmem:[#allocation6 + $0x24] sm:$0xf]
        %v546 = vld [vmem:[#allocation6 + $0x28] sm:$0xf]
        %v547 = vld [vmem:[#allocation6 + $0x2c] sm:$0xf]
        %v548 = vld [vmem:[#allocation6 + $0x30] sm:$0xf]
        %v549 = vld [vmem:[#allocation6 + $0x34] sm:$0xf]
        %v550 = vld [vmem:[#allocation6 + $0x38] sm:$0xf]
        %v551 = vld [vmem:[#allocation6 + $0x3c] sm:$0xf]
        %v552 = vld [vmem:[#allocation6 + $0x40] sm:$0xf]
        %v553 = vld [vmem:[#allocation6 + $0x44] sm:$0xf]
        %v554 = vld [vmem:[#allocation6 + $0x48] sm:$0x3]
        %v619 = vunpack.c.l.b16 %v408
        %v620 = vunpack.c.h.b16 %v408
        %v621 = vunpack.c.l.b16 %v409
        %v622 = vunpack.c.h.b16 %v409
        %v623 = vunpack.c.l.b16 %v410
        %v624 = vunpack.c.h.b16 %v410
        %v625 = vunpack.c.l.b16 %v411
        %v626 = vunpack.c.h.b16 %v411
        %v627 = vunpack.c.l.b16 %v412
        %v628 = vunpack.c.h.b16 %v412
        %v629 = vunpack.c.l.b16 %v413
        %v630 = vunpack.c.h.b16 %v413
        %v631 = vunpack.c.l.b16 %v414
        %v632 = vunpack.c.h.b16 %v414
        %v633 = vunpack.c.l.b16 %v415
        %v634 = vunpack.c.h.b16 %v415
        %v635 = vunpack.c.l.b16 %v416
        %v636 = vunpack.c.h.b16 %v416
        %v637 = vunpack.c.l.b16 %v417
        %v638 = vunpack.c.h.b16 %v417
        %v639 = vunpack.c.l.b16 %v418
        %v640 = vunpack.c.h.b16 %v418
        %v641 = vunpack.c.l.b16 %v419
        %v642 = vunpack.c.h.b16 %v419
        %v643 = vunpack.c.l.b16 %v420
        %v644 = vunpack.c.h.b16 %v420
        %v645 = vunpack.c.l.b16 %v421
        %v646 = vunpack.c.h.b16 %v421
        %v647 = vunpack.c.l.b16 %v422
        %v648 = vunpack.c.h.b16 %v422
        %v649 = vunpack.c.l.b16 %v423
        %v650 = vunpack.c.h.b16 %v423
        %v651 = vunpack.c.l.b16 %v424
        %v652 = vunpack.c.h.b16 %v424
        %v653 = vunpack.c.l.b16 %v425
        %v654 = vunpack.c.h.b16 %v425
        %v655 = vunpack.c.l.b16 %v426
        %v656 = vunpack.c.h.b16 %v426
        %v657 = vunpack.c.l.b16 %v427
        %v658 = vunpack.c.h.b16 %v427
        %v659 = vunpack.c.l.b16 %v428
        %v660 = vunpack.c.h.b16 %v428
        %v661 = vunpack.c.l.b16 %v429
        %v662 = vunpack.c.h.b16 %v429
        %v663 = vunpack.c.l.b16 %v430
        %v664 = vunpack.c.h.b16 %v430
        %v665 = vunpack.c.l.b16 %v431
        %v666 = vunpack.c.h.b16 %v431
        %v667 = vunpack.c.l.b16 %v432
        %v668 = vunpack.c.h.b16 %v432
        %v669 = vunpack.c.l.b16 %v433
        %v670 = vunpack.c.h.b16 %v433
        %v671 = vunpack.c.l.b16 %v434
        %v672 = vunpack.c.h.b16 %v434
        %v673 = vunpack.c.l.b16 %v435
        %v674 = vunpack.c.h.b16 %v435
        %v675 = vunpack.c.l.b16 %v436
        %v676 = vunpack.c.h.b16 %v436
        %v677 = vunpack.c.l.b16 %v437
        %v678 = vunpack.c.h.b16 %v437
        %v679 = vunpack.c.l.b16 %v438
        %v680 = vunpack.c.h.b16 %v438
        %v681 = vunpack.c.l.b16 %v439
        %v682 = vunpack.c.h.b16 %v439
        %v683 = vunpack.c.l.b16 %v440
        %v684 = vunpack.c.h.b16 %v440
        %v685 = vunpack.c.l.b16 %v441
        %v686 = vunpack.c.h.b16 %v441
        %v687 = vunpack.c.l.b16 %v442
        %v688 = vunpack.c.h.b16 %v442
        %v689 = vunpack.c.l.b16 %v443
        %v690 = vunpack.c.h.b16 %v443
        %v691 = vunpack.c.l.b16 %v444
        %v692 = vunpack.c.h.b16 %v444
        %v693 = vunpack.c.l.b16 %v445
        %v694 = vunpack.c.h.b16 %v445
        %v695 = vunpack.c.l.b16 %v446
        %v696 = vunpack.c.h.b16 %v446
        %v697 = vunpack.c.l.b16 %v447
        %v698 = vunpack.c.h.b16 %v447
        %v699 = vunpack.c.l.b16 %v448
        %v700 = vunpack.c.h.b16 %v448
        %v701 = vunpack.c.l.b16 %v449
        %v702 = vunpack.c.h.b16 %v449
        %v703 = vunpack.c.l.b16 %v450
        %v704 = vunpack.c.h.b16 %v450
        %v705 = vunpack.c.l.b16 %v451
        %v706 = vunpack.c.h.b16 %v451
        %v707 = vunpack.c.l.b16 %v452
        %v708 = vunpack.c.h.b16 %v452
        %v709 = vunpack.c.l.b16 %v453
        %v710 = vunpack.c.h.b16 %v453
        %v711 = vunpack.c.l.b16 %v454
        %v712 = vunpack.c.h.b16 %v454
        %v713 = vunpack.c.l.b16 %v455
        %v714 = vunpack.c.h.b16 %v455
        %v715 = vunpack.c.l.b16 %v456
        %v716 = vunpack.c.h.b16 %v456
        %v717 = vunpack.c.l.b16 %v457
        %v718 = vunpack.c.h.b16 %v457
        %v719 = vunpack.c.l.b16 %v458
        %v720 = vunpack.c.h.b16 %v458
        %v721 = vunpack.c.l.b16 %v459
        %v722 = vunpack.c.h.b16 %v459
        %v723 = vunpack.c.l.b16 %v460
        %v724 = vunpack.c.h.b16 %v460
        %v725 = vunpack.c.l.b16 %v461
        %v726 = vunpack.c.h.b16 %v461
        %v727 = vunpack.c.l.b16 %v462
        %v728 = vunpack.c.h.b16 %v462
        %v729 = vunpack.c.l.b16 %v463
        %v730 = vunpack.c.h.b16 %v463
        %v731 = vunpack.c.l.b16 %v464
        %v732 = vunpack.c.h.b16 %v464
        %v733 = vunpack.c.l.b16 %v465
        %v734 = vunpack.c.h.b16 %v465
        %v735 = vunpack.c.l.b16 %v466
        %v736 = vunpack.c.h.b16 %v466
        %v737 = vunpack.c.l.b16 %v467
        %v738 = vunpack.c.h.b16 %v467
        %v739 = vunpack.c.l.b16 %v468
        %v740 = vunpack.c.h.b16 %v468
        %v741 = vunpack.c.l.b16 %v469
        %v742 = vunpack.c.h.b16 %v469
        %v743 = vunpack.c.l.b16 %v470
        %v744 = vunpack.c.h.b16 %v470
        %v745 = vunpack.c.l.b16 %v471
        %v746 = vunpack.c.h.b16 %v471
        %v747 = vpack.c.b16 %v621, %v619
        %v748 = vpack.c.b16 %v622, %v620
        %v749 = vpack.c.b16 %v625, %v623
        %v750 = vpack.c.b16 %v626, %v624
        %v751 = vpack.c.b16 %v629, %v627
        %v752 = vpack.c.b16 %v630, %v628
        %v753 = vpack.c.b16 %v633, %v631
        %v754 = vpack.c.b16 %v634, %v632
        %v755 = vpack.c.b16 %v637, %v635
        %v756 = vpack.c.b16 %v638, %v636
        %v757 = vpack.c.b16 %v641, %v639
        %v758 = vpack.c.b16 %v642, %v640
        %v759 = vpack.c.b16 %v645, %v643
        %v760 = vpack.c.b16 %v646, %v644
        %v761 = vpack.c.b16 %v649, %v647
        %v762 = vpack.c.b16 %v650, %v648
        %v763 = vpack.c.b16 %v653, %v651
        %v764 = vpack.c.b16 %v654, %v652
        %v765 = vpack.c.b16 %v657, %v655
        %v766 = vpack.c.b16 %v658, %v656
        %v767 = vpack.c.b16 %v661, %v659
        %v768 = vpack.c.b16 %v662, %v660
        %v769 = vpack.c.b16 %v665, %v663
        %v770 = vpack.c.b16 %v666, %v664
        %v771 = vpack.c.b16 %v669, %v667
        %v772 = vpack.c.b16 %v670, %v668
        %v773 = vpack.c.b16 %v673, %v671
        %v774 = vpack.c.b16 %v674, %v672
        %v775 = vpack.c.b16 %v677, %v675
        %v776 = vpack.c.b16 %v678, %v676
        %v777 = vpack.c.b16 %v681, %v679
        %v778 = vpack.c.b16 %v682, %v680
        %v779 = vpack.c.b16 %v685, %v683
        %v780 = vpack.c.b16 %v686, %v684
        %v781 = vpack.c.b16 %v689, %v687
        %v782 = vpack.c.b16 %v690, %v688
        %v783 = vpack.c.b16 %v693, %v691
        %v784 = vpack.c.b16 %v694, %v692
        %v785 = vpack.c.b16 %v697, %v695
        %v786 = vpack.c.b16 %v698, %v696
        %v787 = vpack.c.b16 %v701, %v699
        %v788 = vpack.c.b16 %v702, %v700
        %v789 = vpack.c.b16 %v705, %v703
        %v790 = vpack.c.b16 %v706, %v704
        %v791 = vpack.c.b16 %v709, %v707
        %v792 = vpack.c.b16 %v710, %v708
        %v793 = vpack.c.b16 %v713, %v711
        %v794 = vpack.c.b16 %v714, %v712
        %v795 = vpack.c.b16 %v717, %v715
        %v796 = vpack.c.b16 %v718, %v716
        %v797 = vpack.c.b16 %v721, %v719
        %v798 = vpack.c.b16 %v722, %v720
        %v799 = vpack.c.b16 %v725, %v723
        %v800 = vpack.c.b16 %v726, %v724
        %v801 = vpack.c.b16 %v729, %v727
        %v802 = vpack.c.b16 %v730, %v728
        %v803 = vpack.c.b16 %v733, %v731
        %v804 = vpack.c.b16 %v734, %v732
        %v805 = vpack.c.b16 %v737, %v735
        %v806 = vpack.c.b16 %v738, %v736
        %v807 = vpack.c.b16 %v741, %v739
        %v808 = vpack.c.b16 %v742, %v740
        %v809 = vpack.c.b16 %v745, %v743
        %v810 = vpack.c.b16 %v746, %v744
        %v862 = vunpack.c.l.b16 %v536
        %v863 = vunpack.c.l.b16 %v537
        %v864 = vunpack.c.l.b16 %v538
        %v865 = vunpack.c.l.b16 %v539
        %v866 = vunpack.c.l.b16 %v540
        %v867 = vunpack.c.l.b16 %v541
        %v868 = vunpack.c.l.b16 %v542
        %v869 = vunpack.c.l.b16 %v543
        %v870 = vunpack.c.l.b16 %v544
        %v871 = vunpack.c.l.b16 %v545
        %v872 = vunpack.c.l.b16 %v546
        %v873 = vunpack.c.l.b16 %v547
        %v874 = vunpack.c.l.b16 %v548
        %v875 = vunpack.c.l.b16 %v549
        %v876 = vunpack.c.l.b16 %v550
        %v877 = vunpack.c.l.b16 %v551
        %v878 = vunpack.c.l.b16 %v552
        %v879 = vunpack.c.l.b16 %v553
        %v880 = vunpack.c.l.b16 %v554
        %v881 = vpack.c.b16 %v863, %v862
        %v882 = vpack.c.b16 %v865, %v864
        %v883 = vpack.c.b16 %v867, %v866
        %v884 = vpack.c.b16 %v869, %v868
        %v885 = vpack.c.b16 %v871, %v870
        %v886 = vpack.c.b16 %v873, %v872
        %v887 = vpack.c.b16 %v875, %v874
        %v888 = vpack.c.b16 %v877, %v876
        %v889 = vpack.c.b16 %v879, %v878
        %v890 = vpack.c.b16 %v880, %v880
        %vm900 = vcmask 154624
        %v902 = vsel %vm900, %v748, 0
        %v905 = vsel %vm900, %v750, 0
        %v908 = vsel %vm900, %v752, 0
        %v911 = vsel %vm900, %v754, 0
        %v914 = vsel %vm900, %v756, 0
        %v917 = vsel %vm900, %v758, 0
        %v920 = vsel %vm900, %v760, 0
        %v923 = vsel %vm900, %v762, 0
        %v926 = vsel %vm900, %v764, 0
        %v929 = vsel %vm900, %v766, 0
        %v932 = vsel %vm900, %v768, 0
        %v935 = vsel %vm900, %v770, 0
        %v938 = vsel %vm900, %v772, 0
        %v941 = vsel %vm900, %v774, 0
        %v944 = vsel %vm900, %v776, 0
        %v947 = vsel %vm900, %v778, 0
        %v950 = vsel %vm900, %v780, 0
        %v953 = vsel %vm900, %v782, 0
        %v956 = vsel %vm900, %v784, 0
        %v959 = vsel %vm900, %v786, 0
        %v962 = vsel %vm900, %v788, 0
        %v965 = vsel %vm900, %v790, 0
        %v968 = vsel %vm900, %v792, 0
        %v971 = vsel %vm900, %v794, 0
        %v974 = vsel %vm900, %v796, 0
        %v977 = vsel %vm900, %v798, 0
        %v980 = vsel %vm900, %v800, 0
        %v983 = vsel %vm900, %v802, 0
        %v986 = vsel %vm900, %v804, 0
        %v989 = vsel %vm900, %v806, 0
        %v992 = vsel %vm900, %v808, 0
        %v995 = vsel %vm900, %v810, 0
        %vm997 = vcmask 1040384
        %vm998 = vcmask 1041408
        %v999 = vsel %vm997, 4294967295, 65535
        %v1000 = vsel %vm998, %v999, 0
        %v1002 = vand.u32 %v890, %v1000
        %1004 = vmatprep.subr.bf16.mxu0 0
        %1005 = vmatpush1.bf16.msra.mxu0 %v881
        %1006 = vmatprep.subr.bf16.mxu0 0
        %1007 = vmatpush1.bf16.msra.mxu0 %v882
        %1008 = vmatprep.subr.bf16.mxu0 0
        %1009 = vmatpush1.bf16.msra.mxu0 %v883
        %1010 = vmatprep.subr.bf16.mxu0 0
        %1011 = vmatpush1.bf16.msra.mxu0 %v884
        %1012 = vmatprep.subr.bf16.mxu0 0
        %1013 = vmatpush1.bf16.msra.mxu0 %v885
        %1014 = vmatprep.subr.bf16.mxu0 0
        %1015 = vmatpush1.bf16.msra.mxu0 %v886
        %1016 = vmatprep.subr.bf16.mxu0 0
        %1017 = vmatpush1.bf16.msra.mxu0 %v887
        %1018 = vmatprep.subr.bf16.mxu0 0
        %1019 = vmatpush1.bf16.msra.mxu0 %v888
        %1020 = vmatprep.subr.bf16.mxu0 0
        %1021 = vmatpush1.bf16.msra.mxu0 %v889
        %1022 = vmatprep.subr.bf16.mxu0 0
        %1023 = vmatpush1.bf16.msra.mxu0 %v1002
        %1024 = vmatprep.subr.bf16.mxu0 0
        %1025 = vmatpush1.bf16.msra.mxu0 0
        %1026 = vmatprep.subr.bf16.mxu0 0
        %1027 = vmatpush1.bf16.msra.mxu0 0
        %1028 = vmatprep.subr.bf16.mxu0 0
        %1029 = vmatpush1.bf16.msra.mxu0 0
        %1030 = vmatprep.subr.bf16.mxu0 0
        %1031 = vmatpush1.bf16.msra.mxu0 0
        %1032 = vmatprep.subr.bf16.mxu0 0
        %1033 = vmatpush1.bf16.msra.mxu0 0
        %1034 = vmatprep.subr.bf16.mxu0 0
        %1035 = vmatpush1.bf16.msra.mxu0 0
        %1036 = vmatprep.mubr.bf16.mxu0 %v902
        %1037 = vmatmul.mubr.bf16.gmra.mrb[0].mxu0 %v747
        %v1038 = vpop.f32.mrb[0].mxu0
        %v1039 = vadd.f32 0.0, %v1038
        %v1040 = vpop.f32.mrb[0].mxu0
        %v1041 = vpop.f32.mrb[0].mxu0
        %v1042 = vadd.f32 0.0, %v1041
        %v1043 = vpop.f32.mrb[0].mxu0
        %1044 = vmatprep.mubr.bf16.mxu0 %v905
        %1045 = vmatmul.mubr.bf16.gmra.mrb[0].mxu0 %v749
        %v1046 = vpop.f32.mrb[0].mxu0
        %v1047 = vadd.f32 0.0, %v1046
        %v1048 = vpop.f32.mrb[0].mxu0
        %v1049 = vpop.f32.mrb[0].mxu0
        %v1050 = vadd.f32 0.0, %v1049
        %v1051 = vpop.f32.mrb[0].mxu0
        %1052 = vmatprep.mubr.bf16.mxu0 %v908
        %1053 = vmatmul.mubr.bf16.gmra.mrb[0].mxu0 %v751
        %v1054 = vpop.f32.mrb[0].mxu0
        %v1055 = vadd.f32 0.0, %v1054
        %v1056 = vpop.f32.mrb[0].mxu0
        %v1057 = vpop.f32.mrb[0].mxu0
        %v1058 = vadd.f32 0.0, %v1057
        %v1059 = vpop.f32.mrb[0].mxu0
        %1060 = vmatprep.mubr.bf16.mxu0 %v911
        %1061 = vmatmul.mubr.bf16.gmra.mrb[0].mxu0 %v753
        %v1062 = vpop.f32.mrb[0].mxu0
        %v1063 = vadd.f32 0.0, %v1062
        %v1064 = vpop.f32.mrb[0].mxu0
        %v1065 = vpop.f32.mrb[0].mxu0
        %v1066 = vadd.f32 0.0, %v1065
        %v1067 = vpop.f32.mrb[0].mxu0
        %1068 = vmatprep.mubr.bf16.mxu0 %v914
        %1069 = vmatmul.mubr.bf16.gmra.mrb[0].mxu0 %v755
        %v1070 = vpop.f32.mrb[0].mxu0
        %v1071 = vadd.f32 0.0, %v1070
        %v1072 = vpop.f32.mrb[0].mxu0
        %v1073 = vpop.f32.mrb[0].mxu0
        %v1074 = vadd.f32 0.0, %v1073
        %v1075 = vpop.f32.mrb[0].mxu0
        %1076 = vmatprep.mubr.bf16.mxu0 %v917
        %1077 = vmatmul.mubr.bf16.gmra.mrb[0].mxu0 %v757
        %v1078 = vpop.f32.mrb[0].mxu0
        %v1079 = vadd.f32 0.0, %v1078
        %v1080 = vpop.f32.mrb[0].mxu0
        %v1081 = vpop.f32.mrb[0].mxu0
        %v1082 = vadd.f32 0.0, %v1081
        %v1083 = vpop.f32.mrb[0].mxu0
        %1084 = vmatprep.mubr.bf16.mxu0 %v920
        %1085 = vmatmul.mubr.bf16.gmra.mrb[0].mxu0 %v759
        %v1086 = vpop.f32.mrb[0].mxu0
        %v1087 = vadd.f32 0.0, %v1086
        %v1088 = vpop.f32.mrb[0].mxu0
        %v1089 = vpop.f32.mrb[0].mxu0
        %v1090 = vadd.f32 0.0, %v1089
        %v1091 = vpop.f32.mrb[0].mxu0
        %1092 = vmatprep.mubr.bf16.mxu0 %v923
        %1093 = vmatmul.mubr.bf16.gmra.mrb[0].mxu0 %v761
        %v1094 = vpop.f32.mrb[0].mxu0
        %v1095 = vadd.f32 0.0, %v1094
        %v1096 = vpop.f32.mrb[0].mxu0
        %v1097 = vpop.f32.mrb[0].mxu0
        %v1098 = vadd.f32 0.0, %v1097
        %v1099 = vpop.f32.mrb[0].mxu0
        %1100 = vmatprep.mubr.bf16.mxu0 %v926
        %1101 = vmatmul.mubr.bf16.gmra.mrb[0].mxu0 %v763
        %v1102 = vpop.f32.mrb[0].mxu0
        %v1103 = vadd.f32 0.0, %v1102
        %v1104 = vpop.f32.mrb[0].mxu0
        %v1105 = vpop.f32.mrb[0].mxu0
        %v1106 = vadd.f32 0.0, %v1105
        %v1107 = vpop.f32.mrb[0].mxu0
        %1108 = vmatprep.mubr.bf16.mxu0 %v929
        %1109 = vmatmul.mubr.bf16.gmra.mrb[0].mxu0 %v765
        %v1110 = vpop.f32.mrb[0].mxu0
        %v1111 = vadd.f32 0.0, %v1110
        %v1112 = vpop.f32.mrb[0].mxu0
        %v1113 = vpop.f32.mrb[0].mxu0
        %v1114 = vadd.f32 0.0, %v1113
        %v1115 = vpop.f32.mrb[0].mxu0
        %1116 = vmatprep.mubr.bf16.mxu0 %v932
        %1117 = vmatmul.mubr.bf16.gmra.mrb[0].mxu0 %v767
        %v1118 = vpop.f32.mrb[0].mxu0
        %v1119 = vadd.f32 0.0, %v1118
        %v1120 = vpop.f32.mrb[0].mxu0
        %v1121 = vpop.f32.mrb[0].mxu0
        %v1122 = vadd.f32 0.0, %v1121
        %v1123 = vpop.f32.mrb[0].mxu0
        %1124 = vmatprep.mubr.bf16.mxu0 %v935
        %1125 = vmatmul.mubr.bf16.gmra.mrb[0].mxu0 %v769
        %v1126 = vpop.f32.mrb[0].mxu0
        %v1127 = vadd.f32 0.0, %v1126
        %v1128 = vpop.f32.mrb[0].mxu0
        %v1129 = vpop.f32.mrb[0].mxu0
        %v1130 = vadd.f32 0.0, %v1129
        %v1131 = vpop.f32.mrb[0].mxu0
        %1132 = vmatprep.mubr.bf16.mxu0 %v938
        %1133 = vmatmul.mubr.bf16.gmra.mrb[0].mxu0 %v771
        %v1134 = vpop.f32.mrb[0].mxu0
        %v1135 = vadd.f32 0.0, %v1134
        %v1136 = vpop.f32.mrb[0].mxu0
        %v1137 = vpop.f32.mrb[0].mxu0
        %v1138 = vadd.f32 0.0, %v1137
        %v1139 = vpop.f32.mrb[0].mxu0
        %1140 = vmatprep.mubr.bf16.mxu0 %v941
        %1141 = vmatmul.mubr.bf16.gmra.mrb[0].mxu0 %v773
        %v1142 = vpop.f32.mrb[0].mxu0
        %v1143 = vadd.f32 0.0, %v1142
        %v1144 = vpop.f32.mrb[0].mxu0
        %v1145 = vpop.f32.mrb[0].mxu0
        %v1146 = vadd.f32 0.0, %v1145
        %v1147 = vpop.f32.mrb[0].mxu0
        %1148 = vmatprep.mubr.bf16.mxu0 %v944
        %1149 = vmatmul.mubr.bf16.gmra.mrb[0].mxu0 %v775
        %v1150 = vpop.f32.mrb[0].mxu0
        %v1151 = vadd.f32 0.0, %v1150
        %v1152 = vpop.f32.mrb[0].mxu0
        %v1153 = vpop.f32.mrb[0].mxu0
        %v1154 = vadd.f32 0.0, %v1153
        %v1155 = vpop.f32.mrb[0].mxu0
        %1156 = vmatprep.mubr.bf16.mxu0 %v947
        %1157 = vmatmul.mubr.bf16.gmra.mrb[0].mxu0 %v777
        %v1158 = vpop.f32.mrb[0].mxu0
        %v1159 = vadd.f32 0.0, %v1158
        %v1160 = vpop.f32.mrb[0].mxu0
        %v1161 = vpop.f32.mrb[0].mxu0
        %v1162 = vadd.f32 0.0, %v1161
        %v1163 = vpop.f32.mrb[0].mxu0
        %1164 = vmatprep.mubr.bf16.mxu0 %v950
        %1165 = vmatmul.mubr.bf16.gmra.mrb[0].mxu0 %v779
        %v1166 = vpop.f32.mrb[0].mxu0
        %v1167 = vadd.f32 0.0, %v1166
        %v1168 = vpop.f32.mrb[0].mxu0
        %v1169 = vpop.f32.mrb[0].mxu0
        %v1170 = vadd.f32 0.0, %v1169
        %v1171 = vpop.f32.mrb[0].mxu0
        %1172 = vmatprep.mubr.bf16.mxu0 %v953
        %1173 = vmatmul.mubr.bf16.gmra.mrb[0].mxu0 %v781
        %v1174 = vpop.f32.mrb[0].mxu0
        %v1175 = vadd.f32 0.0, %v1174
        %v1176 = vpop.f32.mrb[0].mxu0
        %v1177 = vpop.f32.mrb[0].mxu0
        %v1178 = vadd.f32 0.0, %v1177
        %v1179 = vpop.f32.mrb[0].mxu0
        %1180 = vmatprep.mubr.bf16.mxu0 %v956
        %1181 = vmatmul.mubr.bf16.gmra.mrb[0].mxu0 %v783
        %v1182 = vpop.f32.mrb[0].mxu0
        %v1183 = vadd.f32 0.0, %v1182
        %v1184 = vpop.f32.mrb[0].mxu0
        %v1185 = vpop.f32.mrb[0].mxu0
        %v1186 = vadd.f32 0.0, %v1185
        %v1187 = vpop.f32.mrb[0].mxu0
        %1188 = vmatprep.mubr.bf16.mxu0 %v959
        %1189 = vmatmul.mubr.bf16.gmra.mrb[0].mxu0 %v785
        %v1190 = vpop.f32.mrb[0].mxu0
        %v1191 = vadd.f32 0.0, %v1190
        %v1192 = vpop.f32.mrb[0].mxu0
        %v1193 = vpop.f32.mrb[0].mxu0
        %v1194 = vadd.f32 0.0, %v1193
        %v1195 = vpop.f32.mrb[0].mxu0
        %1196 = vmatprep.mubr.bf16.mxu0 %v962
        %1197 = vmatmul.mubr.bf16.gmra.mrb[0].mxu0 %v787
        %v1198 = vpop.f32.mrb[0].mxu0
        %v1199 = vadd.f32 0.0, %v1198
        %v1200 = vpop.f32.mrb[0].mxu0
        %v1201 = vpop.f32.mrb[0].mxu0
        %v1202 = vadd.f32 0.0, %v1201
        %v1203 = vpop.f32.mrb[0].mxu0
        %1204 = vmatprep.mubr.bf16.mxu0 %v965
        %1205 = vmatmul.mubr.bf16.gmra.mrb[0].mxu0 %v789
        %v1206 = vpop.f32.mrb[0].mxu0
        %v1207 = vadd.f32 0.0, %v1206
        %v1208 = vpop.f32.mrb[0].mxu0
        %v1209 = vpop.f32.mrb[0].mxu0
        %v1210 = vadd.f32 0.0, %v1209
        %v1211 = vpop.f32.mrb[0].mxu0
        %1212 = vmatprep.mubr.bf16.mxu0 %v968
        %1213 = vmatmul.mubr.bf16.gmra.mrb[0].mxu0 %v791
        %v1214 = vpop.f32.mrb[0].mxu0
        %v1215 = vadd.f32 0.0, %v1214
        %v1216 = vpop.f32.mrb[0].mxu0
        %v1217 = vpop.f32.mrb[0].mxu0
        %v1218 = vadd.f32 0.0, %v1217
        %v1219 = vpop.f32.mrb[0].mxu0
        %1220 = vmatprep.mubr.bf16.mxu0 %v971
        %1221 = vmatmul.mubr.bf16.gmra.mrb[0].mxu0 %v793
        %v1222 = vpop.f32.mrb[0].mxu0
        %v1223 = vadd.f32 0.0, %v1222
        %v1224 = vpop.f32.mrb[0].mxu0
        %v1225 = vpop.f32.mrb[0].mxu0
        %v1226 = vadd.f32 0.0, %v1225
        %v1227 = vpop.f32.mrb[0].mxu0
        %1228 = vmatprep.mubr.bf16.mxu0 %v974
        %1229 = vmatmul.mubr.bf16.gmra.mrb[0].mxu0 %v795
        %v1230 = vpop.f32.mrb[0].mxu0
        %v1231 = vadd.f32 0.0, %v1230
        %v1232 = vpop.f32.mrb[0].mxu0
        %v1233 = vpop.f32.mrb[0].mxu0
        %v1234 = vadd.f32 0.0, %v1233
        %v1235 = vpop.f32.mrb[0].mxu0
        %1236 = vmatprep.mubr.bf16.mxu0 %v977
        %1237 = vmatmul.mubr.bf16.gmra.mrb[0].mxu0 %v797
        %v1238 = vpop.f32.mrb[0].mxu0
        %v1239 = vadd.f32 0.0, %v1238
        %v1240 = vpop.f32.mrb[0].mxu0
        %v1241 = vpop.f32.mrb[0].mxu0
        %v1242 = vadd.f32 0.0, %v1241
        %v1243 = vpop.f32.mrb[0].mxu0
        %1244 = vmatprep.mubr.bf16.mxu0 %v980
        %1245 = vmatmul.mubr.bf16.gmra.mrb[0].mxu0 %v799
        %v1246 = vpop.f32.mrb[0].mxu0
        %v1247 = vadd.f32 0.0, %v1246
        %v1248 = vpop.f32.mrb[0].mxu0
        %v1249 = vpop.f32.mrb[0].mxu0
        %v1250 = vadd.f32 0.0, %v1249
        %v1251 = vpop.f32.mrb[0].mxu0
        %1252 = vmatprep.mubr.bf16.mxu0 %v983
        %1253 = vmatmul.mubr.bf16.gmra.mrb[0].mxu0 %v801
        %v1254 = vpop.f32.mrb[0].mxu0
        %v1255 = vadd.f32 0.0, %v1254
        %v1256 = vpop.f32.mrb[0].mxu0
        %v1257 = vpop.f32.mrb[0].mxu0
        %v1258 = vadd.f32 0.0, %v1257
        %v1259 = vpop.f32.mrb[0].mxu0
        %1260 = vmatprep.mubr.bf16.mxu0 %v986
        %1261 = vmatmul.mubr.bf16.gmra.mrb[0].mxu0 %v803
        %v1262 = vpop.f32.mrb[0].mxu0
        %v1263 = vadd.f32 0.0, %v1262
        %v1264 = vpop.f32.mrb[0].mxu0
        %v1265 = vpop.f32.mrb[0].mxu0
        %v1266 = vadd.f32 0.0, %v1265
        %v1267 = vpop.f32.mrb[0].mxu0
        %1268 = vmatprep.mubr.bf16.mxu0 %v989
        %1269 = vmatmul.mubr.bf16.gmra.mrb[0].mxu0 %v805
        %v1270 = vpop.f32.mrb[0].mxu0
        %v1271 = vadd.f32 0.0, %v1270
        %v1272 = vpop.f32.mrb[0].mxu0
        %v1273 = vpop.f32.mrb[0].mxu0
        %v1274 = vadd.f32 0.0, %v1273
        %v1275 = vpop.f32.mrb[0].mxu0
        %1276 = vmatprep.mubr.bf16.mxu0 %v992
        %1277 = vmatmul.mubr.bf16.gmra.mrb[0].mxu0 %v807
        %v1278 = vpop.f32.mrb[0].mxu0
        %v1279 = vadd.f32 0.0, %v1278
        %v1280 = vpop.f32.mrb[0].mxu0
        %v1281 = vpop.f32.mrb[0].mxu0
        %v1282 = vadd.f32 0.0, %v1281
        %v1283 = vpop.f32.mrb[0].mxu0
        %1284 = vmatprep.mubr.bf16.mxu0 %v995
        %1285 = vmatmul.mubr.bf16.gmra.mrb[0].mxu0 %v809
        %v1286 = vpop.f32.mrb[0].mxu0
        %v1287 = vadd.f32 0.0, %v1286
        %v1288 = vpop.f32.mrb[0].mxu0
        %v1289 = vpop.f32.mrb[0].mxu0
        %v1290 = vadd.f32 0.0, %v1289
        %v1291 = vpop.f32.mrb[0].mxu0
        %1292 = vdwg.mxu0
        %v1293 = vadd.f32 %v472, %v1039
        %v1294 = vadd.f32 %v473, %v1042
        %v1295 = vadd.f32 %v474, %v1047
        %v1296 = vadd.f32 %v475, %v1050
        %v1297 = vadd.f32 %v476, %v1055
        %v1298 = vadd.f32 %v477, %v1058
        %v1299 = vadd.f32 %v478, %v1063
        %v1300 = vadd.f32 %v479, %v1066
        %v1301 = vadd.f32 %v480, %v1071
        %v1302 = vadd.f32 %v481, %v1074
        %v1303 = vadd.f32 %v482, %v1079
        %v1304 = vadd.f32 %v483, %v1082
        %v1305 = vadd.f32 %v484, %v1087
        %v1306 = vadd.f32 %v485, %v1090
        %v1307 = vadd.f32 %v486, %v1095
        %v1308 = vadd.f32 %v487, %v1098
        %v1309 = vadd.f32 %v488, %v1103
        %v1310 = vadd.f32 %v489, %v1106
        %v1311 = vadd.f32 %v490, %v1111
        %v1312 = vadd.f32 %v491, %v1114
        %v1313 = vadd.f32 %v492, %v1119
        %v1314 = vadd.f32 %v493, %v1122
        %v1315 = vadd.f32 %v494, %v1127
        %v1316 = vadd.f32 %v495, %v1130
        %v1317 = vadd.f32 %v496, %v1135
        %v1318 = vadd.f32 %v497, %v1138
        %v1319 = vadd.f32 %v498, %v1143
        %v1320 = vadd.f32 %v499, %v1146
        %v1321 = vadd.f32 %v500, %v1151
        %v1322 = vadd.f32 %v501, %v1154
        %v1323 = vadd.f32 %v502, %v1159
        %v1324 = vadd.f32 %v503, %v1162
        %v1325 = vadd.f32 %v504, %v1167
        %v1326 = vadd.f32 %v505, %v1170
        %v1327 = vadd.f32 %v506, %v1175
        %v1328 = vadd.f32 %v507, %v1178
        %v1329 = vadd.f32 %v508, %v1183
        %v1330 = vadd.f32 %v509, %v1186
        %v1331 = vadd.f32 %v510, %v1191
        %v1332 = vadd.f32 %v511, %v1194
        %v1333 = vadd.f32 %v512, %v1199
        %v1334 = vadd.f32 %v513, %v1202
        %v1335 = vadd.f32 %v514, %v1207
        %v1336 = vadd.f32 %v515, %v1210
        %v1337 = vadd.f32 %v516, %v1215
        %v1338 = vadd.f32 %v517, %v1218
        %v1339 = vadd.f32 %v518, %v1223
        %v1340 = vadd.f32 %v519, %v1226
        %v1341 = vadd.f32 %v520, %v1231
        %v1342 = vadd.f32 %v521, %v1234
        %v1343 = vadd.f32 %v522, %v1239
        %v1344 = vadd.f32 %v523, %v1242
        %v1345 = vadd.f32 %v524, %v1247
        %v1346 = vadd.f32 %v525, %v1250
        %v1347 = vadd.f32 %v526, %v1255
        %v1348 = vadd.f32 %v527, %v1258
        %v1349 = vadd.f32 %v528, %v1263
        %v1350 = vadd.f32 %v529, %v1266
        %v1351 = vadd.f32 %v530, %v1271
        %v1352 = vadd.f32 %v531, %v1274
        %v1353 = vadd.f32 %v532, %v1279
        %v1354 = vadd.f32 %v533, %v1282
        %v1355 = vadd.f32 %v534, %v1287
        %v1356 = vadd.f32 %v535, %v1290
        %vm1357 = vcmask 523264
        %1358 = vst.msk [vmem:[#allocation2] sm:$0xff] %vm1357, %v1293
        %1359 = vst.msk [vmem:[#allocation2 + $0x8] sm:$0xff] %vm1357, %v1294
        %1360 = vst.msk [vmem:[#allocation2 + $0x10] sm:$0xff] %vm1357, %v1295
        %1361 = vst.msk [vmem:[#allocation2 + $0x18] sm:$0xff] %vm1357, %v1296
        %1362 = vst.msk [vmem:[#allocation2 + $0x20] sm:$0xff] %vm1357, %v1297
        %1363 = vst.msk [vmem:[#allocation2 + $0x28] sm:$0xff] %vm1357, %v1298
        %1364 = vst.msk [vmem:[#allocation2 + $0x30] sm:$0xff] %vm1357, %v1299
        %1365 = vst.msk [vmem:[#allocation2 + $0x38] sm:$0xff] %vm1357, %v1300
        %1366 = vst.msk [vmem:[#allocation2 + $0x40] sm:$0xff] %vm1357, %v1301
        %1367 = vst.msk [vmem:[#allocation2 + $0x48] sm:$0xff] %vm1357, %v1302
        %1368 = vst.msk [vmem:[#allocation2 + $0x50] sm:$0xff] %vm1357, %v1303
        %1369 = vst.msk [vmem:[#allocation2 + $0x58] sm:$0xff] %vm1357, %v1304
        %1370 = vst.msk [vmem:[#allocation2 + $0x60] sm:$0xff] %vm1357, %v1305
        %1371 = vst.msk [vmem:[#allocation2 + $0x68] sm:$0xff] %vm1357, %v1306
        %1372 = vst.msk [vmem:[#allocation2 + $0x70] sm:$0xff] %vm1357, %v1307
        %1373 = vst.msk [vmem:[#allocation2 + $0x78] sm:$0xff] %vm1357, %v1308
        %1374 = vst.msk [vmem:[#allocation2 + $0x80] sm:$0xff] %vm1357, %v1309
        %1375 = vst.msk [vmem:[#allocation2 + $0x88] sm:$0xff] %vm1357, %v1310
        %1376 = vst.msk [vmem:[#allocation2 + $0x90] sm:$0xff] %vm1357, %v1311
        %1377 = vst.msk [vmem:[#allocation2 + $0x98] sm:$0xff] %vm1357, %v1312
        %1378 = vst.msk [vmem:[#allocation2 + $0xa0] sm:$0xff] %vm1357, %v1313
        %1379 = vst.msk [vmem:[#allocation2 + $0xa8] sm:$0xff] %vm1357, %v1314
        %1380 = vst.msk [vmem:[#allocation2 + $0xb0] sm:$0xff] %vm1357, %v1315
        %1381 = vst.msk [vmem:[#allocation2 + $0xb8] sm:$0xff] %vm1357, %v1316
        %1382 = vst.msk [vmem:[#allocation2 + $0xc0] sm:$0xff] %vm1357, %v1317
        %1383 = vst.msk [vmem:[#allocation2 + $0xc8] sm:$0xff] %vm1357, %v1318
        %1384 = vst.msk [vmem:[#allocation2 + $0xd0] sm:$0xff] %vm1357, %v1319
        %1385 = vst.msk [vmem:[#allocation2 + $0xd8] sm:$0xff] %vm1357, %v1320
        %1386 = vst.msk [vmem:[#allocation2 + $0xe0] sm:$0xff] %vm1357, %v1321
        %1387 = vst.msk [vmem:[#allocation2 + $0xe8] sm:$0xff] %vm1357, %v1322
        %1388 = vst.msk [vmem:[#allocation2 + $0xf0] sm:$0xff] %vm1357, %v1323
        %1389 = vst.msk [vmem:[#allocation2 + $0xf8] sm:$0xff] %vm1357, %v1324
        %1390 = vst.msk [vmem:[#allocation2 + $0x100] sm:$0xff] %vm1357, %v1325
        %1391 = vst.msk [vmem:[#allocation2 + $0x108] sm:$0xff] %vm1357, %v1326
        %1392 = vst.msk [vmem:[#allocation2 + $0x110] sm:$0xff] %vm1357, %v1327
        %1393 = vst.msk [vmem:[#allocation2 + $0x118] sm:$0xff] %vm1357, %v1328
        %1394 = vst.msk [vmem:[#allocation2 + $0x120] sm:$0xff] %vm1357, %v1329
        %1395 = vst.msk [vmem:[#allocation2 + $0x128] sm:$0xff] %vm1357, %v1330
        %1396 = vst.msk [vmem:[#allocation2 + $0x130] sm:$0xff] %vm1357, %v1331
        %1397 = vst.msk [vmem:[#allocation2 + $0x138] sm:$0xff] %vm1357, %v1332
        %1398 = vst.msk [vmem:[#allocation2 + $0x140] sm:$0xff] %vm1357, %v1333
        %1399 = vst.msk [vmem:[#allocation2 + $0x148] sm:$0xff] %vm1357, %v1334
        %1400 = vst.msk [vmem:[#allocation2 + $0x150] sm:$0xff] %vm1357, %v1335
        %1401 = vst.msk [vmem:[#allocation2 + $0x158] sm:$0xff] %vm1357, %v1336
        %1402 = vst.msk [vmem:[#allocation2 + $0x160] sm:$0xff] %vm1357, %v1337
        %1403 = vst.msk [vmem:[#allocation2 + $0x168] sm:$0xff] %vm1357, %v1338
        %1404 = vst.msk [vmem:[#allocation2 + $0x170] sm:$0xff] %vm1357, %v1339
        %1405 = vst.msk [vmem:[#allocation2 + $0x178] sm:$0xff] %vm1357, %v1340
        %1406 = vst.msk [vmem:[#allocation2 + $0x180] sm:$0xff] %vm1357, %v1341
        %1407 = vst.msk [vmem:[#allocation2 + $0x188] sm:$0xff] %vm1357, %v1342
        %1408 = vst.msk [vmem:[#allocation2 + $0x190] sm:$0xff] %vm1357, %v1343
        %1409 = vst.msk [vmem:[#allocation2 + $0x198] sm:$0xff] %vm1357, %v1344
        %1410 = vst.msk [vmem:[#allocation2 + $0x1a0] sm:$0xff] %vm1357, %v1345
        %1411 = vst.msk [vmem:[#allocation2 + $0x1a8] sm:$0xff] %vm1357, %v1346
        %1412 = vst.msk [vmem:[#allocation2 + $0x1b0] sm:$0xff] %vm1357, %v1347
        %1413 = vst.msk [vmem:[#allocation2 + $0x1b8] sm:$0xff] %vm1357, %v1348
        %1414 = vst.msk [vmem:[#allocation2 + $0x1c0] sm:$0xff] %vm1357, %v1349
        %1415 = vst.msk [vmem:[#allocation2 + $0x1c8] sm:$0xff] %vm1357, %v1350
        %1416 = vst.msk [vmem:[#allocation2 + $0x1d0] sm:$0xff] %vm1357, %v1351
        %1417 = vst.msk [vmem:[#allocation2 + $0x1d8] sm:$0xff] %vm1357, %v1352
        %1418 = vst.msk [vmem:[#allocation2 + $0x1e0] sm:$0xff] %vm1357, %v1353
        %1419 = vst.msk [vmem:[#allocation2 + $0x1e8] sm:$0xff] %vm1357, %v1354
        %1420 = vst.msk [vmem:[#allocation2 + $0x1f0] sm:$0xff] %vm1357, %v1355
        %1421 = vst.msk [vmem:[#allocation2 + $0x1f8] sm:$0xff] %vm1357, %v1356
        // Predicated region
        $region49: #{stem_fwd.3} parent=31 // pred_check
          %p1422 = pneg %p339
        $region50: #{stem_fwd.3} parent=31 // pred_check_branch
          %1424 = sbr.rel (%p1422) target = $region52
        $region51: #{stem_fwd.3} parent=31 // pred_region
          %v1425 = vld [vmem:[#allocation2] sm:$0xff]
          %v1426 = vld [vmem:[#allocation2 + $0x8] sm:$0xff]
          %v1427 = vld [vmem:[#allocation2 + $0x10] sm:$0xff]
          %v1428 = vld [vmem:[#allocation2 + $0x18] sm:$0xff]
          %v1429 = vld [vmem:[#allocation2 + $0x20] sm:$0xff]
          %v1430 = vld [vmem:[#allocation2 + $0x28] sm:$0xff]
          %v1431 = vld [vmem:[#allocation2 + $0x30] sm:$0xff]
          %v1432 = vld [vmem:[#allocation2 + $0x38] sm:$0xff]
          %v1433 = vld [vmem:[#allocation2 + $0x40] sm:$0xff]
          %v1434 = vld [vmem:[#allocation2 + $0x48] sm:$0xff]
          %v1435 = vld [vmem:[#allocation2 + $0x50] sm:$0xff]
          %v1436 = vld [vmem:[#allocation2 + $0x58] sm:$0xff]
          %v1437 = vld [vmem:[#allocation2 + $0x60] sm:$0xff]
          %v1438 = vld [vmem:[#allocation2 + $0x68] sm:$0xff]
          %v1439 = vld [vmem:[#allocation2 + $0x70] sm:$0xff]
          %v1440 = vld [vmem:[#allocation2 + $0x78] sm:$0xff]
          %v1441 = vld [vmem:[#allocation2 + $0x80] sm:$0xff]
          %v1442 = vld [vmem:[#allocation2 + $0x88] sm:$0xff]
          %v1443 = vld [vmem:[#allocation2 + $0x90] sm:$0xff]
          %v1444 = vld [vmem:[#allocation2 + $0x98] sm:$0xff]
          %v1445 = vld [vmem:[#allocation2 + $0xa0] sm:$0xff]
          %v1446 = vld [vmem:[#allocation2 + $0xa8] sm:$0xff]
          %v1447 = vld [vmem:[#allocation2 + $0xb0] sm:$0xff]
          %v1448 = vld [vmem:[#allocation2 + $0xb8] sm:$0xff]
          %v1449 = vld [vmem:[#allocation2 + $0xc0] sm:$0xff]
          %v1450 = vld [vmem:[#allocation2 + $0xc8] sm:$0xff]
          %v1451 = vld [vmem:[#allocation2 + $0xd0] sm:$0xff]
          %v1452 = vld [vmem:[#allocation2 + $0xd8] sm:$0xff]
          %v1453 = vld [vmem:[#allocation2 + $0xe0] sm:$0xff]
          %v1454 = vld [vmem:[#allocation2 + $0xe8] sm:$0xff]
          %v1455 = vld [vmem:[#allocation2 + $0xf0] sm:$0xff]
          %v1456 = vld [vmem:[#allocation2 + $0xf8] sm:$0xff]
          %v1457 = vld [vmem:[#allocation2 + $0x100] sm:$0xff]
          %v1458 = vld [vmem:[#allocation2 + $0x108] sm:$0xff]
          %v1459 = vld [vmem:[#allocation2 + $0x110] sm:$0xff]
          %v1460 = vld [vmem:[#allocation2 + $0x118] sm:$0xff]
          %v1461 = vld [vmem:[#allocation2 + $0x120] sm:$0xff]
          %v1462 = vld [vmem:[#allocation2 + $0x128] sm:$0xff]
          %v1463 = vld [vmem:[#allocation2 + $0x130] sm:$0xff]
          %v1464 = vld [vmem:[#allocation2 + $0x138] sm:$0xff]
          %v1465 = vld [vmem:[#allocation2 + $0x140] sm:$0xff]
          %v1466 = vld [vmem:[#allocation2 + $0x148] sm:$0xff]
          %v1467 = vld [vmem:[#allocation2 + $0x150] sm:$0xff]
          %v1468 = vld [vmem:[#allocation2 + $0x158] sm:$0xff]
          %v1469 = vld [vmem:[#allocation2 + $0x160] sm:$0xff]
          %v1470 = vld [vmem:[#allocation2 + $0x168] sm:$0xff]
          %v1471 = vld [vmem:[#allocation2 + $0x170] sm:$0xff]
          %v1472 = vld [vmem:[#allocation2 + $0x178] sm:$0xff]
          %v1473 = vld [vmem:[#allocation2 + $0x180] sm:$0xff]
          %v1474 = vld [vmem:[#allocation2 + $0x188] sm:$0xff]
          %v1475 = vld [vmem:[#allocation2 + $0x190] sm:$0xff]
          %v1476 = vld [vmem:[#allocation2 + $0x198] sm:$0xff]
          %v1477 = vld [vmem:[#allocation2 + $0x1a0] sm:$0xff]
          %v1478 = vld [vmem:[#allocation2 + $0x1a8] sm:$0xff]
          %v1479 = vld [vmem:[#allocation2 + $0x1b0] sm:$0xff]
          %v1480 = vld [vmem:[#allocation2 + $0x1b8] sm:$0xff]
          %v1481 = vld [vmem:[#allocation2 + $0x1c0] sm:$0xff]
          %v1482 = vld [vmem:[#allocation2 + $0x1c8] sm:$0xff]
          %v1483 = vld [vmem:[#allocation2 + $0x1d0] sm:$0xff]
          %v1484 = vld [vmem:[#allocation2 + $0x1d8] sm:$0xff]
          %v1485 = vld [vmem:[#allocation2 + $0x1e0] sm:$0xff]
          %v1486 = vld [vmem:[#allocation2 + $0x1e8] sm:$0xff]
          %v1487 = vld [vmem:[#allocation2 + $0x1f0] sm:$0xff]
          %v1488 = vld [vmem:[#allocation2 + $0x1f8] sm:$0xff]
          %v1489 = vld [vmem:[#allocation8] sm:$0x1]
          %v1491 = vlaneseq
          %v1492 = vshrl.u32 %v1491, 7
          %v1493 = vsub.s32 0, %v1492
          %v1494 = vrot.slane %v1489, %v1493
          %v1496 = vadd.f32 %v1425, %v1494
          %v1497 = vadd.f32 %v1426, %v1494
          %v1498 = vadd.f32 %v1427, %v1494
          %v1499 = vadd.f32 %v1428, %v1494
          %v1500 = vadd.f32 %v1429, %v1494
          %v1501 = vadd.f32 %v1430, %v1494
          %v1502 = vadd.f32 %v1431, %v1494
          %v1503 = vadd.f32 %v1432, %v1494
          %v1504 = vadd.f32 %v1433, %v1494
          %v1505 = vadd.f32 %v1434, %v1494
          %v1506 = vadd.f32 %v1435, %v1494
          %v1507 = vadd.f32 %v1436, %v1494
          %v1508 = vadd.f32 %v1437, %v1494
          %v1509 = vadd.f32 %v1438, %v1494
          %v1510 = vadd.f32 %v1439, %v1494
          %v1511 = vadd.f32 %v1440, %v1494
          %v1512 = vadd.f32 %v1441, %v1494
          %v1513 = vadd.f32 %v1442, %v1494
          %v1514 = vadd.f32 %v1443, %v1494
          %v1515 = vadd.f32 %v1444, %v1494
          %v1516 = vadd.f32 %v1445, %v1494
          %v1517 = vadd.f32 %v1446, %v1494
          %v1518 = vadd.f32 %v1447, %v1494
          %v1519 = vadd.f32 %v1448, %v1494
          %v1520 = vadd.f32 %v1449, %v1494
          %v1521 = vadd.f32 %v1450, %v1494
          %v1522 = vadd.f32 %v1451, %v1494
          %v1523 = vadd.f32 %v1452, %v1494
          %v1524 = vadd.f32 %v1453, %v1494
          %v1525 = vadd.f32 %v1454, %v1494
          %v1526 = vadd.f32 %v1455, %v1494
          %v1527 = vadd.f32 %v1456, %v1494
          %v1528 = vadd.f32 %v1457, %v1494
          %v1529 = vadd.f32 %v1458, %v1494
          %v1530 = vadd.f32 %v1459, %v1494
          %v1531 = vadd.f32 %v1460, %v1494
          %v1532 = vadd.f32 %v1461, %v1494
          %v1533 = vadd.f32 %v1462, %v1494
          %v1534 = vadd.f32 %v1463, %v1494
          %v1535 = vadd.f32 %v1464, %v1494
          %v1536 = vadd.f32 %v1465, %v1494
          %v1537 = vadd.f32 %v1466, %v1494
          %v1538 = vadd.f32 %v1467, %v1494
          %v1539 = vadd.f32 %v1468, %v1494
          %v1540 = vadd.f32 %v1469, %v1494
          %v1541 = vadd.f32 %v1470, %v1494
          %v1542 = vadd.f32 %v1471, %v1494
          %v1543 = vadd.f32 %v1472, %v1494
          %v1544 = vadd.f32 %v1473, %v1494
          %v1545 = vadd.f32 %v1474, %v1494
          %v1546 = vadd.f32 %v1475, %v1494
          %v1547 = vadd.f32 %v1476, %v1494
          %v1548 = vadd.f32 %v1477, %v1494
          %v1549 = vadd.f32 %v1478, %v1494
          %v1550 = vadd.f32 %v1479, %v1494
          %v1551 = vadd.f32 %v1480, %v1494
          %v1552 = vadd.f32 %v1481, %v1494
          %v1553 = vadd.f32 %v1482, %v1494
          %v1554 = vadd.f32 %v1483, %v1494
          %v1555 = vadd.f32 %v1484, %v1494
          %v1556 = vadd.f32 %v1485, %v1494
          %v1557 = vadd.f32 %v1486, %v1494
          %v1558 = vadd.f32 %v1487, %v1494
          %v1559 = vadd.f32 %v1488, %v1494
          %v1560 = vpack.c.bf16 %v1497, %v1496
          %v1561 = vpack.c.bf16 %v1499, %v1498
          %v1562 = vpack.c.bf16 %v1501, %v1500
          %v1563 = vpack.c.bf16 %v1503, %v1502
          %v1564 = vpack.c.bf16 %v1505, %v1504
          %v1565 = vpack.c.bf16 %v1507, %v1506
          %v1566 = vpack.c.bf16 %v1509, %v1508
          %v1567 = vpack.c.bf16 %v1511, %v1510
          %v1568 = vpack.c.bf16 %v1513, %v1512
          %v1569 = vpack.c.bf16 %v1515, %v1514
          %v1570 = vpack.c.bf16 %v1517, %v1516
          %v1571 = vpack.c.bf16 %v1519, %v1518
          %v1572 = vpack.c.bf16 %v1521, %v1520
          %v1573 = vpack.c.bf16 %v1523, %v1522
          %v1574 = vpack.c.bf16 %v1525, %v1524
          %v1575 = vpack.c.bf16 %v1527, %v1526
          %v1576 = vpack.c.bf16 %v1529, %v1528
          %v1577 = vpack.c.bf16 %v1531, %v1530
          %v1578 = vpack.c.bf16 %v1533, %v1532
          %v1579 = vpack.c.bf16 %v1535, %v1534
          %v1580 = vpack.c.bf16 %v1537, %v1536
          %v1581 = vpack.c.bf16 %v1539, %v1538
          %v1582 = vpack.c.bf16 %v1541, %v1540
          %v1583 = vpack.c.bf16 %v1543, %v1542
          %v1584 = vpack.c.bf16 %v1545, %v1544
          %v1585 = vpack.c.bf16 %v1547, %v1546
          %v1586 = vpack.c.bf16 %v1549, %v1548
          %v1587 = vpack.c.bf16 %v1551, %v1550
          %v1588 = vpack.c.bf16 %v1553, %v1552
          %v1589 = vpack.c.bf16 %v1555, %v1554
          %v1590 = vpack.c.bf16 %v1557, %v1556
          %v1591 = vpack.c.bf16 %v1559, %v1558
          %v1624 = vunpack.c.l.b16 %v1560
          %v1625 = vunpack.c.h.b16 %v1560
          %v1626 = vunpack.c.l.b16 %v1561
          %v1627 = vunpack.c.h.b16 %v1561
          %v1628 = vunpack.c.l.b16 %v1562
          %v1629 = vunpack.c.h.b16 %v1562
          %v1630 = vunpack.c.l.b16 %v1563
          %v1631 = vunpack.c.h.b16 %v1563
          %v1632 = vunpack.c.l.b16 %v1564
          %v1633 = vunpack.c.h.b16 %v1564
          %v1634 = vunpack.c.l.b16 %v1565
          %v1635 = vunpack.c.h.b16 %v1565
          %v1636 = vunpack.c.l.b16 %v1566
          %v1637 = vunpack.c.h.b16 %v1566
          %v1638 = vunpack.c.l.b16 %v1567
          %v1639 = vunpack.c.h.b16 %v1567
          %v1640 = vunpack.c.l.b16 %v1568
          %v1641 = vunpack.c.h.b16 %v1568
          %v1642 = vunpack.c.l.b16 %v1569
          %v1643 = vunpack.c.h.b16 %v1569
          %v1644 = vunpack.c.l.b16 %v1570
          %v1645 = vunpack.c.h.b16 %v1570
          %v1646 = vunpack.c.l.b16 %v1571
          %v1647 = vunpack.c.h.b16 %v1571
          %v1648 = vunpack.c.l.b16 %v1572
          %v1649 = vunpack.c.h.b16 %v1572
          %v1650 = vunpack.c.l.b16 %v1573
          %v1651 = vunpack.c.h.b16 %v1573
          %v1652 = vunpack.c.l.b16 %v1574
          %v1653 = vunpack.c.h.b16 %v1574
          %v1654 = vunpack.c.l.b16 %v1575
          %v1655 = vunpack.c.h.b16 %v1575
          %v1656 = vunpack.c.l.b16 %v1576
          %v1657 = vunpack.c.h.b16 %v1576
          %v1658 = vunpack.c.l.b16 %v1577
          %v1659 = vunpack.c.h.b16 %v1577
          %v1660 = vunpack.c.l.b16 %v1578
          %v1661 = vunpack.c.h.b16 %v1578
          %v1662 = vunpack.c.l.b16 %v1579
          %v1663 = vunpack.c.h.b16 %v1579
          %v1664 = vunpack.c.l.b16 %v1580
          %v1665 = vunpack.c.h.b16 %v1580
          %v1666 = vunpack.c.l.b16 %v1581
          %v1667 = vunpack.c.h.b16 %v1581
          %v1668 = vunpack.c.l.b16 %v1582
          %v1669 = vunpack.c.h.b16 %v1582
          %v1670 = vunpack.c.l.b16 %v1583
          %v1671 = vunpack.c.h.b16 %v1583
          %v1672 = vunpack.c.l.b16 %v1584
          %v1673 = vunpack.c.h.b16 %v1584
          %v1674 = vunpack.c.l.b16 %v1585
          %v1675 = vunpack.c.h.b16 %v1585
          %v1676 = vunpack.c.l.b16 %v1586
          %v1677 = vunpack.c.h.b16 %v1586
          %v1678 = vunpack.c.l.b16 %v1587
          %v1679 = vunpack.c.h.b16 %v1587
          %v1680 = vunpack.c.l.b16 %v1588
          %v1681 = vunpack.c.h.b16 %v1588
          %v1682 = vunpack.c.l.b16 %v1589
          %v1683 = vunpack.c.h.b16 %v1589
          %v1684 = vunpack.c.l.b16 %v1590
          %v1685 = vunpack.c.h.b16 %v1590
          %v1686 = vunpack.c.l.b16 %v1591
          %v1687 = vunpack.c.h.b16 %v1591
          %v1688 = vpack.c.b16 %v1624, %v1624
          %v1689 = vpack.c.b16 %v1625, %v1625
          %v1690 = vpack.c.b16 %v1626, %v1626
          %v1691 = vpack.c.b16 %v1627, %v1627
          %v1692 = vpack.c.b16 %v1628, %v1628
          %v1693 = vpack.c.b16 %v1629, %v1629
          %v1694 = vpack.c.b16 %v1630, %v1630
          %v1695 = vpack.c.b16 %v1631, %v1631
          %v1696 = vpack.c.b16 %v1632, %v1632
          %v1697 = vpack.c.b16 %v1633, %v1633
          %v1698 = vpack.c.b16 %v1634, %v1634
          %v1699 = vpack.c.b16 %v1635, %v1635
          %v1700 = vpack.c.b16 %v1636, %v1636
          %v1701 = vpack.c.b16 %v1637, %v1637
          %v1702 = vpack.c.b16 %v1638, %v1638
          %v1703 = vpack.c.b16 %v1639, %v1639
          %v1704 = vpack.c.b16 %v1640, %v1640
          %v1705 = vpack.c.b16 %v1641, %v1641
          %v1706 = vpack.c.b16 %v1642, %v1642
          %v1707 = vpack.c.b16 %v1643, %v1643
          %v1708 = vpack.c.b16 %v1644, %v1644
          %v1709 = vpack.c.b16 %v1645, %v1645
          %v1710 = vpack.c.b16 %v1646, %v1646
          %v1711 = vpack.c.b16 %v1647, %v1647
          %v1712 = vpack.c.b16 %v1648, %v1648
          %v1713 = vpack.c.b16 %v1649, %v1649
          %v1714 = vpack.c.b16 %v1650, %v1650
          %v1715 = vpack.c.b16 %v1651, %v1651
          %v1716 = vpack.c.b16 %v1652, %v1652
          %v1717 = vpack.c.b16 %v1653, %v1653
          %v1718 = vpack.c.b16 %v1654, %v1654
          %v1719 = vpack.c.b16 %v1655, %v1655
          %v1720 = vpack.c.b16 %v1656, %v1656
          %v1721 = vpack.c.b16 %v1657, %v1657
          %v1722 = vpack.c.b16 %v1658, %v1658
          %v1723 = vpack.c.b16 %v1659, %v1659
          %v1724 = vpack.c.b16 %v1660, %v1660
          %v1725 = vpack.c.b16 %v1661, %v1661
          %v1726 = vpack.c.b16 %v1662, %v1662
          %v1727 = vpack.c.b16 %v1663, %v1663
          %v1728 = vpack.c.b16 %v1664, %v1664
          %v1729 = vpack.c.b16 %v1665, %v1665
          %v1730 = vpack.c.b16 %v1666, %v1666
          %v1731 = vpack.c.b16 %v1667, %v1667
          %v1732 = vpack.c.b16 %v1668, %v1668
          %v1733 = vpack.c.b16 %v1669, %v1669
          %v1734 = vpack.c.b16 %v1670, %v1670
          %v1735 = vpack.c.b16 %v1671, %v1671
          %v1736 = vpack.c.b16 %v1672, %v1672
          %v1737 = vpack.c.b16 %v1673, %v1673
          %v1738 = vpack.c.b16 %v1674, %v1674
          %v1739 = vpack.c.b16 %v1675, %v1675
          %v1740 = vpack.c.b16 %v1676, %v1676
          %v1741 = vpack.c.b16 %v1677, %v1677
          %v1742 = vpack.c.b16 %v1678, %v1678
          %v1743 = vpack.c.b16 %v1679, %v1679
          %v1744 = vpack.c.b16 %v1680, %v1680
          %v1745 = vpack.c.b16 %v1681, %v1681
          %v1746 = vpack.c.b16 %v1682, %v1682
          %v1747 = vpack.c.b16 %v1683, %v1683
          %v1748 = vpack.c.b16 %v1684, %v1684
          %v1749 = vpack.c.b16 %v1685, %v1685
          %v1750 = vpack.c.b16 %v1686, %v1686
          %v1751 = vpack.c.b16 %v1687, %v1687
          %vm1816 = vcmask 519168
          %1817 = vst.msk [vmem:[%s321] sm:$0xf] %vm1816, %v1688
          %1818 = vst.msk [vmem:[%s321 + $0x4] sm:$0xf] %vm1816, %v1689
          %1819 = vst.msk [vmem:[%s321 + $0x8] sm:$0xf] %vm1816, %v1690
          %1820 = vst.msk [vmem:[%s321 + $0xc] sm:$0xf] %vm1816, %v1691
          %1821 = vst.msk [vmem:[%s321 + $0x10] sm:$0xf] %vm1816, %v1692
          %1822 = vst.msk [vmem:[%s321 + $0x14] sm:$0xf] %vm1816, %v1693
          %1823 = vst.msk [vmem:[%s321 + $0x18] sm:$0xf] %vm1816, %v1694
          %1824 = vst.msk [vmem:[%s321 + $0x1c] sm:$0xf] %vm1816, %v1695
          %1825 = vst.msk [vmem:[%s321 + $0x20] sm:$0xf] %vm1816, %v1696
          %1826 = vst.msk [vmem:[%s321 + $0x24] sm:$0xf] %vm1816, %v1697
          %1827 = vst.msk [vmem:[%s321 + $0x28] sm:$0xf] %vm1816, %v1698
          %1828 = vst.msk [vmem:[%s321 + $0x2c] sm:$0xf] %vm1816, %v1699
          %1829 = vst.msk [vmem:[%s321 + $0x30] sm:$0xf] %vm1816, %v1700
          %1830 = vst.msk [vmem:[%s321 + $0x34] sm:$0xf] %vm1816, %v1701
          %1831 = vst.msk [vmem:[%s321 + $0x38] sm:$0xf] %vm1816, %v1702
          %1832 = vst.msk [vmem:[%s321 + $0x3c] sm:$0xf] %vm1816, %v1703
          %1833 = vst.msk [vmem:[%s321 + $0x40] sm:$0xf] %vm1816, %v1704
          %1834 = vst.msk [vmem:[%s321 + $0x44] sm:$0xf] %vm1816, %v1705
          %1835 = vst.msk [vmem:[%s321 + $0x48] sm:$0xf] %vm1816, %v1706
          %1836 = vst.msk [vmem:[%s321 + $0x4c] sm:$0xf] %vm1816, %v1707
          %1837 = vst.msk [vmem:[%s321 + $0x50] sm:$0xf] %vm1816, %v1708
          %1838 = vst.msk [vmem:[%s321 + $0x54] sm:$0xf] %vm1816, %v1709
          %1839 = vst.msk [vmem:[%s321 + $0x58] sm:$0xf] %vm1816, %v1710
          %1840 = vst.msk [vmem:[%s321 + $0x5c] sm:$0xf] %vm1816, %v1711
          %1841 = vst.msk [vmem:[%s321 + $0x60] sm:$0xf] %vm1816, %v1712
          %1842 = vst.msk [vmem:[%s321 + $0x64] sm:$0xf] %vm1816, %v1713
          %1843 = vst.msk [vmem:[%s321 + $0x68] sm:$0xf] %vm1816, %v1714
          %1844 = vst.msk [vmem:[%s321 + $0x6c] sm:$0xf] %vm1816, %v1715
          %1845 = vst.msk [vmem:[%s321 + $0x70] sm:$0xf] %vm1816, %v1716
          %1846 = vst.msk [vmem:[%s321 + $0x74] sm:$0xf] %vm1816, %v1717
          %1847 = vst.msk [vmem:[%s321 + $0x78] sm:$0xf] %vm1816, %v1718
          %1848 = vst.msk [vmem:[%s321 + $0x7c] sm:$0xf] %vm1816, %v1719
          %1849 = vst.msk [vmem:[%s321 + $0x80] sm:$0xf] %vm1816, %v1720
          %1850 = vst.msk [vmem:[%s321 + $0x84] sm:$0xf] %vm1816, %v1721
          %1851 = vst.msk [vmem:[%s321 + $0x88] sm:$0xf] %vm1816, %v1722
          %1852 = vst.msk [vmem:[%s321 + $0x8c] sm:$0xf] %vm1816, %v1723
          %1853 = vst.msk [vmem:[%s321 + $0x90] sm:$0xf] %vm1816, %v1724
          %1854 = vst.msk [vmem:[%s321 + $0x94] sm:$0xf] %vm1816, %v1725
          %1855 = vst.msk [vmem:[%s321 + $0x98] sm:$0xf] %vm1816, %v1726
          %1856 = vst.msk [vmem:[%s321 + $0x9c] sm:$0xf] %vm1816, %v1727
          %1857 = vst.msk [vmem:[%s321 + $0xa0] sm:$0xf] %vm1816, %v1728
          %1858 = vst.msk [vmem:[%s321 + $0xa4] sm:$0xf] %vm1816, %v1729
          %1859 = vst.msk [vmem:[%s321 + $0xa8] sm:$0xf] %vm1816, %v1730
          %1860 = vst.msk [vmem:[%s321 + $0xac] sm:$0xf] %vm1816, %v1731
          %1861 = vst.msk [vmem:[%s321 + $0xb0] sm:$0xf] %vm1816, %v1732
          %1862 = vst.msk [vmem:[%s321 + $0xb4] sm:$0xf] %vm1816, %v1733
          %1863 = vst.msk [vmem:[%s321 + $0xb8] sm:$0xf] %vm1816, %v1734
          %1864 = vst.msk [vmem:[%s321 + $0xbc] sm:$0xf] %vm1816, %v1735
          %1865 = vst.msk [vmem:[%s321 + $0xc0] sm:$0xf] %vm1816, %v1736
          %1866 = vst.msk [vmem:[%s321 + $0xc4] sm:$0xf] %vm1816, %v1737
          %1867 = vst.msk [vmem:[%s321 + $0xc8] sm:$0xf] %vm1816, %v1738
          %1868 = vst.msk [vmem:[%s321 + $0xcc] sm:$0xf] %vm1816, %v1739
          %1869 = vst.msk [vmem:[%s321 + $0xd0] sm:$0xf] %vm1816, %v1740
          %1870 = vst.msk [vmem:[%s321 + $0xd4] sm:$0xf] %vm1816, %v1741
          %1871 = vst.msk [vmem:[%s321 + $0xd8] sm:$0xf] %vm1816, %v1742
          %1872 = vst.msk [vmem:[%s321 + $0xdc] sm:$0xf] %vm1816, %v1743
          %1873 = vst.msk [vmem:[%s321 + $0xe0] sm:$0xf] %vm1816, %v1744
          %1874 = vst.msk [vmem:[%s321 + $0xe4] sm:$0xf] %vm1816, %v1745
          %1875 = vst.msk [vmem:[%s321 + $0xe8] sm:$0xf] %vm1816, %v1746
          %1876 = vst.msk [vmem:[%s321 + $0xec] sm:$0xf] %vm1816, %v1747
          %1877 = vst.msk [vmem:[%s321 + $0xf0] sm:$0xf] %vm1816, %v1748
          %1878 = vst.msk [vmem:[%s321 + $0xf4] sm:$0xf] %vm1816, %v1749
          %1879 = vst.msk [vmem:[%s321 + $0xf8] sm:$0xf] %vm1816, %v1750
          %1880 = vst.msk [vmem:[%s321 + $0xfc] sm:$0xf] %vm1816, %v1751
          %v1881 = vsel %vm1357, %v1496, 0.0
          %v1882 = vsel %vm1357, %v1497, 0.0
          %v1883 = vadd.f32 %v1881, %v1882
          %v1884 = vsel %vm1357, %v1498, 0.0
          %v1885 = vadd.f32 %v1883, %v1884
          %v1886 = vsel %vm1357, %v1499, 0.0
          %v1887 = vadd.f32 %v1885, %v1886
          %v1888 = vsel %vm1357, %v1500, 0.0
          %v1889 = vadd.f32 %v1887, %v1888
          %v1890 = vsel %vm1357, %v1501, 0.0
          %v1891 = vadd.f32 %v1889, %v1890
          %v1892 = vsel %vm1357, %v1502, 0.0
          %v1893 = vadd.f32 %v1891, %v1892
          %v1894 = vsel %vm1357, %v1503, 0.0
          %v1895 = vadd.f32 %v1893, %v1894
          %v1896 = vsel %vm1357, %v1504, 0.0
          %v1897 = vadd.f32 %v1895, %v1896
          %v1898 = vsel %vm1357, %v1505, 0.0
          %v1899 = vadd.f32 %v1897, %v1898
          %v1900 = vsel %vm1357, %v1506, 0.0
          %v1901 = vadd.f32 %v1899, %v1900
          %v1902 = vsel %vm1357, %v1507, 0.0
          %v1903 = vadd.f32 %v1901, %v1902
          %v1904 = vsel %vm1357, %v1508, 0.0
          %v1905 = vadd.f32 %v1903, %v1904
          %v1906 = vsel %vm1357, %v1509, 0.0
          %v1907 = vadd.f32 %v1905, %v1906
          %v1908 = vsel %vm1357, %v1510, 0.0
          %v1909 = vadd.f32 %v1907, %v1908
          %v1910 = vsel %vm1357, %v1511, 0.0
          %v1911 = vadd.f32 %v1909, %v1910
          %v1912 = vsel %vm1357, %v1512, 0.0
          %v1913 = vadd.f32 %v1911, %v1912
          %v1914 = vsel %vm1357, %v1513, 0.0
          %v1915 = vadd.f32 %v1913, %v1914
          %v1916 = vsel %vm1357, %v1514, 0.0
          %v1917 = vadd.f32 %v1915, %v1916
          %v1918 = vsel %vm1357, %v1515, 0.0
          %v1919 = vadd.f32 %v1917, %v1918
          %v1920 = vsel %vm1357, %v1516, 0.0
          %v1921 = vadd.f32 %v1919, %v1920
          %v1922 = vsel %vm1357, %v1517, 0.0
          %v1923 = vadd.f32 %v1921, %v1922
          %v1924 = vsel %vm1357, %v1518, 0.0
          %v1925 = vadd.f32 %v1923, %v1924
          %v1926 = vsel %vm1357, %v1519, 0.0
          %v1927 = vadd.f32 %v1925, %v1926
          %v1928 = vsel %vm1357, %v1520, 0.0
          %v1929 = vadd.f32 %v1927, %v1928
          %v1930 = vsel %vm1357, %v1521, 0.0
          %v1931 = vadd.f32 %v1929, %v1930
          %v1932 = vsel %vm1357, %v1522, 0.0
          %v1933 = vadd.f32 %v1931, %v1932
          %v1934 = vsel %vm1357, %v1523, 0.0
          %v1935 = vadd.f32 %v1933, %v1934
          %v1936 = vsel %vm1357, %v1524, 0.0
          %v1937 = vadd.f32 %v1935, %v1936
          %v1938 = vsel %vm1357, %v1525, 0.0
          %v1939 = vadd.f32 %v1937, %v1938
          %v1940 = vsel %vm1357, %v1526, 0.0
          %v1941 = vadd.f32 %v1939, %v1940
          %v1942 = vsel %vm1357, %v1527, 0.0
          %v1943 = vadd.f32 %v1941, %v1942
          %v1944 = vsel %vm1357, %v1528, 0.0
          %v1945 = vadd.f32 %v1943, %v1944
          %v1946 = vsel %vm1357, %v1529, 0.0
          %v1947 = vadd.f32 %v1945, %v1946
          %v1948 = vsel %vm1357, %v1530, 0.0
          %v1949 = vadd.f32 %v1947, %v1948
          %v1950 = vsel %vm1357, %v1531, 0.0
          %v1951 = vadd.f32 %v1949, %v1950
          %v1952 = vsel %vm1357, %v1532, 0.0
          %v1953 = vadd.f32 %v1951, %v1952
          %v1954 = vsel %vm1357, %v1533, 0.0
          %v1955 = vadd.f32 %v1953, %v1954
          %v1956 = vsel %vm1357, %v1534, 0.0
          %v1957 = vadd.f32 %v1955, %v1956
          %v1958 = vsel %vm1357, %v1535, 0.0
          %v1959 = vadd.f32 %v1957, %v1958
          %v1960 = vsel %vm1357, %v1536, 0.0
          %v1961 = vadd.f32 %v1959, %v1960
          %v1962 = vsel %vm1357, %v1537, 0.0
          %v1963 = vadd.f32 %v1961, %v1962
          %v1964 = vsel %vm1357, %v1538, 0.0
          %v1965 = vadd.f32 %v1963, %v1964
          %v1966 = vsel %vm1357, %v1539, 0.0
          %v1967 = vadd.f32 %v1965, %v1966
          %v1968 = vsel %vm1357, %v1540, 0.0
          %v1969 = vadd.f32 %v1967, %v1968
          %v1970 = vsel %vm1357, %v1541, 0.0
          %v1971 = vadd.f32 %v1969, %v1970
          %v1972 = vsel %vm1357, %v1542, 0.0
          %v1973 = vadd.f32 %v1971, %v1972
          %v1974 = vsel %vm1357, %v1543, 0.0
          %v1975 = vadd.f32 %v1973, %v1974
          %v1976 = vsel %vm1357, %v1544, 0.0
          %v1977 = vadd.f32 %v1975, %v1976
          %v1978 = vsel %vm1357, %v1545, 0.0
          %v1979 = vadd.f32 %v1977, %v1978
          %v1980 = vsel %vm1357, %v1546, 0.0
          %v1981 = vadd.f32 %v1979, %v1980
          %v1982 = vsel %vm1357, %v1547, 0.0
          %v1983 = vadd.f32 %v1981, %v1982
          %v1984 = vsel %vm1357, %v1548, 0.0
          %v1985 = vadd.f32 %v1983, %v1984
          %v1986 = vsel %vm1357, %v1549, 0.0
          %v1987 = vadd.f32 %v1985, %v1986
          %v1988 = vsel %vm1357, %v1550, 0.0
          %v1989 = vadd.f32 %v1987, %v1988
          %v1990 = vsel %vm1357, %v1551, 0.0
          %v1991 = vadd.f32 %v1989, %v1990
          %v1992 = vsel %vm1357, %v1552, 0.0
          %v1993 = vadd.f32 %v1991, %v1992
          %v1994 = vsel %vm1357, %v1553, 0.0
          %v1995 = vadd.f32 %v1993, %v1994
          %v1996 = vsel %vm1357, %v1554, 0.0
          %v1997 = vadd.f32 %v1995, %v1996
          %v1998 = vsel %vm1357, %v1555, 0.0
          %v1999 = vadd.f32 %v1997, %v1998
          %v2000 = vsel %vm1357, %v1556, 0.0
          %v2001 = vadd.f32 %v1999, %v2000
          %v2002 = vsel %vm1357, %v1557, 0.0
          %v2003 = vadd.f32 %v2001, %v2002
          %v2004 = vsel %vm1357, %v1558, 0.0
          %v2005 = vadd.f32 %v2003, %v2004
          %v2006 = vsel %vm1357, %v1559, 0.0
          %v2007 = vadd.f32 %v2005, %v2006
          %v2008 = vrot.slane %v2007, 4
          %v2009 = vadd.f32 %v2007, %v2008
          %v2010 = vrot.slane %v2009, 2
          %v2011 = vadd.f32 %v2009, %v2010
          %v2012 = vrot.slane %v2011, 1
          %v2013 = vadd.f32 %v2011, %v2012
          %vm2014 = vcmask 516096
          %2015 = vst.msk [vmem:[%s327] sm:$0x1] %vm2014, %v2013
          %v2016 = vmul.f32 %v1496, %v1496
          %v2017 = vmul.f32 %v1497, %v1497
          %v2018 = vmul.f32 %v1498, %v1498
          %v2019 = vmul.f32 %v1499, %v1499
          %v2020 = vmul.f32 %v1500, %v1500
          %v2021 = vmul.f32 %v1501, %v1501
          %v2022 = vmul.f32 %v1502, %v1502
          %v2023 = vmul.f32 %v1503, %v1503
          %v2024 = vmul.f32 %v1504, %v1504
          %v2025 = vmul.f32 %v1505, %v1505
          %v2026 = vmul.f32 %v1506, %v1506
          %v2027 = vmul.f32 %v1507, %v1507
          %v2028 = vmul.f32 %v1508, %v1508
          %v2029 = vmul.f32 %v1509, %v1509
          %v2030 = vmul.f32 %v1510, %v1510
          %v2031 = vmul.f32 %v1511, %v1511
          %v2032 = vmul.f32 %v1512, %v1512
          %v2033 = vmul.f32 %v1513, %v1513
          %v2034 = vmul.f32 %v1514, %v1514
          %v2035 = vmul.f32 %v1515, %v1515
          %v2036 = vmul.f32 %v1516, %v1516
          %v2037 = vmul.f32 %v1517, %v1517
          %v2038 = vmul.f32 %v1518, %v1518
          %v2039 = vmul.f32 %v1519, %v1519
          %v2040 = vmul.f32 %v1520, %v1520
          %v2041 = vmul.f32 %v1521, %v1521
          %v2042 = vmul.f32 %v1522, %v1522
          %v2043 = vmul.f32 %v1523, %v1523
          %v2044 = vmul.f32 %v1524, %v1524
          %v2045 = vmul.f32 %v1525, %v1525
          %v2046 = vmul.f32 %v1526, %v1526
          %v2047 = vmul.f32 %v1527, %v1527
          %v2048 = vmul.f32 %v1528, %v1528
          %v2049 = vmul.f32 %v1529, %v1529
          %v2050 = vmul.f32 %v1530, %v1530
          %v2051 = vmul.f32 %v1531, %v1531
          %v2052 = vmul.f32 %v1532, %v1532
          %v2053 = vmul.f32 %v1533, %v1533
          %v2054 = vmul.f32 %v1534, %v1534
          %v2055 = vmul.f32 %v1535, %v1535
          %v2056 = vmul.f32 %v1536, %v1536
          %v2057 = vmul.f32 %v1537, %v1537
          %v2058 = vmul.f32 %v1538, %v1538
          %v2059 = vmul.f32 %v1539, %v1539
          %v2060 = vmul.f32 %v1540, %v1540
          %v2061 = vmul.f32 %v1541, %v1541
          %v2062 = vmul.f32 %v1542, %v1542
          %v2063 = vmul.f32 %v1543, %v1543
          %v2064 = vmul.f32 %v1544, %v1544
          %v2065 = vmul.f32 %v1545, %v1545
          %v2066 = vmul.f32 %v1546, %v1546
          %v2067 = vmul.f32 %v1547, %v1547
          %v2068 = vmul.f32 %v1548, %v1548
          %v2069 = vmul.f32 %v1549, %v1549
          %v2070 = vmul.f32 %v1550, %v1550
          %v2071 = vmul.f32 %v1551, %v1551
          %v2072 = vmul.f32 %v1552, %v1552
          %v2073 = vmul.f32 %v1553, %v1553
          %v2074 = vmul.f32 %v1554, %v1554
          %v2075 = vmul.f32 %v1555, %v1555
          %v2076 = vmul.f32 %v1556, %v1556
          %v2077 = vmul.f32 %v1557, %v1557
          %v2078 = vmul.f32 %v1558, %v1558
          %v2079 = vmul.f32 %v1559, %v1559
          %v2080 = vsel %vm1357, %v2016, 0.0
          %v2081 = vsel %vm1357, %v2017, 0.0
          %v2082 = vadd.f32 %v2080, %v2081
          %v2083 = vsel %vm1357, %v2018, 0.0
          %v2084 = vadd.f32 %v2082, %v2083
          %v2085 = vsel %vm1357, %v2019, 0.0
          %v2086 = vadd.f32 %v2084, %v2085
          %v2087 = vsel %vm1357, %v2020, 0.0
          %v2088 = vadd.f32 %v2086, %v2087
          %v2089 = vsel %vm1357, %v2021, 0.0
          %v2090 = vadd.f32 %v2088, %v2089
          %v2091 = vsel %vm1357, %v2022, 0.0
          %v2092 = vadd.f32 %v2090, %v2091
          %v2093 = vsel %vm1357, %v2023, 0.0
          %v2094 = vadd.f32 %v2092, %v2093
          %v2095 = vsel %vm1357, %v2024, 0.0
          %v2096 = vadd.f32 %v2094, %v2095
          %v2097 = vsel %vm1357, %v2025, 0.0
          %v2098 = vadd.f32 %v2096, %v2097
          %v2099 = vsel %vm1357, %v2026, 0.0
          %v2100 = vadd.f32 %v2098, %v2099
          %v2101 = vsel %vm1357, %v2027, 0.0
          %v2102 = vadd.f32 %v2100, %v2101
          %v2103 = vsel %vm1357, %v2028, 0.0
          %v2104 = vadd.f32 %v2102, %v2103
          %v2105 = vsel %vm1357, %v2029, 0.0
          %v2106 = vadd.f32 %v2104, %v2105
          %v2107 = vsel %vm1357, %v2030, 0.0
          %v2108 = vadd.f32 %v2106, %v2107
          %v2109 = vsel %vm1357, %v2031, 0.0
          %v2110 = vadd.f32 %v2108, %v2109
          %v2111 = vsel %vm1357, %v2032, 0.0
          %v2112 = vadd.f32 %v2110, %v2111
          %v2113 = vsel %vm1357, %v2033, 0.0
          %v2114 = vadd.f32 %v2112, %v2113
          %v2115 = vsel %vm1357, %v2034, 0.0
          %v2116 = vadd.f32 %v2114, %v2115
          %v2117 = vsel %vm1357, %v2035, 0.0
          %v2118 = vadd.f32 %v2116, %v2117
          %v2119 = vsel %vm1357, %v2036, 0.0
          %v2120 = vadd.f32 %v2118, %v2119
          %v2121 = vsel %vm1357, %v2037, 0.0
          %v2122 = vadd.f32 %v2120, %v2121
          %v2123 = vsel %vm1357, %v2038, 0.0
          %v2124 = vadd.f32 %v2122, %v2123
          %v2125 = vsel %vm1357, %v2039, 0.0
          %v2126 = vadd.f32 %v2124, %v2125
          %v2127 = vsel %vm1357, %v2040, 0.0
          %v2128 = vadd.f32 %v2126, %v2127
          %v2129 = vsel %vm1357, %v2041, 0.0
          %v2130 = vadd.f32 %v2128, %v2129
          %v2131 = vsel %vm1357, %v2042, 0.0
          %v2132 = vadd.f32 %v2130, %v2131
          %v2133 = vsel %vm1357, %v2043, 0.0
          %v2134 = vadd.f32 %v2132, %v2133
          %v2135 = vsel %vm1357, %v2044, 0.0
          %v2136 = vadd.f32 %v2134, %v2135
          %v2137 = vsel %vm1357, %v2045, 0.0
          %v2138 = vadd.f32 %v2136, %v2137
          %v2139 = vsel %vm1357, %v2046, 0.0
          %v2140 = vadd.f32 %v2138, %v2139
          %v2141 = vsel %vm1357, %v2047, 0.0
          %v2142 = vadd.f32 %v2140, %v2141
          %v2143 = vsel %vm1357, %v2048, 0.0
          %v2144 = vadd.f32 %v2142, %v2143
          %v2145 = vsel %vm1357, %v2049, 0.0
          %v2146 = vadd.f32 %v2144, %v2145
          %v2147 = vsel %vm1357, %v2050, 0.0
          %v2148 = vadd.f32 %v2146, %v2147
          %v2149 = vsel %vm1357, %v2051, 0.0
          %v2150 = vadd.f32 %v2148, %v2149
          %v2151 = vsel %vm1357, %v2052, 0.0
          %v2152 = vadd.f32 %v2150, %v2151
          %v2153 = vsel %vm1357, %v2053, 0.0
          %v2154 = vadd.f32 %v2152, %v2153
          %v2155 = vsel %vm1357, %v2054, 0.0
          %v2156 = vadd.f32 %v2154, %v2155
          %v2157 = vsel %vm1357, %v2055, 0.0
          %v2158 = vadd.f32 %v2156, %v2157
          %v2159 = vsel %vm1357, %v2056, 0.0
          %v2160 = vadd.f32 %v2158, %v2159
          %v2161 = vsel %vm1357, %v2057, 0.0
          %v2162 = vadd.f32 %v2160, %v2161
          %v2163 = vsel %vm1357, %v2058, 0.0
          %v2164 = vadd.f32 %v2162, %v2163
          %v2165 = vsel %vm1357, %v2059, 0.0
          %v2166 = vadd.f32 %v2164, %v2165
          %v2167 = vsel %vm1357, %v2060, 0.0
          %v2168 = vadd.f32 %v2166, %v2167
          %v2169 = vsel %vm1357, %v2061, 0.0
          %v2170 = vadd.f32 %v2168, %v2169
          %v2171 = vsel %vm1357, %v2062, 0.0
          %v2172 = vadd.f32 %v2170, %v2171
          %v2173 = vsel %vm1357, %v2063, 0.0
          %v2174 = vadd.f32 %v2172, %v2173
          %v2175 = vsel %vm1357, %v2064, 0.0
          %v2176 = vadd.f32 %v2174, %v2175
          %v2177 = vsel %vm1357, %v2065, 0.0
          %v2178 = vadd.f32 %v2176, %v2177
          %v2179 = vsel %vm1357, %v2066, 0.0
          %v2180 = vadd.f32 %v2178, %v2179
          %v2181 = vsel %vm1357, %v2067, 0.0
          %v2182 = vadd.f32 %v2180, %v2181
          %v2183 = vsel %vm1357, %v2068, 0.0
          %v2184 = vadd.f32 %v2182, %v2183
          %v2185 = vsel %vm1357, %v2069, 0.0
          %v2186 = vadd.f32 %v2184, %v2185
          %v2187 = vsel %vm1357, %v2070, 0.0
          %v2188 = vadd.f32 %v2186, %v2187
          %v2189 = vsel %vm1357, %v2071, 0.0
          %v2190 = vadd.f32 %v2188, %v2189
          %v2191 = vsel %vm1357, %v2072, 0.0
          %v2192 = vadd.f32 %v2190, %v2191
          %v2193 = vsel %vm1357, %v2073, 0.0
          %v2194 = vadd.f32 %v2192, %v2193
          %v2195 = vsel %vm1357, %v2074, 0.0
          %v2196 = vadd.f32 %v2194, %v2195
          %v2197 = vsel %vm1357, %v2075, 0.0
          %v2198 = vadd.f32 %v2196, %v2197
          %v2199 = vsel %vm1357, %v2076, 0.0
          %v2200 = vadd.f32 %v2198, %v2199
          %v2201 = vsel %vm1357, %v2077, 0.0
          %v2202 = vadd.f32 %v2200, %v2201
          %v2203 = vsel %vm1357, %v2078, 0.0
          %v2204 = vadd.f32 %v2202, %v2203
          %v2205 = vsel %vm1357, %v2079, 0.0
          %v2206 = vadd.f32 %v2204, %v2205
          %v2207 = vrot.slane %v2206, 4
          %v2208 = vadd.f32 %v2206, %v2207
          %v2209 = vrot.slane %v2208, 2
          %v2210 = vadd.f32 %v2208, %v2209
          %v2211 = vrot.slane %v2210, 1
          %v2212 = vadd.f32 %v2210, %v2211
          %2213 = vst.msk [vmem:[%s333] sm:$0x1] %vm2014, %v2212
        $region52: #{stem_fwd.3} parent=31 // pred_fallthru
          _
        %s2214 = sand.u32 %s138, 1
        %s2215 = scalar_lea.sflag [#allocation5], %s2214
        %s2216 = sand.u32 %s138, 1
        %s2217 = smul.addr %s2216, 256
        %s2218 = scalar_lea.vmem [#allocation9], %s2217
        %s2219 = sand.u32 %s27, 1
        %s2220 = scalar_lea.sflag [#allocation11], %s2219
        %s2221 = sand.u32 %s166, 1
        %s2222 = scalar_lea.vmem [#allocation10], %s2221
        %s2223 = sand.u32 %s27, 1
        %s2224 = scalar_lea.sflag [#allocation11], %s2223
        %s2225 = sand.u32 %s194, 1
        %s2226 = scalar_lea.vmem [#allocation12], %s2225
        // Predicated region
        $region53: #{stem_fwd.3} parent=31 // pred_check
          %p2227 = pneg %p148
        $region54: #{stem_fwd.3} parent=31 // pred_check_branch
          %2229 = sbr.rel (%p2227) target = $region56
        $region55: #{stem_fwd.3} parent=31 // pred_region
          %s2230 = smul.u32 64, %s32
          %s2232 = ssub.s32 4096, 4096
          %2233 = vsyncadd %s2215, %s2232
          %s2234 = sadd.s32 %s33, %s2230
          %s2235 = smul.addr %s2234, 64
          %s2236 = scalar_lea.hbm %s3, %s2235
          %s2237 = sshll.u32 %s2218, 4
          %s2238 = int_to_ptr.vmem [resolvable:$true] %s2237
          %2243 = dma.vmem_to_hbm [thread:$0]  %s2238, 4096, %s2236, %s2215, 64, 64, 4
        $region56: #{stem_fwd.3} parent=31 // pred_fallthru
          _
        // Predicated region
        $region57: #{stem_fwd.3} parent=31 // pred_check
          %p2244 = pneg %p176
        $region58: #{stem_fwd.3} parent=31 // pred_check_branch
          %2246 = sbr.rel (%p2244) target = $region60
        $region59: #{stem_fwd.3} parent=31 // pred_region
          %s2248 = ssub.s32 16, 16
          %2249 = vsyncadd %s2220, %s2248
          %s2250 = sadd.s32 %s33, %s32
          %s2251 = smul.addr %s2250, 16
          %s2252 = scalar_lea.hbm %s4, %s2251
          %s2254 = sshll.u32 %s2222, 4
          %s2255 = int_to_ptr.vmem [resolvable:$true] %s2254
          %2257 = dma.vmem_to_hbm [thread:$0]  %s2255, 16, %s2252, %s2220
        $region60: #{stem_fwd.3} parent=31 // pred_fallthru
          _
        // Predicated region
        $region61: #{stem_fwd.3} parent=31 // pred_check
          %p2258 = pneg %p204
        $region62: #{stem_fwd.3} parent=31 // pred_check_branch
          %2260 = sbr.rel (%p2258) target = $region64
        $region63: #{stem_fwd.3} parent=31 // pred_region
          %s2262 = ssub.s32 16, 16
          %2263 = vsyncadd %s2224, %s2262
          %s2264 = sadd.s32 %s33, %s32
          %s2265 = smul.addr %s2264, 16
          %s2266 = scalar_lea.hbm %s5, %s2265
          %s2268 = sshll.u32 %s2226, 4
          %s2269 = int_to_ptr.vmem [resolvable:$true] %s2268
          %2271 = dma.vmem_to_hbm [thread:$0]  %s2269, 16, %s2266, %s2224
        $region64: #{stem_fwd.3} parent=31 // pred_fallthru
          _
      $region32: #{stem_fwd.3} parent=5 // pred_fallthru
        _
      %p2272 = scmp.le.s32.totalorder 2, %s22
      // Predicated region
      $region65: #{stem_fwd.3} parent=5 // pred_check
        %p2273 = pneg %p2272
      $region66: #{stem_fwd.3} parent=5 // pred_check_branch
        %2275 = sbr.rel (%p2273) target = $region68
      $region67: #{stem_fwd.3} parent=5 // pred_region
        %s2276 = ssub.s32 %s22, 2
        // Predicated region
        $region69: #{stem_fwd.3} parent=67 // pred_check
          %p2277 = pneg %p154
        $region70: #{stem_fwd.3} parent=67 // pred_check_branch
          %2279 = sbr.rel (%p2277) target = $region72
        $region71: #{stem_fwd.3} parent=67 // pred_region
          %s2280 = sand.u32 %s139, 1
          %s2281 = scalar_lea.sflag [#allocation5], %s2280
          %s2282 = sand.u32 %s139, 1
          %s2283 = smul.addr %s2282, 256
          %s2284 = scalar_lea.vmem [#allocation9], %s2283
          %2285 = dma.done %s2281, 4096
        $region72: #{stem_fwd.3} parent=67 // pred_fallthru
          _
        // Predicated region
        $region73: #{stem_fwd.3} parent=67 // pred_check
          %p2286 = pneg %p182
        $region74: #{stem_fwd.3} parent=67 // pred_check_branch
          %2288 = sbr.rel (%p2286) target = $region76
        $region75: #{stem_fwd.3} parent=67 // pred_region
          %s2289 = sand.u32 %s28, 1
          %s2290 = scalar_lea.sflag [#allocation11], %s2289
          %s2291 = sand.u32 %s167, 1
          %s2292 = scalar_lea.vmem [#allocation10], %s2291
          %2293 = dma.done %s2290, 16
        $region76: #{stem_fwd.3} parent=67 // pred_fallthru
          _
        // Predicated region
        $region77: #{stem_fwd.3} parent=67 // pred_check
          %p2294 = pneg %p210
        $region78: #{stem_fwd.3} parent=67 // pred_check_branch
          %2296 = sbr.rel (%p2294) target = $region80
        $region79: #{stem_fwd.3} parent=67 // pred_region
          %s2297 = sand.u32 %s28, 1
          %s2298 = scalar_lea.sflag [#allocation11], %s2297
          %s2299 = sand.u32 %s195, 1
          %s2300 = scalar_lea.vmem [#allocation12], %s2299
          %2301 = dma.done %s2298, 16
        $region80: #{stem_fwd.3} parent=67 // pred_fallthru
          _
      $region68: #{stem_fwd.3} parent=5 // pred_fallthru
        _
    $region6: #{stem_fwd.3} parent=1 // loop_footer
      %s26 = sadd.s32 1, %s22
    $region7: #{stem_fwd.3} parent=1 // loop_footer_branch
      %21 = sbr.rel target = $region3
    $region8: #{stem_fwd.3} parent=1 // loop_exit
      _
    %2302 = vsyncpa [#allocation4], 1
    %s2303 = scalar_lea.sflag [#allocation4], 1
    %2304 = vsyncpa %s2303, 1
    %2305 = vsyncpa [#allocation7], 1
    %2306 = vsyncpa [#allocation5], 1
    %s2307 = scalar_lea.sflag [#allocation5], 1
    %2308 = vsyncpa %s2307, 1
    %2309 = vsyncpa [#allocation11], 1
    %s2310 = scalar_lea.sflag [#allocation11], 1
    %2311 = vsyncpa %s2310, 1

// kernel: stem_fwd.5
$region0: #{stem_fwd.5}
  #allocation0 [shape = 'u32[]', space=smem, size = 0x4, offset = 0x4, fixed_abs, tag = 'smem constant byte address 0x4 - core index']
  #allocation1 [shape = 'u32[144,128]{1,0:T(1,128)}', space=vmem, size = 0x12000, scoped, tag = 'internal scratch']
  %s0 = inlined_call_operand.hbm [shape: bf16[256,64], index: 0, kind: input, shape index: {}]
  %s1 = inlined_call_operand.hbm [shape: f32[1,64], index: 1, kind: output, shape index: {0}]
  %s2 = inlined_call_operand.hbm [shape: f32[1,64], index: 2, kind: output, shape index: {1}]
  %3 = xla_tuple %s1, %s2
  %s4 = sld [smem:[#allocation0]]
  $region30: #{stem_fwd.5} parent=0
    _
  %s6 = ssub.s32 1, %s4
  %s7 = scalar_select 0, %s6, %s4
  $region1: #{stem_fwd.5} parent=0
    #allocation2 [shape = 'u8[65536]{0}', space=vmem, size = 0x10000, scoped, tag = 'input window, operand 0, single buffered']
    #allocation3 [shape = 's32[1]{0}', space=sflag, size = 0x4, scoped, tag = 'scoped memory for stem_fwd.5']
    #allocation4 [shape = 's32[1]{0}', space=sflag, size = 0x4, scoped, tag = 'scoped memory for stem_fwd.5']
    #allocation5 [shape = 'u8[512]{0}', space=vmem, size = 0x400, scoped, tag = 'output window, operand 0, single buffered']
    #allocation6 [shape = 'u8[512]{0}', space=vmem, size = 0x400, scoped, tag = 'output window, operand 1, single buffered']
    #allocation7 [shape = 's32[1]{0}', space=sflag, size = 0x4, scoped, tag = 'scoped memory for stem_fwd.5']
    %8 = vsyncpa [#allocation3], 0
    %9 = vsyncpa [#allocation4], 0
    %10 = vsyncpa [#allocation7], 0
    // Predicated region
    $region2: #{stem_fwd.5} parent=1 // pred_check
      _
    $region3: #{stem_fwd.5} parent=1 // pred_check_branch
      %12 = sbr.rel (0) target = $region5
    $region4: #{stem_fwd.5} parent=1 // pred_region
      %s14 = ssub.s32 2048, 2048
      %15 = vsyncadd [#allocation3], %s14
      %s16 = sshll.u32 [#allocation2], 4
      %s17 = int_to_ptr.vmem [resolvable:$true] %s16
      %22 = dma.hbm_to_vmem [thread:$0]  %s0, 2048, %s17, [#allocation3], 64, 64, 4
    $region5: #{stem_fwd.5} parent=1 // pred_fallthru
      _
    // Predicated region
    $region6: #{stem_fwd.5} parent=1 // pred_check
      _
    $region7: #{stem_fwd.5} parent=1 // pred_check_branch
      %24 = sbr.rel (0) target = $region9
    $region8: #{stem_fwd.5} parent=1 // pred_region
      %25 = dma.done [#allocation3], 2048
    $region9: #{stem_fwd.5} parent=1 // pred_fallthru
      _
    %p26 = scmp.eq.s32.totalorder 0, 0
    // Predicated region
    $region10: #{stem_fwd.5} parent=1 // pred_check
      %p27 = pneg %p26
    $region11: #{stem_fwd.5} parent=1 // pred_check_branch
      %29 = sbr.rel (%p27) target = $region13
    $region12: #{stem_fwd.5} parent=1 // pred_region
      %vm30 = vcmask 516096
      %31 = vst.msk [vmem:[#allocation5] sm:$0x1] %vm30, 0.0
      %32 = vst.msk [vmem:[#allocation6] sm:$0x1] %vm30, 0.0
    $region13: #{stem_fwd.5} parent=1 // pred_fallthru
      _
    %v33 = vld [vmem:[#allocation2] sm:$0xf]
    %v34 = vld [vmem:[#allocation2 + $0x4] sm:$0xf]
    %v35 = vld [vmem:[#allocation2 + $0x8] sm:$0xf]
    %v36 = vld [vmem:[#allocation2 + $0xc] sm:$0xf]
    %v37 = vld [vmem:[#allocation2 + $0x10] sm:$0xf]
    %v38 = vld [vmem:[#allocation2 + $0x14] sm:$0xf]
    %v39 = vld [vmem:[#allocation2 + $0x18] sm:$0xf]
    %v40 = vld [vmem:[#allocation2 + $0x1c] sm:$0xf]
    %v41 = vld [vmem:[#allocation2 + $0x20] sm:$0xf]
    %v42 = vld [vmem:[#allocation2 + $0x24] sm:$0xf]
    %v43 = vld [vmem:[#allocation2 + $0x28] sm:$0xf]
    %v44 = vld [vmem:[#allocation2 + $0x2c] sm:$0xf]
    %v45 = vld [vmem:[#allocation2 + $0x30] sm:$0xf]
    %v46 = vld [vmem:[#allocation2 + $0x34] sm:$0xf]
    %v47 = vld [vmem:[#allocation2 + $0x38] sm:$0xf]
    %v48 = vld [vmem:[#allocation2 + $0x3c] sm:$0xf]
    %v49 = vld [vmem:[#allocation2 + $0x40] sm:$0xf]
    %v50 = vld [vmem:[#allocation2 + $0x44] sm:$0xf]
    %v51 = vld [vmem:[#allocation2 + $0x48] sm:$0xf]
    %v52 = vld [vmem:[#allocation2 + $0x4c] sm:$0xf]
    %v53 = vld [vmem:[#allocation2 + $0x50] sm:$0xf]
    %v54 = vld [vmem:[#allocation2 + $0x54] sm:$0xf]
    %v55 = vld [vmem:[#allocation2 + $0x58] sm:$0xf]
    %v56 = vld [vmem:[#allocation2 + $0x5c] sm:$0xf]
    %v57 = vld [vmem:[#allocation2 + $0x60] sm:$0xf]
    %v58 = vld [vmem:[#allocation2 + $0x64] sm:$0xf]
    %v59 = vld [vmem:[#allocation2 + $0x68] sm:$0xf]
    %v60 = vld [vmem:[#allocation2 + $0x6c] sm:$0xf]
    %v61 = vld [vmem:[#allocation2 + $0x70] sm:$0xf]
    %v62 = vld [vmem:[#allocation2 + $0x74] sm:$0xf]
    %v63 = vld [vmem:[#allocation2 + $0x78] sm:$0xf]
    %v64 = vld [vmem:[#allocation2 + $0x7c] sm:$0xf]
    %v65 = vunpack.c.l.bf16 %v33
    %v66 = vunpack.c.l.bf16 %v34
    %v67 = vunpack.c.l.bf16 %v35
    %v68 = vunpack.c.l.bf16 %v36
    %v69 = vunpack.c.l.bf16 %v37
    %v70 = vunpack.c.l.bf16 %v38
    %v71 = vunpack.c.l.bf16 %v39
    %v72 = vunpack.c.l.bf16 %v40
    %v73 = vunpack.c.l.bf16 %v41
    %v74 = vunpack.c.l.bf16 %v42
    %v75 = vunpack.c.l.bf16 %v43
    %v76 = vunpack.c.l.bf16 %v44
    %v77 = vunpack.c.l.bf16 %v45
    %v78 = vunpack.c.l.bf16 %v46
    %v79 = vunpack.c.l.bf16 %v47
    %v80 = vunpack.c.l.bf16 %v48
    %v81 = vunpack.c.l.bf16 %v49
    %v82 = vunpack.c.l.bf16 %v50
    %v83 = vunpack.c.l.bf16 %v51
    %v84 = vunpack.c.l.bf16 %v52
    %v85 = vunpack.c.l.bf16 %v53
    %v86 = vunpack.c.l.bf16 %v54
    %v87 = vunpack.c.l.bf16 %v55
    %v88 = vunpack.c.l.bf16 %v56
    %v89 = vunpack.c.l.bf16 %v57
    %v90 = vunpack.c.l.bf16 %v58
    %v91 = vunpack.c.l.bf16 %v59
    %v92 = vunpack.c.l.bf16 %v60
    %v93 = vunpack.c.l.bf16 %v61
    %v94 = vunpack.c.l.bf16 %v62
    %v95 = vunpack.c.l.bf16 %v63
    %v96 = vunpack.c.l.bf16 %v64
    %v97 = vld [vmem:[#allocation5] sm:$0x1]
    %vm98 = vcmask 523264
    %v99 = vsel %vm98, %v65, 0.0
    %v100 = vsel %vm98, %v66, 0.0
    %v101 = vadd.f32 %v99, %v100
    %v102 = vsel %vm98, %v67, 0.0
    %v103 = vadd.f32 %v101, %v102
    %v104 = vsel %vm98, %v68, 0.0
    %v105 = vadd.f32 %v103, %v104
    %v106 = vsel %vm98, %v69, 0.0
    %v107 = vadd.f32 %v105, %v106
    %v108 = vsel %vm98, %v70, 0.0
    %v109 = vadd.f32 %v107, %v108
    %v110 = vsel %vm98, %v71, 0.0
    %v111 = vadd.f32 %v109, %v110
    %v112 = vsel %vm98, %v72, 0.0
    %v113 = vadd.f32 %v111, %v112
    %v114 = vsel %vm98, %v73, 0.0
    %v115 = vadd.f32 %v113, %v114
    %v116 = vsel %vm98, %v74, 0.0
    %v117 = vadd.f32 %v115, %v116
    %v118 = vsel %vm98, %v75, 0.0
    %v119 = vadd.f32 %v117, %v118
    %v120 = vsel %vm98, %v76, 0.0
    %v121 = vadd.f32 %v119, %v120
    %v122 = vsel %vm98, %v77, 0.0
    %v123 = vadd.f32 %v121, %v122
    %v124 = vsel %vm98, %v78, 0.0
    %v125 = vadd.f32 %v123, %v124
    %v126 = vsel %vm98, %v79, 0.0
    %v127 = vadd.f32 %v125, %v126
    %v128 = vsel %vm98, %v80, 0.0
    %v129 = vadd.f32 %v127, %v128
    %v130 = vsel %vm98, %v81, 0.0
    %v131 = vadd.f32 %v129, %v130
    %v132 = vsel %vm98, %v82, 0.0
    %v133 = vadd.f32 %v131, %v132
    %v134 = vsel %vm98, %v83, 0.0
    %v135 = vadd.f32 %v133, %v134
    %v136 = vsel %vm98, %v84, 0.0
    %v137 = vadd.f32 %v135, %v136
    %v138 = vsel %vm98, %v85, 0.0
    %v139 = vadd.f32 %v137, %v138
    %v140 = vsel %vm98, %v86, 0.0
    %v141 = vadd.f32 %v139, %v140
    %v142 = vsel %vm98, %v87, 0.0
    %v143 = vadd.f32 %v141, %v142
    %v144 = vsel %vm98, %v88, 0.0
    %v145 = vadd.f32 %v143, %v144
    %v146 = vsel %vm98, %v89, 0.0
    %v147 = vadd.f32 %v145, %v146
    %v148 = vsel %vm98, %v90, 0.0
    %v149 = vadd.f32 %v147, %v148
    %v150 = vsel %vm98, %v91, 0.0
    %v151 = vadd.f32 %v149, %v150
    %v152 = vsel %vm98, %v92, 0.0
    %v153 = vadd.f32 %v151, %v152
    %v154 = vsel %vm98, %v93, 0.0
    %v155 = vadd.f32 %v153, %v154
    %v156 = vsel %vm98, %v94, 0.0
    %v157 = vadd.f32 %v155, %v156
    %v158 = vsel %vm98, %v95, 0.0
    %v159 = vadd.f32 %v157, %v158
    %v160 = vsel %vm98, %v96, 0.0
    %v161 = vadd.f32 %v159, %v160
    %v162 = vrot.slane %v161, 4
    %v163 = vadd.f32 %v161, %v162
    %v164 = vrot.slane %v163, 2
    %v165 = vadd.f32 %v163, %v164
    %v166 = vrot.slane %v165, 1
    %v167 = vadd.f32 %v165, %v166
    %v168 = vadd.f32 %v97, %v167
    %vm169 = vcmask 516096
    %170 = vst.msk [vmem:[#allocation5] sm:$0x1] %vm169, %v168
    %v171 = vld [vmem:[#allocation6] sm:$0x1]
    %v172 = vmul.f32 %v65, %v65
    %v173 = vmul.f32 %v66, %v66
    %v174 = vmul.f32 %v67, %v67
    %v175 = vmul.f32 %v68, %v68
    %v176 = vmul.f32 %v69, %v69
    %v177 = vmul.f32 %v70, %v70
    %v178 = vmul.f32 %v71, %v71
    %v179 = vmul.f32 %v72, %v72
    %v180 = vmul.f32 %v73, %v73
    %v181 = vmul.f32 %v74, %v74
    %v182 = vmul.f32 %v75, %v75
    %v183 = vmul.f32 %v76, %v76
    %v184 = vmul.f32 %v77, %v77
    %v185 = vmul.f32 %v78, %v78
    %v186 = vmul.f32 %v79, %v79
    %v187 = vmul.f32 %v80, %v80
    %v188 = vmul.f32 %v81, %v81
    %v189 = vmul.f32 %v82, %v82
    %v190 = vmul.f32 %v83, %v83
    %v191 = vmul.f32 %v84, %v84
    %v192 = vmul.f32 %v85, %v85
    %v193 = vmul.f32 %v86, %v86
    %v194 = vmul.f32 %v87, %v87
    %v195 = vmul.f32 %v88, %v88
    %v196 = vmul.f32 %v89, %v89
    %v197 = vmul.f32 %v90, %v90
    %v198 = vmul.f32 %v91, %v91
    %v199 = vmul.f32 %v92, %v92
    %v200 = vmul.f32 %v93, %v93
    %v201 = vmul.f32 %v94, %v94
    %v202 = vmul.f32 %v95, %v95
    %v203 = vmul.f32 %v96, %v96
    %v204 = vsel %vm98, %v172, 0.0
    %v205 = vsel %vm98, %v173, 0.0
    %v206 = vadd.f32 %v204, %v205
    %v207 = vsel %vm98, %v174, 0.0
    %v208 = vadd.f32 %v206, %v207
    %v209 = vsel %vm98, %v175, 0.0
    %v210 = vadd.f32 %v208, %v209
    %v211 = vsel %vm98, %v176, 0.0
    %v212 = vadd.f32 %v210, %v211
    %v213 = vsel %vm98, %v177, 0.0
    %v214 = vadd.f32 %v212, %v213
    %v215 = vsel %vm98, %v178, 0.0
    %v216 = vadd.f32 %v214, %v215
    %v217 = vsel %vm98, %v179, 0.0
    %v218 = vadd.f32 %v216, %v217
    %v219 = vsel %vm98, %v180, 0.0
    %v220 = vadd.f32 %v218, %v219
    %v221 = vsel %vm98, %v181, 0.0
    %v222 = vadd.f32 %v220, %v221
    %v223 = vsel %vm98, %v182, 0.0
    %v224 = vadd.f32 %v222, %v223
    %v225 = vsel %vm98, %v183, 0.0
    %v226 = vadd.f32 %v224, %v225
    %v227 = vsel %vm98, %v184, 0.0
    %v228 = vadd.f32 %v226, %v227
    %v229 = vsel %vm98, %v185, 0.0
    %v230 = vadd.f32 %v228, %v229
    %v231 = vsel %vm98, %v186, 0.0
    %v232 = vadd.f32 %v230, %v231
    %v233 = vsel %vm98, %v187, 0.0
    %v234 = vadd.f32 %v232, %v233
    %v235 = vsel %vm98, %v188, 0.0
    %v236 = vadd.f32 %v234, %v235
    %v237 = vsel %vm98, %v189, 0.0
    %v238 = vadd.f32 %v236, %v237
    %v239 = vsel %vm98, %v190, 0.0
    %v240 = vadd.f32 %v238, %v239
    %v241 = vsel %vm98, %v191, 0.0
    %v242 = vadd.f32 %v240, %v241
    %v243 = vsel %vm98, %v192, 0.0
    %v244 = vadd.f32 %v242, %v243
    %v245 = vsel %vm98, %v193, 0.0
    %v246 = vadd.f32 %v244, %v245
    %v247 = vsel %vm98, %v194, 0.0
    %v248 = vadd.f32 %v246, %v247
    %v249 = vsel %vm98, %v195, 0.0
    %v250 = vadd.f32 %v248, %v249
    %v251 = vsel %vm98, %v196, 0.0
    %v252 = vadd.f32 %v250, %v251
    %v253 = vsel %vm98, %v197, 0.0
    %v254 = vadd.f32 %v252, %v253
    %v255 = vsel %vm98, %v198, 0.0
    %v256 = vadd.f32 %v254, %v255
    %v257 = vsel %vm98, %v199, 0.0
    %v258 = vadd.f32 %v256, %v257
    %v259 = vsel %vm98, %v200, 0.0
    %v260 = vadd.f32 %v258, %v259
    %v261 = vsel %vm98, %v201, 0.0
    %v262 = vadd.f32 %v260, %v261
    %v263 = vsel %vm98, %v202, 0.0
    %v264 = vadd.f32 %v262, %v263
    %v265 = vsel %vm98, %v203, 0.0
    %v266 = vadd.f32 %v264, %v265
    %v267 = vrot.slane %v266, 4
    %v268 = vadd.f32 %v266, %v267
    %v269 = vrot.slane %v268, 2
    %v270 = vadd.f32 %v268, %v269
    %v271 = vrot.slane %v270, 1
    %v272 = vadd.f32 %v270, %v271
    %v273 = vadd.f32 %v171, %v272
    %274 = vst.msk [vmem:[#allocation6] sm:$0x1] %vm169, %v273
    // Predicated region
    $region14: #{stem_fwd.5} parent=1 // pred_check
      _
    $region15: #{stem_fwd.5} parent=1 // pred_check_branch
      %276 = sbr.rel (0) target = $region17
    $region16: #{stem_fwd.5} parent=1 // pred_region
      %s278 = ssub.s32 16, 16
      %279 = vsyncadd [#allocation4], %s278
      %s281 = sshll.u32 [#allocation5], 4
      %s282 = int_to_ptr.vmem [resolvable:$true] %s281
      %284 = dma.vmem_to_hbm [thread:$0]  %s282, 16, %s1, [#allocation4]
    $region17: #{stem_fwd.5} parent=1 // pred_fallthru
      _
    // Predicated region
    $region18: #{stem_fwd.5} parent=1 // pred_check
      _
    $region19: #{stem_fwd.5} parent=1 // pred_check_branch
      %286 = sbr.rel (0) target = $region21
    $region20: #{stem_fwd.5} parent=1 // pred_region
      %s288 = ssub.s32 16, 16
      %289 = vsyncadd [#allocation7], %s288
      %s291 = sshll.u32 [#allocation6], 4
      %s292 = int_to_ptr.vmem [resolvable:$true] %s291
      %294 = dma.vmem_to_hbm [thread:$0]  %s292, 16, %s2, [#allocation7]
    $region21: #{stem_fwd.5} parent=1 // pred_fallthru
      _
    // Predicated region
    $region22: #{stem_fwd.5} parent=1 // pred_check
      _
    $region23: #{stem_fwd.5} parent=1 // pred_check_branch
      %296 = sbr.rel (0) target = $region25
    $region24: #{stem_fwd.5} parent=1 // pred_region
      %297 = dma.done [#allocation4], 16
    $region25: #{stem_fwd.5} parent=1 // pred_fallthru
      _
    // Predicated region
    $region26: #{stem_fwd.5} parent=1 // pred_check
      _
    $region27: #{stem_fwd.5} parent=1 // pred_check_branch
      %299 = sbr.rel (0) target = $region29
    $region28: #{stem_fwd.5} parent=1 // pred_region
      %300 = dma.done [#allocation7], 16
    $region29: #{stem_fwd.5} parent=1 // pred_fallthru
      _
    %301 = vsyncpa [#allocation3], 1
    %302 = vsyncpa [#allocation4], 1
    %303 = vsyncpa [#allocation7], 1

// kernel: stem_fwd.4
$region0: #{stem_fwd.4}
  #allocation0 [shape = 'u32[]', space=smem, size = 0x4, offset = 0x4, fixed_abs, tag = 'smem constant byte address 0x4 - core index']
  #allocation1 [shape = 'u32[144,128]{1,0:T(1,128)}', space=vmem, size = 0x12000, scoped, tag = 'internal scratch']
  %s0 = inlined_call_operand.hbm [shape: bf16[1,17,2,17,128], index: 0, kind: input, shape index: {}]
  %s1 = inlined_call_operand.hbm [shape: f32[1,128], index: 1, kind: input, shape index: {}]
  %s2 = inlined_call_operand.hbm [shape: f32[1,128], index: 2, kind: input, shape index: {}]
  %s3 = inlined_call_operand.hbm [shape: bf16[1,16,16,64], index: 3, kind: output, shape index: {}]
  %s4 = sld [smem:[#allocation0]]
  $region34: #{stem_fwd.4} parent=0
    _
  %s6 = ssub.s32 1, %s4
  %s7 = scalar_select 0, %s6, %s4
  $region1: #{stem_fwd.4} parent=0
    #allocation2 [shape = 'u8[208896]{0}', space=vmem, size = 0x33000, scoped, tag = 'input window, operand 0, single buffered']
    #allocation3 [shape = 's32[1]{0}', space=sflag, size = 0x4, scoped, tag = 'scoped memory for stem_fwd.4']
    #allocation4 [shape = 's32[1]{0}', space=sflag, size = 0x4, scoped, tag = 'scoped memory for stem_fwd.4']
    #allocation5 [shape = 'u8[512]{0}', space=vmem, size = 0x400, scoped, tag = 'input window, operand 1, single buffered']
    #allocation6 [shape = 's32[1]{0}', space=sflag, size = 0x4, scoped, tag = 'scoped memory for stem_fwd.4']
    #allocation7 [shape = 'u8[512]{0}', space=vmem, size = 0x400, scoped, tag = 'input window, operand 2, single buffered']
    #allocation8 [shape = 'u8[65536]{0}', space=vmem, size = 0x10000, scoped, tag = 'output window, operand 0, single buffered']
    %8 = vsyncpa [#allocation3], 0
    %9 = vsyncpa [#allocation6], 0
    %10 = vsyncpa [#allocation4], 0
    // Predicated region
    $region2: #{stem_fwd.4} parent=1 // pred_check
      _
    $region3: #{stem_fwd.4} parent=1 // pred_check_branch
      %12 = sbr.rel (0) target = $region5
    $region4: #{stem_fwd.4} parent=1 // pred_region
      %s14 = ssub.s32 6528, 6528
      %15 = vsyncadd [#allocation3], %s14
      %s16 = sshll.u32 [#allocation2], 4
      %s17 = int_to_ptr.vmem [resolvable:$true] %s16
      %22 = dma.hbm_to_vmem [thread:$0]  %s0, 6528, %s17, [#allocation3], 64, 64, 4
    $region5: #{stem_fwd.4} parent=1 // pred_fallthru
      _
    // Predicated region
    $region6: #{stem_fwd.4} parent=1 // pred_check
      _
    $region7: #{stem_fwd.4} parent=1 // pred_check_branch
      %24 = sbr.rel (0) target = $region9
    $region8: #{stem_fwd.4} parent=1 // pred_region
      %s26 = ssub.s32 16, 16
      %27 = vsyncadd [#allocation6], %s26
      %s29 = sshll.u32 [#allocation5], 4
      %s30 = int_to_ptr.vmem [resolvable:$true] %s29
      %32 = dma.hbm_to_vmem [thread:$0]  %s1, 16, %s30, [#allocation6]
    $region9: #{stem_fwd.4} parent=1 // pred_fallthru
      _
    // Predicated region
    $region10: #{stem_fwd.4} parent=1 // pred_check
      _
    $region11: #{stem_fwd.4} parent=1 // pred_check_branch
      %34 = sbr.rel (0) target = $region13
    $region12: #{stem_fwd.4} parent=1 // pred_region
      %s36 = ssub.s32 16, 16
      %37 = vsyncadd [#allocation6], %s36
      %s39 = sshll.u32 [#allocation7], 4
      %s40 = int_to_ptr.vmem [resolvable:$true] %s39
      %42 = dma.hbm_to_vmem [thread:$0]  %s2, 16, %s40, [#allocation6]
    $region13: #{stem_fwd.4} parent=1 // pred_fallthru
      _
    // Predicated region
    $region14: #{stem_fwd.4} parent=1 // pred_check
      _
    $region15: #{stem_fwd.4} parent=1 // pred_check_branch
      %44 = sbr.rel (0) target = $region17
    $region16: #{stem_fwd.4} parent=1 // pred_region
      %45 = dma.done [#allocation3], 6528
    $region17: #{stem_fwd.4} parent=1 // pred_fallthru
      _
    // Predicated region
    $region18: #{stem_fwd.4} parent=1 // pred_check
      _
    $region19: #{stem_fwd.4} parent=1 // pred_check_branch
      %47 = sbr.rel (0) target = $region21
    $region20: #{stem_fwd.4} parent=1 // pred_region
      %48 = dma.done [#allocation6], 16
    $region21: #{stem_fwd.4} parent=1 // pred_fallthru
      _
    // Predicated region
    $region22: #{stem_fwd.4} parent=1 // pred_check
      _
    $region23: #{stem_fwd.4} parent=1 // pred_check_branch
      %50 = sbr.rel (0) target = $region25
    $region24: #{stem_fwd.4} parent=1 // pred_region
      %51 = dma.done [#allocation6], 16
    $region25: #{stem_fwd.4} parent=1 // pred_fallthru
      _
    %v52 = vld [vmem:[#allocation2] sm:$0xf]
    %v53 = vld [vmem:[#allocation2 + $0x4] sm:$0xf]
    %v54 = vld [vmem:[#allocation2 + $0x8] sm:$0x1]
    %v55 = vld [vmem:[#allocation2 + $0xc] sm:$0xf]
    %v56 = vld [vmem:[#allocation2 + $0x10] sm:$0xf]
    %v57 = vld [vmem:[#allocation2 + $0x14] sm:$0x1]
    %v58 = vld [vmem:[#allocation2 + $0x18] sm:$0xf]
    %v59 = vld [vmem:[#allocation2 + $0x1c] sm:$0xf]
    %v60 = vld [vmem:[#allocation2 + $0x20] sm:$0x1]
    %v61 = vld [vmem:[#allocation2 + $0x24] sm:$0xf]
    %v62 = vld [vmem:[#allocation2 + $0x28] sm:$0xf]
    %v63 = vld [vmem:[#allocation2 + $0x2c] sm:$0x1]
    %v64 = vld [vmem:[#allocation2 + $0x30] sm:$0xf]
    %v65 = vld [vmem:[#allocation2 + $0x34] sm:$0xf]
    %v66 = vld [vmem:[#allocation2 + $0x38] sm:$0x1]
    %v67 = vld [vmem:[#allocation2 + $0x3c] sm:$0xf]
    %v68 = vld [vmem:[#allocation2 + $0x40] sm:$0xf]
    %v69 = vld [vmem:[#allocation2 + $0x44] sm:$0x1]
    %v70 = vld [vmem:[#allocation2 + $0x48] sm:$0xf]
    %v71 = vld [vmem:[#allocation2 + $0x4c] sm:$0xf]
    %v72 = vld [vmem:[#allocation2 + $0x50] sm:$0x1]
    %v73 = vld [vmem:[#allocation2 + $0x54] sm:$0xf]
    %v74 = vld [vmem:[#allocation2 + $0x58] sm:$0xf]
    %v75 = vld [vmem:[#allocation2 + $0x5c] sm:$0x1]
    %v76 = vld [vmem:[#allocation2 + $0x60] sm:$0xf]
    %v77 = vld [vmem:[#allocation2 + $0x64] sm:$0xf]
    %v78 = vld [vmem:[#allocation2 + $0x68] sm:$0x1]
    %v79 = vld [vmem:[#allocation2 + $0x6c] sm:$0xf]
    %v80 = vld [vmem:[#allocation2 + $0x70] sm:$0xf]
    %v81 = vld [vmem:[#allocation2 + $0x74] sm:$0x1]
    %v82 = vld [vmem:[#allocation2 + $0x78] sm:$0xf]
    %v83 = vld [vmem:[#allocation2 + $0x7c] sm:$0xf]
    %v84 = vld [vmem:[#allocation2 + $0x80] sm:$0x1]
    %v85 = vld [vmem:[#allocation2 + $0x84] sm:$0xf]
    %v86 = vld [vmem:[#allocation2 + $0x88] sm:$0xf]
    %v87 = vld [vmem:[#allocation2 + $0x8c] sm:$0x1]
    %v88 = vld [vmem:[#allocation2 + $0x90] sm:$0xf]
    %v89 = vld [vmem:[#allocation2 + $0x94] sm:$0xf]
    %v90 = vld [vmem:[#allocation2 + $0x98] sm:$0x1]
    %v91 = vld [vmem:[#allocation2 + $0x9c] sm:$0xf]
    %v92 = vld [vmem:[#allocation2 + $0xa0] sm:$0xf]
    %v93 = vld [vmem:[#allocation2 + $0xa4] sm:$0x1]
    %v94 = vld [vmem:[#allocation2 + $0xa8] sm:$0xf]
    %v95 = vld [vmem:[#allocation2 + $0xac] sm:$0xf]
    %v96 = vld [vmem:[#allocation2 + $0xb0] sm:$0x1]
    %v97 = vld [vmem:[#allocation2 + $0xb4] sm:$0xf]
    %v98 = vld [vmem:[#allocation2 + $0xb8] sm:$0xf]
    %v99 = vld [vmem:[#allocation2 + $0xbc] sm:$0x1]
    %v100 = vld [vmem:[#allocation2 + $0xc0] sm:$0xf]
    %v101 = vld [vmem:[#allocation2 + $0xc4] sm:$0xf]
    %v102 = vld [vmem:[#allocation2 + $0xc8] sm:$0x1]
    %v103 = vld [vmem:[#allocation2 + $0xcc] sm:$0xf]
    %v104 = vld [vmem:[#allocation2 + $0xd0] sm:$0xf]
    %v105 = vld [vmem:[#allocation2 + $0xd4] sm:$0x1]
    %v106 = vld [vmem:[#allocation2 + $0xd8] sm:$0xf]
    %v107 = vld [vmem:[#allocation2 + $0xdc] sm:$0xf]
    %v108 = vld [vmem:[#allocation2 + $0xe0] sm:$0x1]
    %v109 = vld [vmem:[#allocation2 + $0xe4] sm:$0xf]
    %v110 = vld [vmem:[#allocation2 + $0xe8] sm:$0xf]
    %v111 = vld [vmem:[#allocation2 + $0xec] sm:$0x1]
    %v112 = vld [vmem:[#allocation2 + $0xf0] sm:$0xf]
    %v113 = vld [vmem:[#allocation2 + $0xf4] sm:$0xf]
    %v114 = vld [vmem:[#allocation2 + $0xf8] sm:$0x1]
    %v115 = vld [vmem:[#allocation2 + $0xfc] sm:$0xf]
    %v116 = vld [vmem:[#allocation2 + $0x100] sm:$0xf]
    %v117 = vld [vmem:[#allocation2 + $0x104] sm:$0x1]
    %v118 = vld [vmem:[#allocation2 + $0x108] sm:$0xf]
    %v119 = vld [vmem:[#allocation2 + $0x10c] sm:$0xf]
    %v120 = vld [vmem:[#allocation2 + $0x110] sm:$0x1]
    %v121 = vld [vmem:[#allocation2 + $0x114] sm:$0xf]
    %v122 = vld [vmem:[#allocation2 + $0x118] sm:$0xf]
    %v123 = vld [vmem:[#allocation2 + $0x11c] sm:$0x1]
    %v124 = vld [vmem:[#allocation2 + $0x120] sm:$0xf]
    %v125 = vld [vmem:[#allocation2 + $0x124] sm:$0xf]
    %v126 = vld [vmem:[#allocation2 + $0x128] sm:$0x1]
    %v127 = vld [vmem:[#allocation2 + $0x12c] sm:$0xf]
    %v128 = vld [vmem:[#allocation2 + $0x130] sm:$0xf]
    %v129 = vld [vmem:[#allocation2 + $0x134] sm:$0x1]
    %v130 = vld [vmem:[#allocation2 + $0x138] sm:$0xf]
    %v131 = vld [vmem:[#allocation2 + $0x13c] sm:$0xf]
    %v132 = vld [vmem:[#allocation2 + $0x140] sm:$0x1]
    %v133 = vld [vmem:[#allocation2 + $0x144] sm:$0xf]
    %v134 = vld [vmem:[#allocation2 + $0x148] sm:$0xf]
    %v135 = vld [vmem:[#allocation2 + $0x14c] sm:$0x1]
    %v136 = vld [vmem:[#allocation2 + $0x150] sm:$0xf]
    %v137 = vld [vmem:[#allocation2 + $0x154] sm:$0xf]
    %v138 = vld [vmem:[#allocation2 + $0x158] sm:$0x1]
    %v139 = vld [vmem:[#allocation2 + $0x15c] sm:$0xf]
    %v140 = vld [vmem:[#allocation2 + $0x160] sm:$0xf]
    %v141 = vld [vmem:[#allocation2 + $0x164] sm:$0x1]
    %v142 = vld [vmem:[#allocation2 + $0x168] sm:$0xf]
    %v143 = vld [vmem:[#allocation2 + $0x16c] sm:$0xf]
    %v144 = vld [vmem:[#allocation2 + $0x170] sm:$0x1]
    %v145 = vld [vmem:[#allocation2 + $0x174] sm:$0xf]
    %v146 = vld [vmem:[#allocation2 + $0x178] sm:$0xf]
    %v147 = vld [vmem:[#allocation2 + $0x17c] sm:$0x1]
    %v148 = vld [vmem:[#allocation2 + $0x180] sm:$0xf]
    %v149 = vld [vmem:[#allocation2 + $0x184] sm:$0xf]
    %v150 = vld [vmem:[#allocation2 + $0x188] sm:$0x1]
    %v151 = vunpack.c.l.bf16 %v52
    %v152 = vunpack.c.l.bf16 %v53
    %v153 = vunpack.c.l.bf16 %v54
    %v154 = vunpack.c.l.bf16 %v55
    %v155 = vunpack.c.l.bf16 %v56
    %v156 = vunpack.c.l.bf16 %v57
    %v157 = vunpack.c.l.bf16 %v58
    %v158 = vunpack.c.l.bf16 %v59
    %v159 = vunpack.c.l.bf16 %v60
    %v160 = vunpack.c.l.bf16 %v61
    %v161 = vunpack.c.l.bf16 %v62
    %v162 = vunpack.c.l.bf16 %v63
    %v163 = vunpack.c.l.bf16 %v64
    %v164 = vunpack.c.l.bf16 %v65
    %v165 = vunpack.c.l.bf16 %v66
    %v166 = vunpack.c.l.bf16 %v67
    %v167 = vunpack.c.l.bf16 %v68
    %v168 = vunpack.c.l.bf16 %v69
    %v169 = vunpack.c.l.bf16 %v70
    %v170 = vunpack.c.l.bf16 %v71
    %v171 = vunpack.c.l.bf16 %v72
    %v172 = vunpack.c.l.bf16 %v73
    %v173 = vunpack.c.l.bf16 %v74
    %v174 = vunpack.c.l.bf16 %v75
    %v175 = vunpack.c.l.bf16 %v76
    %v176 = vunpack.c.l.bf16 %v77
    %v177 = vunpack.c.l.bf16 %v78
    %v178 = vunpack.c.l.bf16 %v79
    %v179 = vunpack.c.l.bf16 %v80
    %v180 = vunpack.c.l.bf16 %v81
    %v181 = vunpack.c.l.bf16 %v82
    %v182 = vunpack.c.l.bf16 %v83
    %v183 = vunpack.c.l.bf16 %v84
    %v184 = vunpack.c.l.bf16 %v85
    %v185 = vunpack.c.l.bf16 %v86
    %v186 = vunpack.c.l.bf16 %v87
    %v187 = vunpack.c.l.bf16 %v88
    %v188 = vunpack.c.l.bf16 %v89
    %v189 = vunpack.c.l.bf16 %v90
    %v190 = vunpack.c.l.bf16 %v91
    %v191 = vunpack.c.l.bf16 %v92
    %v192 = vunpack.c.l.bf16 %v93
    %v193 = vunpack.c.l.bf16 %v94
    %v194 = vunpack.c.l.bf16 %v95
    %v195 = vunpack.c.l.bf16 %v96
    %v196 = vunpack.c.l.bf16 %v97
    %v197 = vunpack.c.l.bf16 %v98
    %v198 = vunpack.c.l.bf16 %v99
    %v199 = vunpack.c.l.bf16 %v100
    %v200 = vunpack.c.l.bf16 %v101
    %v201 = vunpack.c.l.bf16 %v102
    %v202 = vunpack.c.l.bf16 %v103
    %v203 = vunpack.c.l.bf16 %v104
    %v204 = vunpack.c.l.bf16 %v105
    %v205 = vunpack.c.l.bf16 %v106
    %v206 = vunpack.c.l.bf16 %v107
    %v207 = vunpack.c.l.bf16 %v108
    %v208 = vunpack.c.l.bf16 %v109
    %v209 = vunpack.c.l.bf16 %v110
    %v210 = vunpack.c.l.bf16 %v111
    %v211 = vunpack.c.l.bf16 %v112
    %v212 = vunpack.c.l.bf16 %v113
    %v213 = vunpack.c.l.bf16 %v114
    %v214 = vunpack.c.l.bf16 %v115
    %v215 = vunpack.c.l.bf16 %v116
    %v216 = vunpack.c.l.bf16 %v117
    %v217 = vunpack.c.l.bf16 %v118
    %v218 = vunpack.c.l.bf16 %v119
    %v219 = vunpack.c.l.bf16 %v120
    %v220 = vunpack.c.l.bf16 %v121
    %v221 = vunpack.c.l.bf16 %v122
    %v222 = vunpack.c.l.bf16 %v123
    %v223 = vunpack.c.l.bf16 %v124
    %v224 = vunpack.c.l.bf16 %v125
    %v225 = vunpack.c.l.bf16 %v126
    %v226 = vunpack.c.l.bf16 %v127
    %v227 = vunpack.c.l.bf16 %v128
    %v228 = vunpack.c.l.bf16 %v129
    %v229 = vunpack.c.l.bf16 %v130
    %v230 = vunpack.c.l.bf16 %v131
    %v231 = vunpack.c.l.bf16 %v132
    %v232 = vunpack.c.l.bf16 %v133
    %v233 = vunpack.c.l.bf16 %v134
    %v234 = vunpack.c.l.bf16 %v135
    %v235 = vunpack.c.l.bf16 %v136
    %v236 = vunpack.c.l.bf16 %v137
    %v237 = vunpack.c.l.bf16 %v138
    %v238 = vunpack.c.l.bf16 %v139
    %v239 = vunpack.c.l.bf16 %v140
    %v240 = vunpack.c.l.bf16 %v141
    %v241 = vunpack.c.l.bf16 %v142
    %v242 = vunpack.c.l.bf16 %v143
    %v243 = vunpack.c.l.bf16 %v144
    %v244 = vunpack.c.l.bf16 %v145
    %v245 = vunpack.c.l.bf16 %v146
    %v246 = vunpack.c.l.bf16 %v147
    %v247 = vunpack.c.l.bf16 %v148
    %v248 = vunpack.c.l.bf16 %v149
    %v249 = vunpack.c.l.bf16 %v150
    %v250 = vld [vmem:[#allocation5] sm:$0x1]
    %v251 = vld [vmem:[#allocation7] sm:$0x1]
    %v253 = vlaneseq
    %v254 = vshrl.u32 %v253, 7
    %v255 = vsub.s32 0, %v254
    %v256 = vrot.slane %v250, %v255
    %v258 = vmul.f32 %v151, %v256
    %v259 = vmul.f32 %v152, %v256
    %v260 = vmul.f32 %v153, %v256
    %v261 = vmul.f32 %v154, %v256
    %v262 = vmul.f32 %v155, %v256
    %v263 = vmul.f32 %v156, %v256
    %v264 = vmul.f32 %v157, %v256
    %v265 = vmul.f32 %v158, %v256
    %v266 = vmul.f32 %v159, %v256
    %v267 = vmul.f32 %v160, %v256
    %v268 = vmul.f32 %v161, %v256
    %v269 = vmul.f32 %v162, %v256
    %v270 = vmul.f32 %v163, %v256
    %v271 = vmul.f32 %v164, %v256
    %v272 = vmul.f32 %v165, %v256
    %v273 = vmul.f32 %v166, %v256
    %v274 = vmul.f32 %v167, %v256
    %v275 = vmul.f32 %v168, %v256
    %v276 = vmul.f32 %v169, %v256
    %v277 = vmul.f32 %v170, %v256
    %v278 = vmul.f32 %v171, %v256
    %v279 = vmul.f32 %v172, %v256
    %v280 = vmul.f32 %v173, %v256
    %v281 = vmul.f32 %v174, %v256
    %v282 = vmul.f32 %v175, %v256
    %v283 = vmul.f32 %v176, %v256
    %v284 = vmul.f32 %v177, %v256
    %v285 = vmul.f32 %v178, %v256
    %v286 = vmul.f32 %v179, %v256
    %v287 = vmul.f32 %v180, %v256
    %v288 = vmul.f32 %v181, %v256
    %v289 = vmul.f32 %v182, %v256
    %v290 = vmul.f32 %v183, %v256
    %v291 = vmul.f32 %v184, %v256
    %v292 = vmul.f32 %v185, %v256
    %v293 = vmul.f32 %v186, %v256
    %v294 = vmul.f32 %v187, %v256
    %v295 = vmul.f32 %v188, %v256
    %v296 = vmul.f32 %v189, %v256
    %v297 = vmul.f32 %v190, %v256
    %v298 = vmul.f32 %v191, %v256
    %v299 = vmul.f32 %v192, %v256
    %v300 = vmul.f32 %v193, %v256
    %v301 = vmul.f32 %v194, %v256
    %v302 = vmul.f32 %v195, %v256
    %v303 = vmul.f32 %v196, %v256
    %v304 = vmul.f32 %v197, %v256
    %v305 = vmul.f32 %v198, %v256
    %v306 = vmul.f32 %v199, %v256
    %v307 = vmul.f32 %v200, %v256
    %v308 = vmul.f32 %v201, %v256
    %v309 = vmul.f32 %v202, %v256
    %v310 = vmul.f32 %v203, %v256
    %v311 = vmul.f32 %v204, %v256
    %v312 = vmul.f32 %v205, %v256
    %v313 = vmul.f32 %v206, %v256
    %v314 = vmul.f32 %v207, %v256
    %v315 = vmul.f32 %v208, %v256
    %v316 = vmul.f32 %v209, %v256
    %v317 = vmul.f32 %v210, %v256
    %v318 = vmul.f32 %v211, %v256
    %v319 = vmul.f32 %v212, %v256
    %v320 = vmul.f32 %v213, %v256
    %v321 = vmul.f32 %v214, %v256
    %v322 = vmul.f32 %v215, %v256
    %v323 = vmul.f32 %v216, %v256
    %v324 = vmul.f32 %v217, %v256
    %v325 = vmul.f32 %v218, %v256
    %v326 = vmul.f32 %v219, %v256
    %v327 = vmul.f32 %v220, %v256
    %v328 = vmul.f32 %v221, %v256
    %v329 = vmul.f32 %v222, %v256
    %v330 = vmul.f32 %v223, %v256
    %v331 = vmul.f32 %v224, %v256
    %v332 = vmul.f32 %v225, %v256
    %v333 = vmul.f32 %v226, %v256
    %v334 = vmul.f32 %v227, %v256
    %v335 = vmul.f32 %v228, %v256
    %v336 = vmul.f32 %v229, %v256
    %v337 = vmul.f32 %v230, %v256
    %v338 = vmul.f32 %v231, %v256
    %v339 = vmul.f32 %v232, %v256
    %v340 = vmul.f32 %v233, %v256
    %v341 = vmul.f32 %v234, %v256
    %v342 = vmul.f32 %v235, %v256
    %v343 = vmul.f32 %v236, %v256
    %v344 = vmul.f32 %v237, %v256
    %v345 = vmul.f32 %v238, %v256
    %v346 = vmul.f32 %v239, %v256
    %v347 = vmul.f32 %v240, %v256
    %v348 = vmul.f32 %v241, %v256
    %v349 = vmul.f32 %v242, %v256
    %v350 = vmul.f32 %v243, %v256
    %v351 = vmul.f32 %v244, %v256
    %v352 = vmul.f32 %v245, %v256
    %v353 = vmul.f32 %v246, %v256
    %v354 = vmul.f32 %v247, %v256
    %v355 = vmul.f32 %v248, %v256
    %v356 = vmul.f32 %v249, %v256
    %v358 = vlaneseq
    %v359 = vshrl.u32 %v358, 7
    %v360 = vsub.s32 0, %v359
    %v361 = vrot.slane %v251, %v360
    %v363 = vadd.f32 %v258, %v361
    %v364 = vadd.f32 %v259, %v361
    %v365 = vadd.f32 %v260, %v361
    %v366 = vadd.f32 %v261, %v361
    %v367 = vadd.f32 %v262, %v361
    %v368 = vadd.f32 %v263, %v361
    %v369 = vadd.f32 %v264, %v361
    %v370 = vadd.f32 %v265, %v361
    %v371 = vadd.f32 %v266, %v361
    %v372 = vadd.f32 %v267, %v361
    %v373 = vadd.f32 %v268, %v361
    %v374 = vadd.f32 %v269, %v361
    %v375 = vadd.f32 %v270, %v361
    %v376 = vadd.f32 %v271, %v361
    %v377 = vadd.f32 %v272, %v361
    %v378 = vadd.f32 %v273, %v361
    %v379 = vadd.f32 %v274, %v361
    %v380 = vadd.f32 %v275, %v361
    %v381 = vadd.f32 %v276, %v361
    %v382 = vadd.f32 %v277, %v361
    %v383 = vadd.f32 %v278, %v361
    %v384 = vadd.f32 %v279, %v361
    %v385 = vadd.f32 %v280, %v361
    %v386 = vadd.f32 %v281, %v361
    %v387 = vadd.f32 %v282, %v361
    %v388 = vadd.f32 %v283, %v361
    %v389 = vadd.f32 %v284, %v361
    %v390 = vadd.f32 %v285, %v361
    %v391 = vadd.f32 %v286, %v361
    %v392 = vadd.f32 %v287, %v361
    %v393 = vadd.f32 %v288, %v361
    %v394 = vadd.f32 %v289, %v361
    %v395 = vadd.f32 %v290, %v361
    %v396 = vadd.f32 %v291, %v361
    %v397 = vadd.f32 %v292, %v361
    %v398 = vadd.f32 %v293, %v361
    %v399 = vadd.f32 %v294, %v361
    %v400 = vadd.f32 %v295, %v361
    %v401 = vadd.f32 %v296, %v361
    %v402 = vadd.f32 %v297, %v361
    %v403 = vadd.f32 %v298, %v361
    %v404 = vadd.f32 %v299, %v361
    %v405 = vadd.f32 %v300, %v361
    %v406 = vadd.f32 %v301, %v361
    %v407 = vadd.f32 %v302, %v361
    %v408 = vadd.f32 %v303, %v361
    %v409 = vadd.f32 %v304, %v361
    %v410 = vadd.f32 %v305, %v361
    %v411 = vadd.f32 %v306, %v361
    %v412 = vadd.f32 %v307, %v361
    %v413 = vadd.f32 %v308, %v361
    %v414 = vadd.f32 %v309, %v361
    %v415 = vadd.f32 %v310, %v361
    %v416 = vadd.f32 %v311, %v361
    %v417 = vadd.f32 %v312, %v361
    %v418 = vadd.f32 %v313, %v361
    %v419 = vadd.f32 %v314, %v361
    %v420 = vadd.f32 %v315, %v361
    %v421 = vadd.f32 %v316, %v361
    %v422 = vadd.f32 %v317, %v361
    %v423 = vadd.f32 %v318, %v361
    %v424 = vadd.f32 %v319, %v361
    %v425 = vadd.f32 %v320, %v361
    %v426 = vadd.f32 %v321, %v361
    %v427 = vadd.f32 %v322, %v361
    %v428 = vadd.f32 %v323, %v361
    %v429 = vadd.f32 %v324, %v361
    %v430 = vadd.f32 %v325, %v361
    %v431 = vadd.f32 %v326, %v361
    %v432 = vadd.f32 %v327, %v361
    %v433 = vadd.f32 %v328, %v361
    %v434 = vadd.f32 %v329, %v361
    %v435 = vadd.f32 %v330, %v361
    %v436 = vadd.f32 %v331, %v361
    %v437 = vadd.f32 %v332, %v361
    %v438 = vadd.f32 %v333, %v361
    %v439 = vadd.f32 %v334, %v361
    %v440 = vadd.f32 %v335, %v361
    %v441 = vadd.f32 %v336, %v361
    %v442 = vadd.f32 %v337, %v361
    %v443 = vadd.f32 %v338, %v361
    %v444 = vadd.f32 %v339, %v361
    %v445 = vadd.f32 %v340, %v361
    %v446 = vadd.f32 %v341, %v361
    %v447 = vadd.f32 %v342, %v361
    %v448 = vadd.f32 %v343, %v361
    %v449 = vadd.f32 %v344, %v361
    %v450 = vadd.f32 %v345, %v361
    %v451 = vadd.f32 %v346, %v361
    %v452 = vadd.f32 %v347, %v361
    %v453 = vadd.f32 %v348, %v361
    %v454 = vadd.f32 %v349, %v361
    %v455 = vadd.f32 %v350, %v361
    %v456 = vadd.f32 %v351, %v361
    %v457 = vadd.f32 %v352, %v361
    %v458 = vadd.f32 %v353, %v361
    %v459 = vadd.f32 %v354, %v361
    %v460 = vadd.f32 %v355, %v361
    %v461 = vadd.f32 %v356, %v361
    %v462 = vmax.f32 %v363, 0.0
    %v463 = vmax.f32 %v364, 0.0
    %v464 = vmax.f32 %v365, 0.0
    %v465 = vmax.f32 %v366, 0.0
    %v466 = vmax.f32 %v367, 0.0
    %v467 = vmax.f32 %v368, 0.0
    %v468 = vmax.f32 %v369, 0.0
    %v469 = vmax.f32 %v370, 0.0
    %v470 = vmax.f32 %v371, 0.0
    %v471 = vmax.f32 %v372, 0.0
    %v472 = vmax.f32 %v373, 0.0
    %v473 = vmax.f32 %v374, 0.0
    %v474 = vmax.f32 %v375, 0.0
    %v475 = vmax.f32 %v376, 0.0
    %v476 = vmax.f32 %v377, 0.0
    %v477 = vmax.f32 %v378, 0.0
    %v478 = vmax.f32 %v379, 0.0
    %v479 = vmax.f32 %v380, 0.0
    %v480 = vmax.f32 %v381, 0.0
    %v481 = vmax.f32 %v382, 0.0
    %v482 = vmax.f32 %v383, 0.0
    %v483 = vmax.f32 %v384, 0.0
    %v484 = vmax.f32 %v385, 0.0
    %v485 = vmax.f32 %v386, 0.0
    %v486 = vmax.f32 %v387, 0.0
    %v487 = vmax.f32 %v388, 0.0
    %v488 = vmax.f32 %v389, 0.0
    %v489 = vmax.f32 %v390, 0.0
    %v490 = vmax.f32 %v391, 0.0
    %v491 = vmax.f32 %v392, 0.0
    %v492 = vmax.f32 %v393, 0.0
    %v493 = vmax.f32 %v394, 0.0
    %v494 = vmax.f32 %v395, 0.0
    %v495 = vmax.f32 %v396, 0.0
    %v496 = vmax.f32 %v397, 0.0
    %v497 = vmax.f32 %v398, 0.0
    %v498 = vmax.f32 %v399, 0.0
    %v499 = vmax.f32 %v400, 0.0
    %v500 = vmax.f32 %v401, 0.0
    %v501 = vmax.f32 %v402, 0.0
    %v502 = vmax.f32 %v403, 0.0
    %v503 = vmax.f32 %v404, 0.0
    %v504 = vmax.f32 %v405, 0.0
    %v505 = vmax.f32 %v406, 0.0
    %v506 = vmax.f32 %v407, 0.0
    %v507 = vmax.f32 %v408, 0.0
    %v508 = vmax.f32 %v409, 0.0
    %v509 = vmax.f32 %v410, 0.0
    %v510 = vmax.f32 %v411, 0.0
    %v511 = vmax.f32 %v412, 0.0
    %v512 = vmax.f32 %v413, 0.0
    %v513 = vmax.f32 %v414, 0.0
    %v514 = vmax.f32 %v415, 0.0
    %v515 = vmax.f32 %v416, 0.0
    %v516 = vmax.f32 %v417, 0.0
    %v517 = vmax.f32 %v418, 0.0
    %v518 = vmax.f32 %v419, 0.0
    %v519 = vmax.f32 %v420, 0.0
    %v520 = vmax.f32 %v421, 0.0
    %v521 = vmax.f32 %v422, 0.0
    %v522 = vmax.f32 %v423, 0.0
    %v523 = vmax.f32 %v424, 0.0
    %v524 = vmax.f32 %v425, 0.0
    %v525 = vmax.f32 %v426, 0.0
    %v526 = vmax.f32 %v427, 0.0
    %v527 = vmax.f32 %v428, 0.0
    %v528 = vmax.f32 %v429, 0.0
    %v529 = vmax.f32 %v430, 0.0
    %v530 = vmax.f32 %v431, 0.0
    %v531 = vmax.f32 %v432, 0.0
    %v532 = vmax.f32 %v433, 0.0
    %v533 = vmax.f32 %v434, 0.0
    %v534 = vmax.f32 %v435, 0.0
    %v535 = vmax.f32 %v436, 0.0
    %v536 = vmax.f32 %v437, 0.0
    %v537 = vmax.f32 %v438, 0.0
    %v538 = vmax.f32 %v439, 0.0
    %v539 = vmax.f32 %v440, 0.0
    %v540 = vmax.f32 %v441, 0.0
    %v541 = vmax.f32 %v442, 0.0
    %v542 = vmax.f32 %v443, 0.0
    %v543 = vmax.f32 %v444, 0.0
    %v544 = vmax.f32 %v445, 0.0
    %v545 = vmax.f32 %v446, 0.0
    %v546 = vmax.f32 %v447, 0.0
    %v547 = vmax.f32 %v448, 0.0
    %v548 = vmax.f32 %v449, 0.0
    %v549 = vmax.f32 %v450, 0.0
    %v550 = vmax.f32 %v451, 0.0
    %v551 = vmax.f32 %v452, 0.0
    %v552 = vmax.f32 %v453, 0.0
    %v553 = vmax.f32 %v454, 0.0
    %v554 = vmax.f32 %v455, 0.0
    %v555 = vmax.f32 %v456, 0.0
    %v556 = vmax.f32 %v457, 0.0
    %v557 = vmax.f32 %v458, 0.0
    %v558 = vmax.f32 %v459, 0.0
    %v559 = vmax.f32 %v460, 0.0
    %v560 = vmax.f32 %v461, 0.0
    %vm561 = vcmp.gt.f32.partialorder %v151, -inf
    %vm562 = vcmp.gt.f32.partialorder %v152, -inf
    %vm563 = vcmp.gt.f32.partialorder %v153, -inf
    %vm564 = vcmp.gt.f32.partialorder %v154, -inf
    %vm565 = vcmp.gt.f32.partialorder %v155, -inf
    %vm566 = vcmp.gt.f32.partialorder %v156, -inf
    %vm567 = vcmp.gt.f32.partialorder %v157, -inf
    %vm568 = vcmp.gt.f32.partialorder %v158, -inf
    %vm569 = vcmp.gt.f32.partialorder %v159, -inf
    %vm570 = vcmp.gt.f32.partialorder %v160, -inf
    %vm571 = vcmp.gt.f32.partialorder %v161, -inf
    %vm572 = vcmp.gt.f32.partialorder %v162, -inf
    %vm573 = vcmp.gt.f32.partialorder %v163, -inf
    %vm574 = vcmp.gt.f32.partialorder %v164, -inf
    %vm575 = vcmp.gt.f32.partialorder %v165, -inf
    %vm576 = vcmp.gt.f32.partialorder %v166, -inf
    %vm577 = vcmp.gt.f32.partialorder %v167, -inf
    %vm578 = vcmp.gt.f32.partialorder %v168, -inf
    %vm579 = vcmp.gt.f32.partialorder %v169, -inf
    %vm580 = vcmp.gt.f32.partialorder %v170, -inf
    %vm581 = vcmp.gt.f32.partialorder %v171, -inf
    %vm582 = vcmp.gt.f32.partialorder %v172, -inf
    %vm583 = vcmp.gt.f32.partialorder %v173, -inf
    %vm584 = vcmp.gt.f32.partialorder %v174, -inf
    %vm585 = vcmp.gt.f32.partialorder %v175, -inf
    %vm586 = vcmp.gt.f32.partialorder %v176, -inf
    %vm587 = vcmp.gt.f32.partialorder %v177, -inf
    %vm588 = vcmp.gt.f32.partialorder %v178, -inf
    %vm589 = vcmp.gt.f32.partialorder %v179, -inf
    %vm590 = vcmp.gt.f32.partialorder %v180, -inf
    %vm591 = vcmp.gt.f32.partialorder %v181, -inf
    %vm592 = vcmp.gt.f32.partialorder %v182, -inf
    %vm593 = vcmp.gt.f32.partialorder %v183, -inf
    %vm594 = vcmp.gt.f32.partialorder %v184, -inf
    %vm595 = vcmp.gt.f32.partialorder %v185, -inf
    %vm596 = vcmp.gt.f32.partialorder %v186, -inf
    %vm597 = vcmp.gt.f32.partialorder %v187, -inf
    %vm598 = vcmp.gt.f32.partialorder %v188, -inf
    %vm599 = vcmp.gt.f32.partialorder %v189, -inf
    %vm600 = vcmp.gt.f32.partialorder %v190, -inf
    %vm601 = vcmp.gt.f32.partialorder %v191, -inf
    %vm602 = vcmp.gt.f32.partialorder %v192, -inf
    %vm603 = vcmp.gt.f32.partialorder %v193, -inf
    %vm604 = vcmp.gt.f32.partialorder %v194, -inf
    %vm605 = vcmp.gt.f32.partialorder %v195, -inf
    %vm606 = vcmp.gt.f32.partialorder %v196, -inf
    %vm607 = vcmp.gt.f32.partialorder %v197, -inf
    %vm608 = vcmp.gt.f32.partialorder %v198, -inf
    %vm609 = vcmp.gt.f32.partialorder %v199, -inf
    %vm610 = vcmp.gt.f32.partialorder %v200, -inf
    %vm611 = vcmp.gt.f32.partialorder %v201, -inf
    %vm612 = vcmp.gt.f32.partialorder %v202, -inf
    %vm613 = vcmp.gt.f32.partialorder %v203, -inf
    %vm614 = vcmp.gt.f32.partialorder %v204, -inf
    %vm615 = vcmp.gt.f32.partialorder %v205, -inf
    %vm616 = vcmp.gt.f32.partialorder %v206, -inf
    %vm617 = vcmp.gt.f32.partialorder %v207, -inf
    %vm618 = vcmp.gt.f32.partialorder %v208, -inf
    %vm619 = vcmp.gt.f32.partialorder %v209, -inf
    %vm620 = vcmp.gt.f32.partialorder %v210, -inf
    %vm621 = vcmp.gt.f32.partialorder %v211, -inf
    %vm622 = vcmp.gt.f32.partialorder %v212, -inf
    %vm623 = vcmp.gt.f32.partialorder %v213, -inf
    %vm624 = vcmp.gt.f32.partialorder %v214, -inf
    %vm625 = vcmp.gt.f32.partialorder %v215, -inf
    %vm626 = vcmp.gt.f32.partialorder %v216, -inf
    %vm627 = vcmp.gt.f32.partialorder %v217, -inf
    %vm628 = vcmp.gt.f32.partialorder %v218, -inf
    %vm629 = vcmp.gt.f32.partialorder %v219, -inf
    %vm630 = vcmp.gt.f32.partialorder %v220, -inf
    %vm631 = vcmp.gt.f32.partialorder %v221, -inf
    %vm632 = vcmp.gt.f32.partialorder %v222, -inf
    %vm633 = vcmp.gt.f32.partialorder %v223, -inf
    %vm634 = vcmp.gt.f32.partialorder %v224, -inf
    %vm635 = vcmp.gt.f32.partialorder %v225, -inf
    %vm636 = vcmp.gt.f32.partialorder %v226, -inf
    %vm637 = vcmp.gt.f32.partialorder %v227, -inf
    %vm638 = vcmp.gt.f32.partialorder %v228, -inf
    %vm639 = vcmp.gt.f32.partialorder %v229, -inf
    %vm640 = vcmp.gt.f32.partialorder %v230, -inf
    %vm641 = vcmp.gt.f32.partialorder %v231, -inf
    %vm642 = vcmp.gt.f32.partialorder %v232, -inf
    %vm643 = vcmp.gt.f32.partialorder %v233, -inf
    %vm644 = vcmp.gt.f32.partialorder %v234, -inf
    %vm645 = vcmp.gt.f32.partialorder %v235, -inf
    %vm646 = vcmp.gt.f32.partialorder %v236, -inf
    %vm647 = vcmp.gt.f32.partialorder %v237, -inf
    %vm648 = vcmp.gt.f32.partialorder %v238, -inf
    %vm649 = vcmp.gt.f32.partialorder %v239, -inf
    %vm650 = vcmp.gt.f32.partialorder %v240, -inf
    %vm651 = vcmp.gt.f32.partialorder %v241, -inf
    %vm652 = vcmp.gt.f32.partialorder %v242, -inf
    %vm653 = vcmp.gt.f32.partialorder %v243, -inf
    %vm654 = vcmp.gt.f32.partialorder %v244, -inf
    %vm655 = vcmp.gt.f32.partialorder %v245, -inf
    %vm656 = vcmp.gt.f32.partialorder %v246, -inf
    %vm657 = vcmp.gt.f32.partialorder %v247, -inf
    %vm658 = vcmp.gt.f32.partialorder %v248, -inf
    %vm659 = vcmp.gt.f32.partialorder %v249, -inf
    %v660 = vsel %vm561, %v462, 0.0
    %v661 = vsel %vm562, %v463, 0.0
    %v662 = vsel %vm563, %v464, 0.0
    %v663 = vsel %vm564, %v465, 0.0
    %v664 = vsel %vm565, %v466, 0.0
    %v665 = vsel %vm566, %v467, 0.0
    %v666 = vsel %vm567, %v468, 0.0
    %v667 = vsel %vm568, %v469, 0.0
    %v668 = vsel %vm569, %v470, 0.0
    %v669 = vsel %vm570, %v471, 0.0
    %v670 = vsel %vm571, %v472, 0.0
    %v671 = vsel %vm572, %v473, 0.0
    %v672 = vsel %vm573, %v474, 0.0
    %v673 = vsel %vm574, %v475, 0.0
    %v674 = vsel %vm575, %v476, 0.0
    %v675 = vsel %vm576, %v477, 0.0
    %v676 = vsel %vm577, %v478, 0.0
    %v677 = vsel %vm578, %v479, 0.0
    %v678 = vsel %vm579, %v480, 0.0
    %v679 = vsel %vm580, %v481, 0.0
    %v680 = vsel %vm581, %v482, 0.0
    %v681 = vsel %vm582, %v483, 0.0
    %v682 = vsel %vm583, %v484, 0.0
    %v683 = vsel %vm584, %v485, 0.0
    %v684 = vsel %vm585, %v486, 0.0
    %v685 = vsel %vm586, %v487, 0.0
    %v686 = vsel %vm587, %v488, 0.0
    %v687 = vsel %vm588, %v489, 0.0
    %v688 = vsel %vm589, %v490, 0.0
    %v689 = vsel %vm590, %v491, 0.0
    %v690 = vsel %vm591, %v492, 0.0
    %v691 = vsel %vm592, %v493, 0.0
    %v692 = vsel %vm593, %v494, 0.0
    %v693 = vsel %vm594, %v495, 0.0
    %v694 = vsel %vm595, %v496, 0.0
    %v695 = vsel %vm596, %v497, 0.0
    %v696 = vsel %vm597, %v498, 0.0
    %v697 = vsel %vm598, %v499, 0.0
    %v698 = vsel %vm599, %v500, 0.0
    %v699 = vsel %vm600, %v501, 0.0
    %v700 = vsel %vm601, %v502, 0.0
    %v701 = vsel %vm602, %v503, 0.0
    %v702 = vsel %vm603, %v504, 0.0
    %v703 = vsel %vm604, %v505, 0.0
    %v704 = vsel %vm605, %v506, 0.0
    %v705 = vsel %vm606, %v507, 0.0
    %v706 = vsel %vm607, %v508, 0.0
    %v707 = vsel %vm608, %v509, 0.0
    %v708 = vsel %vm609, %v510, 0.0
    %v709 = vsel %vm610, %v511, 0.0
    %v710 = vsel %vm611, %v512, 0.0
    %v711 = vsel %vm612, %v513, 0.0
    %v712 = vsel %vm613, %v514, 0.0
    %v713 = vsel %vm614, %v515, 0.0
    %v714 = vsel %vm615, %v516, 0.0
    %v715 = vsel %vm616, %v517, 0.0
    %v716 = vsel %vm617, %v518, 0.0
    %v717 = vsel %vm618, %v519, 0.0
    %v718 = vsel %vm619, %v520, 0.0
    %v719 = vsel %vm620, %v521, 0.0
    %v720 = vsel %vm621, %v522, 0.0
    %v721 = vsel %vm622, %v523, 0.0
    %v722 = vsel %vm623, %v524, 0.0
    %v723 = vsel %vm624, %v525, 0.0
    %v724 = vsel %vm625, %v526, 0.0
    %v725 = vsel %vm626, %v527, 0.0
    %v726 = vsel %vm627, %v528, 0.0
    %v727 = vsel %vm628, %v529, 0.0
    %v728 = vsel %vm629, %v530, 0.0
    %v729 = vsel %vm630, %v531, 0.0
    %v730 = vsel %vm631, %v532, 0.0
    %v731 = vsel %vm632, %v533, 0.0
    %v732 = vsel %vm633, %v534, 0.0
    %v733 = vsel %vm634, %v535, 0.0
    %v734 = vsel %vm635, %v536, 0.0
    %v735 = vsel %vm636, %v537, 0.0
    %v736 = vsel %vm637, %v538, 0.0
    %v737 = vsel %vm638, %v539, 0.0
    %v738 = vsel %vm639, %v540, 0.0
    %v739 = vsel %vm640, %v541, 0.0
    %v740 = vsel %vm641, %v542, 0.0
    %v741 = vsel %vm642, %v543, 0.0
    %v742 = vsel %vm643, %v544, 0.0
    %v743 = vsel %vm644, %v545, 0.0
    %v744 = vsel %vm645, %v546, 0.0
    %v745 = vsel %vm646, %v547, 0.0
    %v746 = vsel %vm647, %v548, 0.0
    %v747 = vsel %vm648, %v549, 0.0
    %v748 = vsel %vm649, %v550, 0.0
    %v749 = vsel %vm650, %v551, 0.0
    %v750 = vsel %vm651, %v552, 0.0
    %v751 = vsel %vm652, %v553, 0.0
    %v752 = vsel %vm653, %v554, 0.0
    %v753 = vsel %vm654, %v555, 0.0
    %v754 = vsel %vm655, %v556, 0.0
    %v755 = vsel %vm656, %v557, 0.0
    %v756 = vsel %vm657, %v558, 0.0
    %v757 = vsel %vm658, %v559, 0.0
    %v758 = vsel %vm659, %v560, 0.0
    %791 = vrot.lane.b32.xlu0 %v660, 64
    %v792 = vpop.permute.xlu0 %791
    %793 = vrot.lane.b32.xlu0 %v661, 64
    %v794 = vpop.permute.xlu0 %793
    %795 = vrot.lane.b32.xlu0 %v666, 64
    %v796 = vpop.permute.xlu0 %795
    %797 = vrot.lane.b32.xlu0 %v667, 64
    %v798 = vpop.permute.xlu0 %797
    %799 = vrot.lane.b32.xlu0 %v672, 64
    %v800 = vpop.permute.xlu0 %799
    %801 = vrot.lane.b32.xlu0 %v673, 64
    %v802 = vpop.permute.xlu0 %801
    %803 = vrot.lane.b32.xlu0 %v678, 64
    %v804 = vpop.permute.xlu0 %803
    %805 = vrot.lane.b32.xlu0 %v679, 64
    %v806 = vpop.permute.xlu0 %805
    %807 = vrot.lane.b32.xlu0 %v684, 64
    %v808 = vpop.permute.xlu0 %807
    %809 = vrot.lane.b32.xlu0 %v685, 64
    %v810 = vpop.permute.xlu0 %809
    %811 = vrot.lane.b32.xlu0 %v690, 64
    %v812 = vpop.permute.xlu0 %811
    %813 = vrot.lane.b32.xlu0 %v691, 64
    %v814 = vpop.permute.xlu0 %813
    %815 = vrot.lane.b32.xlu0 %v696, 64
    %v816 = vpop.permute.xlu0 %815
    %817 = vrot.lane.b32.xlu0 %v697, 64
    %v818 = vpop.permute.xlu0 %817
    %819 = vrot.lane.b32.xlu0 %v702, 64
    %v820 = vpop.permute.xlu0 %819
    %821 = vrot.lane.b32.xlu0 %v703, 64
    %v822 = vpop.permute.xlu0 %821
    %823 = vrot.lane.b32.xlu0 %v708, 64
    %v824 = vpop.permute.xlu0 %823
    %825 = vrot.lane.b32.xlu0 %v709, 64
    %v826 = vpop.permute.xlu0 %825
    %827 = vrot.lane.b32.xlu0 %v714, 64
    %v828 = vpop.permute.xlu0 %827
    %829 = vrot.lane.b32.xlu0 %v715, 64
    %v830 = vpop.permute.xlu0 %829
    %831 = vrot.lane.b32.xlu0 %v720, 64
    %v832 = vpop.permute.xlu0 %831
    %833 = vrot.lane.b32.xlu0 %v721, 64
    %v834 = vpop.permute.xlu0 %833
    %835 = vrot.lane.b32.xlu0 %v726, 64
    %v836 = vpop.permute.xlu0 %835
    %837 = vrot.lane.b32.xlu0 %v727, 64
    %v838 = vpop.permute.xlu0 %837
    %839 = vrot.lane.b32.xlu0 %v732, 64
    %v840 = vpop.permute.xlu0 %839
    %841 = vrot.lane.b32.xlu0 %v733, 64
    %v842 = vpop.permute.xlu0 %841
    %843 = vrot.lane.b32.xlu0 %v738, 64
    %v844 = vpop.permute.xlu0 %843
    %845 = vrot.lane.b32.xlu0 %v739, 64
    %v846 = vpop.permute.xlu0 %845
    %847 = vrot.lane.b32.xlu0 %v744, 64
    %v848 = vpop.permute.xlu0 %847
    %849 = vrot.lane.b32.xlu0 %v745, 64
    %v850 = vpop.permute.xlu0 %849
    %851 = vrot.lane.b32.xlu0 %v750, 64
    %v852 = vpop.permute.xlu0 %851
    %853 = vrot.lane.b32.xlu0 %v751, 64
    %v854 = vpop.permute.xlu0 %853
    %v887 = vmax.f32 %v660, %v792
    %v888 = vmax.f32 %v661, %v794
    %v889 = vmax.f32 %v666, %v796
    %v890 = vmax.f32 %v667, %v798
    %v891 = vmax.f32 %v672, %v800
    %v892 = vmax.f32 %v673, %v802
    %v893 = vmax.f32 %v678, %v804
    %v894 = vmax.f32 %v679, %v806
    %v895 = vmax.f32 %v684, %v808
    %v896 = vmax.f32 %v685, %v810
    %v897 = vmax.f32 %v690, %v812
    %v898 = vmax.f32 %v691, %v814
    %v899 = vmax.f32 %v696, %v816
    %v900 = vmax.f32 %v697, %v818
    %v901 = vmax.f32 %v702, %v820
    %v902 = vmax.f32 %v703, %v822
    %v903 = vmax.f32 %v708, %v824
    %v904 = vmax.f32 %v709, %v826
    %v905 = vmax.f32 %v714, %v828
    %v906 = vmax.f32 %v715, %v830
    %v907 = vmax.f32 %v720, %v832
    %v908 = vmax.f32 %v721, %v834
    %v909 = vmax.f32 %v726, %v836
    %v910 = vmax.f32 %v727, %v838
    %v911 = vmax.f32 %v732, %v840
    %v912 = vmax.f32 %v733, %v842
    %v913 = vmax.f32 %v738, %v844
    %v914 = vmax.f32 %v739, %v846
    %v915 = vmax.f32 %v744, %v848
    %v916 = vmax.f32 %v745, %v850
    %v917 = vmax.f32 %v750, %v852
    %v918 = vmax.f32 %v751, %v854
    %vm935 = vcmask 1046528
    %v936 = vrot.slane %v660, 1
    %v937 = vrot.slane %v661, 1
    %v938 = vsel %vm935, %v936, %v937
    %v939 = vrot.slane %v662, 1
    %v940 = vsel %vm935, %v937, %v939
    %v941 = vrot.slane %v666, 1
    %v942 = vrot.slane %v667, 1
    %v943 = vsel %vm935, %v941, %v942
    %v944 = vrot.slane %v668, 1
    %v945 = vsel %vm935, %v942, %v944
    %v946 = vrot.slane %v672, 1
    %v947 = vrot.slane %v673, 1
    %v948 = vsel %vm935, %v946, %v947
    %v949 = vrot.slane %v674, 1
    %v950 = vsel %vm935, %v947, %v949
    %v951 = vrot.slane %v678, 1
    %v952 = vrot.slane %v679, 1
    %v953 = vsel %vm935, %v951, %v952
    %v954 = vrot.slane %v680, 1
    %v955 = vsel %vm935, %v952, %v954
    %v956 = vrot.slane %v684, 1
    %v957 = vrot.slane %v685, 1
    %v958 = vsel %vm935, %v956, %v957
    %v959 = vrot.slane %v686, 1
    %v960 = vsel %vm935, %v957, %v959
    %v961 = vrot.slane %v690, 1
    %v962 = vrot.slane %v691, 1
    %v963 = vsel %vm935, %v961, %v962
    %v964 = vrot.slane %v692, 1
    %v965 = vsel %vm935, %v962, %v964
    %v966 = vrot.slane %v696, 1
    %v967 = vrot.slane %v697, 1
    %v968 = vsel %vm935, %v966, %v967
    %v969 = vrot.slane %v698, 1
    %v970 = vsel %vm935, %v967, %v969
    %v971 = vrot.slane %v702, 1
    %v972 = vrot.slane %v703, 1
    %v973 = vsel %vm935, %v971, %v972
    %v974 = vrot.slane %v704, 1
    %v975 = vsel %vm935, %v972, %v974
    %v976 = vrot.slane %v708, 1
    %v977 = vrot.slane %v709, 1
    %v978 = vsel %vm935, %v976, %v977
    %v979 = vrot.slane %v710, 1
    %v980 = vsel %vm935, %v977, %v979
    %v981 = vrot.slane %v714, 1
    %v982 = vrot.slane %v715, 1
    %v983 = vsel %vm935, %v981, %v982
    %v984 = vrot.slane %v716, 1
    %v985 = vsel %vm935, %v982, %v984
    %v986 = vrot.slane %v720, 1
    %v987 = vrot.slane %v721, 1
    %v988 = vsel %vm935, %v986, %v987
    %v989 = vrot.slane %v722, 1
    %v990 = vsel %vm935, %v987, %v989
    %v991 = vrot.slane %v726, 1
    %v992 = vrot.slane %v727, 1
    %v993 = vsel %vm935, %v991, %v992
    %v994 = vrot.slane %v728, 1
    %v995 = vsel %vm935, %v992, %v994
    %v996 = vrot.slane %v732, 1
    %v997 = vrot.slane %v733, 1
    %v998 = vsel %vm935, %v996, %v997
    %v999 = vrot.slane %v734, 1
    %v1000 = vsel %vm935, %v997, %v999
    %v1001 = vrot.slane %v738, 1
    %v1002 = vrot.slane %v739, 1
    %v1003 = vsel %vm935, %v1001, %v1002
    %v1004 = vrot.slane %v740, 1
    %v1005 = vsel %vm935, %v1002, %v1004
    %v1006 = vrot.slane %v744, 1
    %v1007 = vrot.slane %v745, 1
    %v1008 = vsel %vm935, %v1006, %v1007
    %v1009 = vrot.slane %v746, 1
    %v1010 = vsel %vm935, %v1007, %v1009
    %v1011 = vrot.slane %v750, 1
    %v1012 = vrot.slane %v751, 1
    %v1013 = vsel %vm935, %v1011, %v1012
    %v1014 = vrot.slane %v752, 1
    %v1015 = vsel %vm935, %v1012, %v1014
    %v1048 = vmax.f32 %v887, %v938
    %v1049 = vmax.f32 %v888, %v940
    %v1050 = vmax.f32 %v889, %v943
    %v1051 = vmax.f32 %v890, %v945
    %v1052 = vmax.f32 %v891, %v948
    %v1053 = vmax.f32 %v892, %v950
    %v1054 = vmax.f32 %v893, %v953
    %v1055 = vmax.f32 %v894, %v955
    %v1056 = vmax.f32 %v895, %v958
    %v1057 = vmax.f32 %v896, %v960
    %v1058 = vmax.f32 %v897, %v963
    %v1059 = vmax.f32 %v898, %v965
    %v1060 = vmax.f32 %v899, %v968
    %v1061 = vmax.f32 %v900, %v970
    %v1062 = vmax.f32 %v901, %v973
    %v1063 = vmax.f32 %v902, %v975
    %v1064 = vmax.f32 %v903, %v978
    %v1065 = vmax.f32 %v904, %v980
    %v1066 = vmax.f32 %v905, %v983
    %v1067 = vmax.f32 %v906, %v985
    %v1068 = vmax.f32 %v907, %v988
    %v1069 = vmax.f32 %v908, %v990
    %v1070 = vmax.f32 %v909, %v993
    %v1071 = vmax.f32 %v910, %v995
    %v1072 = vmax.f32 %v911, %v998
    %v1073 = vmax.f32 %v912, %v1000
    %v1074 = vmax.f32 %v913, %v1003
    %v1075 = vmax.f32 %v914, %v1005
    %v1076 = vmax.f32 %v915, %v1008
    %v1077 = vmax.f32 %v916, %v1010
    %v1078 = vmax.f32 %v917, %v1013
    %v1079 = vmax.f32 %v918, %v1015
    %1112 = vrot.lane.b32.xlu0 %v663, 64
    %v1113 = vpop.permute.xlu0 %1112
    %1114 = vrot.lane.b32.xlu0 %v664, 64
    %v1115 = vpop.permute.xlu0 %1114
    %1116 = vrot.lane.b32.xlu0 %v669, 64
    %v1117 = vpop.permute.xlu0 %1116
    %1118 = vrot.lane.b32.xlu0 %v670, 64
    %v1119 = vpop.permute.xlu0 %1118
    %1120 = vrot.lane.b32.xlu0 %v675, 64
    %v1121 = vpop.permute.xlu0 %1120
    %1122 = vrot.lane.b32.xlu0 %v676, 64
    %v1123 = vpop.permute.xlu0 %1122
    %1124 = vrot.lane.b32.xlu0 %v681, 64
    %v1125 = vpop.permute.xlu0 %1124
    %1126 = vrot.lane.b32.xlu0 %v682, 64
    %v1127 = vpop.permute.xlu0 %1126
    %1128 = vrot.lane.b32.xlu0 %v687, 64
    %v1129 = vpop.permute.xlu0 %1128
    %1130 = vrot.lane.b32.xlu0 %v688, 64
    %v1131 = vpop.permute.xlu0 %1130
    %1132 = vrot.lane.b32.xlu0 %v693, 64
    %v1133 = vpop.permute.xlu0 %1132
    %1134 = vrot.lane.b32.xlu0 %v694, 64
    %v1135 = vpop.permute.xlu0 %1134
    %1136 = vrot.lane.b32.xlu0 %v699, 64
    %v1137 = vpop.permute.xlu0 %1136
    %1138 = vrot.lane.b32.xlu0 %v700, 64
    %v1139 = vpop.permute.xlu0 %1138
    %1140 = vrot.lane.b32.xlu0 %v705, 64
    %v1141 = vpop.permute.xlu0 %1140
    %1142 = vrot.lane.b32.xlu0 %v706, 64
    %v1143 = vpop.permute.xlu0 %1142
    %1144 = vrot.lane.b32.xlu0 %v711, 64
    %v1145 = vpop.permute.xlu0 %1144
    %1146 = vrot.lane.b32.xlu0 %v712, 64
    %v1147 = vpop.permute.xlu0 %1146
    %1148 = vrot.lane.b32.xlu0 %v717, 64
    %v1149 = vpop.permute.xlu0 %1148
    %1150 = vrot.lane.b32.xlu0 %v718, 64
    %v1151 = vpop.permute.xlu0 %1150
    %1152 = vrot.lane.b32.xlu0 %v723, 64
    %v1153 = vpop.permute.xlu0 %1152
    %1154 = vrot.lane.b32.xlu0 %v724, 64
    %v1155 = vpop.permute.xlu0 %1154
    %1156 = vrot.lane.b32.xlu0 %v729, 64
    %v1157 = vpop.permute.xlu0 %1156
    %1158 = vrot.lane.b32.xlu0 %v730, 64
    %v1159 = vpop.permute.xlu0 %1158
    %1160 = vrot.lane.b32.xlu0 %v735, 64
    %v1161 = vpop.permute.xlu0 %1160
    %1162 = vrot.lane.b32.xlu0 %v736, 64
    %v1163 = vpop.permute.xlu0 %1162
    %1164 = vrot.lane.b32.xlu0 %v741, 64
    %v1165 = vpop.permute.xlu0 %1164
    %1166 = vrot.lane.b32.xlu0 %v742, 64
    %v1167 = vpop.permute.xlu0 %1166
    %1168 = vrot.lane.b32.xlu0 %v747, 64
    %v1169 = vpop.permute.xlu0 %1168
    %1170 = vrot.lane.b32.xlu0 %v748, 64
    %v1171 = vpop.permute.xlu0 %1170
    %1172 = vrot.lane.b32.xlu0 %v753, 64
    %v1173 = vpop.permute.xlu0 %1172
    %1174 = vrot.lane.b32.xlu0 %v754, 64
    %v1175 = vpop.permute.xlu0 %1174
    %v1208 = vmax.f32 %v663, %v1113
    %v1209 = vmax.f32 %v664, %v1115
    %v1210 = vmax.f32 %v669, %v1117
    %v1211 = vmax.f32 %v670, %v1119
    %v1212 = vmax.f32 %v675, %v1121
    %v1213 = vmax.f32 %v676, %v1123
    %v1214 = vmax.f32 %v681, %v1125
    %v1215 = vmax.f32 %v682, %v1127
    %v1216 = vmax.f32 %v687, %v1129
    %v1217 = vmax.f32 %v688, %v1131
    %v1218 = vmax.f32 %v693, %v1133
    %v1219 = vmax.f32 %v694, %v1135
    %v1220 = vmax.f32 %v699, %v1137
    %v1221 = vmax.f32 %v700, %v1139
    %v1222 = vmax.f32 %v705, %v1141
    %v1223 = vmax.f32 %v706, %v1143
    %v1224 = vmax.f32 %v711, %v1145
    %v1225 = vmax.f32 %v712, %v1147
    %v1226 = vmax.f32 %v717, %v1149
    %v1227 = vmax.f32 %v718, %v1151
    %v1228 = vmax.f32 %v723, %v1153
    %v1229 = vmax.f32 %v724, %v1155
    %v1230 = vmax.f32 %v729, %v1157
    %v1231 = vmax.f32 %v730, %v1159
    %v1232 = vmax.f32 %v735, %v1161
    %v1233 = vmax.f32 %v736, %v1163
    %v1234 = vmax.f32 %v741, %v1165
    %v1235 = vmax.f32 %v742, %v1167
    %v1236 = vmax.f32 %v747, %v1169
    %v1237 = vmax.f32 %v748, %v1171
    %v1238 = vmax.f32 %v753, %v1173
    %v1239 = vmax.f32 %v754, %v1175
    %v1256 = vrot.slane %v663, 1
    %v1257 = vrot.slane %v664, 1
    %v1258 = vsel %vm935, %v1256, %v1257
    %v1259 = vrot.slane %v665, 1
    %v1260 = vsel %vm935, %v1257, %v1259
    %v1261 = vrot.slane %v669, 1
    %v1262 = vrot.slane %v670, 1
    %v1263 = vsel %vm935, %v1261, %v1262
    %v1264 = vrot.slane %v671, 1
    %v1265 = vsel %vm935, %v1262, %v1264
    %v1266 = vrot.slane %v675, 1
    %v1267 = vrot.slane %v676, 1
    %v1268 = vsel %vm935, %v1266, %v1267
    %v1269 = vrot.slane %v677, 1
    %v1270 = vsel %vm935, %v1267, %v1269
    %v1271 = vrot.slane %v681, 1
    %v1272 = vrot.slane %v682, 1
    %v1273 = vsel %vm935, %v1271, %v1272
    %v1274 = vrot.slane %v683, 1
    %v1275 = vsel %vm935, %v1272, %v1274
    %v1276 = vrot.slane %v687, 1
    %v1277 = vrot.slane %v688, 1
    %v1278 = vsel %vm935, %v1276, %v1277
    %v1279 = vrot.slane %v689, 1
    %v1280 = vsel %vm935, %v1277, %v1279
    %v1281 = vrot.slane %v693, 1
    %v1282 = vrot.slane %v694, 1
    %v1283 = vsel %vm935, %v1281, %v1282
    %v1284 = vrot.slane %v695, 1
    %v1285 = vsel %vm935, %v1282, %v1284
    %v1286 = vrot.slane %v699, 1
    %v1287 = vrot.slane %v700, 1
    %v1288 = vsel %vm935, %v1286, %v1287
    %v1289 = vrot.slane %v701, 1
    %v1290 = vsel %vm935, %v1287, %v1289
    %v1291 = vrot.slane %v705, 1
    %v1292 = vrot.slane %v706, 1
    %v1293 = vsel %vm935, %v1291, %v1292
    %v1294 = vrot.slane %v707, 1
    %v1295 = vsel %vm935, %v1292, %v1294
    %v1296 = vrot.slane %v711, 1
    %v1297 = vrot.slane %v712, 1
    %v1298 = vsel %vm935, %v1296, %v1297
    %v1299 = vrot.slane %v713, 1
    %v1300 = vsel %vm935, %v1297, %v1299
    %v1301 = vrot.slane %v717, 1
    %v1302 = vrot.slane %v718, 1
    %v1303 = vsel %vm935, %v1301, %v1302
    %v1304 = vrot.slane %v719, 1
    %v1305 = vsel %vm935, %v1302, %v1304
    %v1306 = vrot.slane %v723, 1
    %v1307 = vrot.slane %v724, 1
    %v1308 = vsel %vm935, %v1306, %v1307
    %v1309 = vrot.slane %v725, 1
    %v1310 = vsel %vm935, %v1307, %v1309
    %v1311 = vrot.slane %v729, 1
    %v1312 = vrot.slane %v730, 1
    %v1313 = vsel %vm935, %v1311, %v1312
    %v1314 = vrot.slane %v731, 1
    %v1315 = vsel %vm935, %v1312, %v1314
    %v1316 = vrot.slane %v735, 1
    %v1317 = vrot.slane %v736, 1
    %v1318 = vsel %vm935, %v1316, %v1317
    %v1319 = vrot.slane %v737, 1
    %v1320 = vsel %vm935, %v1317, %v1319
    %v1321 = vrot.slane %v741, 1
    %v1322 = vrot.slane %v742, 1
    %v1323 = vsel %vm935, %v1321, %v1322
    %v1324 = vrot.slane %v743, 1
    %v1325 = vsel %vm935, %v1322, %v1324
    %v1326 = vrot.slane %v747, 1
    %v1327 = vrot.slane %v748, 1
    %v1328 = vsel %vm935, %v1326, %v1327
    %v1329 = vrot.slane %v749, 1
    %v1330 = vsel %vm935, %v1327, %v1329
    %v1331 = vrot.slane %v753, 1
    %v1332 = vrot.slane %v754, 1
    %v1333 = vsel %vm935, %v1331, %v1332
    %v1334 = vrot.slane %v755, 1
    %v1335 = vsel %vm935, %v1332, %v1334
    %v1368 = vmax.f32 %v1208, %v1258
    %v1369 = vmax.f32 %v1209, %v1260
    %v1370 = vmax.f32 %v1210, %v1263
    %v1371 = vmax.f32 %v1211, %v1265
    %v1372 = vmax.f32 %v1212, %v1268
    %v1373 = vmax.f32 %v1213, %v1270
    %v1374 = vmax.f32 %v1214, %v1273
    %v1375 = vmax.f32 %v1215, %v1275
    %v1376 = vmax.f32 %v1216, %v1278
    %v1377 = vmax.f32 %v1217, %v1280
    %v1378 = vmax.f32 %v1218, %v1283
    %v1379 = vmax.f32 %v1219, %v1285
    %v1380 = vmax.f32 %v1220, %v1288
    %v1381 = vmax.f32 %v1221, %v1290
    %v1382 = vmax.f32 %v1222, %v1293
    %v1383 = vmax.f32 %v1223, %v1295
    %v1384 = vmax.f32 %v1224, %v1298
    %v1385 = vmax.f32 %v1225, %v1300
    %v1386 = vmax.f32 %v1226, %v1303
    %v1387 = vmax.f32 %v1227, %v1305
    %v1388 = vmax.f32 %v1228, %v1308
    %v1389 = vmax.f32 %v1229, %v1310
    %v1390 = vmax.f32 %v1230, %v1313
    %v1391 = vmax.f32 %v1231, %v1315
    %v1392 = vmax.f32 %v1232, %v1318
    %v1393 = vmax.f32 %v1233, %v1320
    %v1394 = vmax.f32 %v1234, %v1323
    %v1395 = vmax.f32 %v1235, %v1325
    %v1396 = vmax.f32 %v1236, %v1328
    %v1397 = vmax.f32 %v1237, %v1330
    %v1398 = vmax.f32 %v1238, %v1333
    %v1399 = vmax.f32 %v1239, %v1335
    %1402 = vrot.lane.b32.xlu0 %v756, 64
    %v1403 = vpop.permute.xlu0 %1402
    %1404 = vrot.lane.b32.xlu0 %v757, 64
    %v1405 = vpop.permute.xlu0 %1404
    %v1408 = vmax.f32 %v756, %v1403
    %v1409 = vmax.f32 %v757, %v1405
    %v1411 = vrot.slane %v756, 1
    %v1412 = vrot.slane %v757, 1
    %v1413 = vsel %vm935, %v1411, %v1412
    %v1414 = vrot.slane %v758, 1
    %v1415 = vsel %vm935, %v1412, %v1414
    %v1418 = vmax.f32 %v1408, %v1413
    %v1419 = vmax.f32 %v1409, %v1415
    %v1420 = vmax.f32 %v1048, %v1368
    %v1421 = vmax.f32 %v1049, %v1369
    %v1422 = vmax.f32 %v1050, %v1370
    %v1423 = vmax.f32 %v1051, %v1371
    %v1424 = vmax.f32 %v1052, %v1372
    %v1425 = vmax.f32 %v1053, %v1373
    %v1426 = vmax.f32 %v1054, %v1374
    %v1427 = vmax.f32 %v1055, %v1375
    %v1428 = vmax.f32 %v1056, %v1376
    %v1429 = vmax.f32 %v1057, %v1377
    %v1430 = vmax.f32 %v1058, %v1378
    %v1431 = vmax.f32 %v1059, %v1379
    %v1432 = vmax.f32 %v1060, %v1380
    %v1433 = vmax.f32 %v1061, %v1381
    %v1434 = vmax.f32 %v1062, %v1382
    %v1435 = vmax.f32 %v1063, %v1383
    %v1436 = vmax.f32 %v1064, %v1384
    %v1437 = vmax.f32 %v1065, %v1385
    %v1438 = vmax.f32 %v1066, %v1386
    %v1439 = vmax.f32 %v1067, %v1387
    %v1440 = vmax.f32 %v1068, %v1388
    %v1441 = vmax.f32 %v1069, %v1389
    %v1442 = vmax.f32 %v1070, %v1390
    %v1443 = vmax.f32 %v1071, %v1391
    %v1444 = vmax.f32 %v1072, %v1392
    %v1445 = vmax.f32 %v1073, %v1393
    %v1446 = vmax.f32 %v1074, %v1394
    %v1447 = vmax.f32 %v1075, %v1395
    %v1448 = vmax.f32 %v1076, %v1396
    %v1449 = vmax.f32 %v1077, %v1397
    %v1450 = vmax.f32 %v1078, %v1398
    %v1451 = vmax.f32 %v1079, %v1399
    %v1452 = vmax.f32 %v1420, %v1050
    %v1453 = vmax.f32 %v1421, %v1051
    %v1454 = vmax.f32 %v1422, %v1052
    %v1455 = vmax.f32 %v1423, %v1053
    %v1456 = vmax.f32 %v1424, %v1054
    %v1457 = vmax.f32 %v1425, %v1055
    %v1458 = vmax.f32 %v1426, %v1056
    %v1459 = vmax.f32 %v1427, %v1057
    %v1460 = vmax.f32 %v1428, %v1058
    %v1461 = vmax.f32 %v1429, %v1059
    %v1462 = vmax.f32 %v1430, %v1060
    %v1463 = vmax.f32 %v1431, %v1061
    %v1464 = vmax.f32 %v1432, %v1062
    %v1465 = vmax.f32 %v1433, %v1063
    %v1466 = vmax.f32 %v1434, %v1064
    %v1467 = vmax.f32 %v1435, %v1065
    %v1468 = vmax.f32 %v1436, %v1066
    %v1469 = vmax.f32 %v1437, %v1067
    %v1470 = vmax.f32 %v1438, %v1068
    %v1471 = vmax.f32 %v1439, %v1069
    %v1472 = vmax.f32 %v1440, %v1070
    %v1473 = vmax.f32 %v1441, %v1071
    %v1474 = vmax.f32 %v1442, %v1072
    %v1475 = vmax.f32 %v1443, %v1073
    %v1476 = vmax.f32 %v1444, %v1074
    %v1477 = vmax.f32 %v1445, %v1075
    %v1478 = vmax.f32 %v1446, %v1076
    %v1479 = vmax.f32 %v1447, %v1077
    %v1480 = vmax.f32 %v1448, %v1078
    %v1481 = vmax.f32 %v1449, %v1079
    %v1482 = vmax.f32 %v1450, %v1418
    %v1483 = vmax.f32 %v1451, %v1419
    %v1484 = vpack.c.bf16 %v1453, %v1452
    %v1485 = vpack.c.bf16 %v1455, %v1454
    %v1486 = vpack.c.bf16 %v1457, %v1456
    %v1487 = vpack.c.bf16 %v1459, %v1458
    %v1488 = vpack.c.bf16 %v1461, %v1460
    %v1489 = vpack.c.bf16 %v1463, %v1462
    %v1490 = vpack.c.bf16 %v1465, %v1464
    %v1491 = vpack.c.bf16 %v1467, %v1466
    %v1492 = vpack.c.bf16 %v1469, %v1468
    %v1493 = vpack.c.bf16 %v1471, %v1470
    %v1494 = vpack.c.bf16 %v1473, %v1472
    %v1495 = vpack.c.bf16 %v1475, %v1474
    %v1496 = vpack.c.bf16 %v1477, %v1476
    %v1497 = vpack.c.bf16 %v1479, %v1478
    %v1498 = vpack.c.bf16 %v1481, %v1480
    %v1499 = vpack.c.bf16 %v1483, %v1482
    %v1516 = vunpack.c.l.b16 %v1484
    %v1517 = vunpack.c.h.b16 %v1484
    %v1518 = vunpack.c.l.b16 %v1485
    %v1519 = vunpack.c.h.b16 %v1485
    %v1520 = vunpack.c.l.b16 %v1486
    %v1521 = vunpack.c.h.b16 %v1486
    %v1522 = vunpack.c.l.b16 %v1487
    %v1523 = vunpack.c.h.b16 %v1487
    %v1524 = vunpack.c.l.b16 %v1488
    %v1525 = vunpack.c.h.b16 %v1488
    %v1526 = vunpack.c.l.b16 %v1489
    %v1527 = vunpack.c.h.b16 %v1489
    %v1528 = vunpack.c.l.b16 %v1490
    %v1529 = vunpack.c.h.b16 %v1490
    %v1530 = vunpack.c.l.b16 %v1491
    %v1531 = vunpack.c.h.b16 %v1491
    %v1532 = vunpack.c.l.b16 %v1492
    %v1533 = vunpack.c.h.b16 %v1492
    %v1534 = vunpack.c.l.b16 %v1493
    %v1535 = vunpack.c.h.b16 %v1493
    %v1536 = vunpack.c.l.b16 %v1494
    %v1537 = vunpack.c.h.b16 %v1494
    %v1538 = vunpack.c.l.b16 %v1495
    %v1539 = vunpack.c.h.b16 %v1495
    %v1540 = vunpack.c.l.b16 %v1496
    %v1541 = vunpack.c.h.b16 %v1496
    %v1542 = vunpack.c.l.b16 %v1497
    %v1543 = vunpack.c.h.b16 %v1497
    %v1544 = vunpack.c.l.b16 %v1498
    %v1545 = vunpack.c.h.b16 %v1498
    %v1546 = vunpack.c.l.b16 %v1499
    %v1547 = vunpack.c.h.b16 %v1499
    %v1548 = vpack.c.b16 %v1516, %v1516
    %v1549 = vpack.c.b16 %v1517, %v1517
    %v1550 = vpack.c.b16 %v1518, %v1518
    %v1551 = vpack.c.b16 %v1519, %v1519
    %v1552 = vpack.c.b16 %v1520, %v1520
    %v1553 = vpack.c.b16 %v1521, %v1521
    %v1554 = vpack.c.b16 %v1522, %v1522
    %v1555 = vpack.c.b16 %v1523, %v1523
    %v1556 = vpack.c.b16 %v1524, %v1524
    %v1557 = vpack.c.b16 %v1525, %v1525
    %v1558 = vpack.c.b16 %v1526, %v1526
    %v1559 = vpack.c.b16 %v1527, %v1527
    %v1560 = vpack.c.b16 %v1528, %v1528
    %v1561 = vpack.c.b16 %v1529, %v1529
    %v1562 = vpack.c.b16 %v1530, %v1530
    %v1563 = vpack.c.b16 %v1531, %v1531
    %v1564 = vpack.c.b16 %v1532, %v1532
    %v1565 = vpack.c.b16 %v1533, %v1533
    %v1566 = vpack.c.b16 %v1534, %v1534
    %v1567 = vpack.c.b16 %v1535, %v1535
    %v1568 = vpack.c.b16 %v1536, %v1536
    %v1569 = vpack.c.b16 %v1537, %v1537
    %v1570 = vpack.c.b16 %v1538, %v1538
    %v1571 = vpack.c.b16 %v1539, %v1539
    %v1572 = vpack.c.b16 %v1540, %v1540
    %v1573 = vpack.c.b16 %v1541, %v1541
    %v1574 = vpack.c.b16 %v1542, %v1542
    %v1575 = vpack.c.b16 %v1543, %v1543
    %v1576 = vpack.c.b16 %v1544, %v1544
    %v1577 = vpack.c.b16 %v1545, %v1545
    %v1578 = vpack.c.b16 %v1546, %v1546
    %v1579 = vpack.c.b16 %v1547, %v1547
    %vm1612 = vcmask 519168
    %1613 = vst.msk [vmem:[#allocation8] sm:$0xf] %vm1612, %v1548
    %1614 = vst.msk [vmem:[#allocation8 + $0x4] sm:$0xf] %vm1612, %v1549
    %1615 = vst.msk [vmem:[#allocation8 + $0x8] sm:$0xf] %vm1612, %v1550
    %1616 = vst.msk [vmem:[#allocation8 + $0xc] sm:$0xf] %vm1612, %v1551
    %1617 = vst.msk [vmem:[#allocation8 + $0x10] sm:$0xf] %vm1612, %v1552
    %1618 = vst.msk [vmem:[#allocation8 + $0x14] sm:$0xf] %vm1612, %v1553
    %1619 = vst.msk [vmem:[#allocation8 + $0x18] sm:$0xf] %vm1612, %v1554
    %1620 = vst.msk [vmem:[#allocation8 + $0x1c] sm:$0xf] %vm1612, %v1555
    %1621 = vst.msk [vmem:[#allocation8 + $0x20] sm:$0xf] %vm1612, %v1556
    %1622 = vst.msk [vmem:[#allocation8 + $0x24] sm:$0xf] %vm1612, %v1557
    %1623 = vst.msk [vmem:[#allocation8 + $0x28] sm:$0xf] %vm1612, %v1558
    %1624 = vst.msk [vmem:[#allocation8 + $0x2c] sm:$0xf] %vm1612, %v1559
    %1625 = vst.msk [vmem:[#allocation8 + $0x30] sm:$0xf] %vm1612, %v1560
    %1626 = vst.msk [vmem:[#allocation8 + $0x34] sm:$0xf] %vm1612, %v1561
    %1627 = vst.msk [vmem:[#allocation8 + $0x38] sm:$0xf] %vm1612, %v1562
    %1628 = vst.msk [vmem:[#allocation8 + $0x3c] sm:$0xf] %vm1612, %v1563
    %1629 = vst.msk [vmem:[#allocation8 + $0x40] sm:$0xf] %vm1612, %v1564
    %1630 = vst.msk [vmem:[#allocation8 + $0x44] sm:$0xf] %vm1612, %v1565
    %1631 = vst.msk [vmem:[#allocation8 + $0x48] sm:$0xf] %vm1612, %v1566
    %1632 = vst.msk [vmem:[#allocation8 + $0x4c] sm:$0xf] %vm1612, %v1567
    %1633 = vst.msk [vmem:[#allocation8 + $0x50] sm:$0xf] %vm1612, %v1568
    %1634 = vst.msk [vmem:[#allocation8 + $0x54] sm:$0xf] %vm1612, %v1569
    %1635 = vst.msk [vmem:[#allocation8 + $0x58] sm:$0xf] %vm1612, %v1570
    %1636 = vst.msk [vmem:[#allocation8 + $0x5c] sm:$0xf] %vm1612, %v1571
    %1637 = vst.msk [vmem:[#allocation8 + $0x60] sm:$0xf] %vm1612, %v1572
    %1638 = vst.msk [vmem:[#allocation8 + $0x64] sm:$0xf] %vm1612, %v1573
    %1639 = vst.msk [vmem:[#allocation8 + $0x68] sm:$0xf] %vm1612, %v1574
    %1640 = vst.msk [vmem:[#allocation8 + $0x6c] sm:$0xf] %vm1612, %v1575
    %1641 = vst.msk [vmem:[#allocation8 + $0x70] sm:$0xf] %vm1612, %v1576
    %1642 = vst.msk [vmem:[#allocation8 + $0x74] sm:$0xf] %vm1612, %v1577
    %1643 = vst.msk [vmem:[#allocation8 + $0x78] sm:$0xf] %vm1612, %v1578
    %1644 = vst.msk [vmem:[#allocation8 + $0x7c] sm:$0xf] %vm1612, %v1579
    // Predicated region
    $region26: #{stem_fwd.4} parent=1 // pred_check
      _
    $region27: #{stem_fwd.4} parent=1 // pred_check_branch
      %1646 = sbr.rel (0) target = $region29
    $region28: #{stem_fwd.4} parent=1 // pred_region
      %s1648 = ssub.s32 2048, 2048
      %1649 = vsyncadd [#allocation4], %s1648
      %s1650 = sshll.u32 [#allocation8], 4
      %s1651 = int_to_ptr.vmem [resolvable:$true] %s1650
      %1656 = dma.vmem_to_hbm [thread:$0]  %s1651, 2048, %s3, [#allocation4], 64, 64, 4
    $region29: #{stem_fwd.4} parent=1 // pred_fallthru
      _
    // Predicated region
    $region30: #{stem_fwd.4} parent=1 // pred_check
      _
    $region31: #{stem_fwd.4} parent=1 // pred_check_branch
      %1658 = sbr.rel (0) target = $region33
    $region32: #{stem_fwd.4} parent=1 // pred_region
      %1659 = dma.done [#allocation4], 2048
    $region33: #{stem_fwd.4} parent=1 // pred_fallthru
      _
    %1660 = vsyncpa [#allocation3], 1
    %1661 = vsyncpa [#allocation6], 1
    %1662 = vsyncpa [#allocation4], 1

</llo_original>
